<compile_context>
chip_gen: v7x
topology: tpu7x:2x2x1
jax: 0.10.0
libtpu: 0.0.40
codegen_flags: <defaults>
</compile_context>

<pallas_src>
import functools
import math

import jax
import jax.numpy as jnp
from jax import lax
from jax.experimental import pallas as pl
from jax.experimental.pallas import tpu as pltpu


def _round_up(x, m):
    return ((x + m - 1) // m) * m


def _pick_group(heads, d_k, d_model, target_lanes=256):
    """Smallest divisor g of heads with g*d_k >= min(target_lanes, d_model).

    target_lanes=256 suits v6e/v7x (256-wide MXU); 128 is enough on v5e.
    """
    target = min(target_lanes, d_model)
    for g in range(1, heads + 1):
        if heads % g == 0 and g * d_k >= target:
            return g
    return heads


def _mha_kernel(q_ref, k_ref, v_ref,
                wq_ref, bq_ref, wk_ref, bk_ref, wv_ref, bv_ref,
                wf_ref, bf_ref,
                out_ref,
                qf_ref, ctx_ref, acc_ref,
                *, scale, d_k, group, block_k, kv_len, needs_kv_mask):
    """Grid = (batch, key_tile, head_group).

    q_ref:   (Sq, D)                resident per batch element
    k_ref:   (block_k, D)           key tile            v_ref: (block_k, D)
    wq/wk/wv_ref: (HG, D, G*d_k)    group-major projection weights (resident, 1-buffered)
    bq/bk/bv_ref: (HG, 1, G*d_k)    f32
    wf_ref:  (HG, G*d_k, D)         group-major rows of the output projection
    bf_ref:  (1, D)                 f32
    out_ref: (Sq, D)
    qf_ref:  (HG, Sq, G*d_k)        cached per-group Q projection (compute dtype)
    ctx_ref: (HG, Sq, G*d_k) f32    context accumulator over key tiles
    acc_ref: (Sq, D) f32            fc accumulator over head groups (last key tile only)
    """
    j = pl.program_id(1)
    hg = pl.program_id(2)
    nj = pl.num_programs(1)
    nhg = pl.num_programs(2)
    f32 = jnp.float32
    cdt = qf_ref.dtype  # MXU operand dtype (f32 or bf16)

    # ---- per-(batch, group) init: cached Q projection (full-D contraction) + zero ctx ----
    @pl.when(j == 0)
    def _init_group():
        qf = jnp.dot(q_ref[...], wq_ref[hg], preferred_element_type=f32) + bq_ref[hg]
        qf_ref[hg] = qf.astype(cdt)
        ctx_ref[hg] = jnp.zeros(ctx_ref.shape[1:], ctx_ref.dtype)

    # ---- K/V projections for this (key tile, group): (block_k, D) @ (D, G*d_k) ----
    kf = (jnp.dot(k_ref[...], wk_ref[hg], preferred_element_type=f32) + bk_ref[hg]).astype(cdt)
    vf = jnp.dot(v_ref[...], wv_ref[hg], preferred_element_type=f32) + bv_ref[hg]
    if needs_kv_mask:
        # Zero the V rows of the zero-padded tail of the last key tile: padded key columns
        # then contribute exactly nothing to the context (softmax is over the query axis,
        # so padded columns never mix into real ones).
        rows = j * block_k + lax.broadcasted_iota(jnp.int32, (block_k, 1), 0)
        vf = jnp.where(rows < kv_len, vf, 0.0)
    vf = vf.astype(cdt)

    qf = qf_ref[hg]                                                    # (Sq, G*d_k)

    # ---- per-head scores + query-axis softmax + context (static loop over the group) ----
    ctx_parts = []
    for g in range(group):
        lo = g * d_k
        qh = qf[:, lo:lo + d_k]
        kh = kf[:, lo:lo + d_k]
        vh = vf[:, lo:lo + d_k]
        # scores[i, jj] = sum_d qh[i, d] * kh[jj, d]  ("NT" dot, no materialized transpose)
        s = lax.dot_general(qh, kh, (((1,), (1,)), ((), ())),
                            preferred_element_type=f32) * scale        # (Sq, block_k)
        # Module softmax is torch dim=1 of 'bijh' == the query axis == axis 0 here, so it
        # is complete within a key tile (independent per key column / head).
        m = jnp.max(s, axis=0, keepdims=True)
        e = jnp.exp(s - m)
        denom = jnp.sum(e, axis=0, keepdims=True)
        attn = e * pl.reciprocal(denom, approx=(cdt != jnp.float32))
        ctx_parts.append(jnp.dot(attn.astype(cdt), vh, preferred_element_type=f32))
    ctx_g = ctx_parts[0] if group == 1 else jnp.concatenate(ctx_parts, axis=1)
    ctx_ref[hg] += ctx_g                                               # accumulate over key tiles

    # ---- deferred output projection: once per (batch, head group), at the last key tile ----
    @pl.when((j == nj - 1) & (hg == 0))
    def _init_acc():
        acc_ref[...] = jnp.zeros_like(acc_ref)

    @pl.when(j == nj - 1)
    def _fc():
        acc_ref[...] += jnp.dot(ctx_ref[hg].astype(cdt), wf_ref[hg],
                                preferred_element_type=f32)            # (Sq,G*d_k)@(G*d_k,D)

    @pl.when((j == nj - 1) & (hg == nhg - 1))
    def _finalize():
        out_ref[...] = (acc_ref[...] + bf_ref[...]).astype(out_ref.dtype)


def mha_forward(q, k, v, params, *, heads, block_k=None, head_group_size=None,
                compute_dtype=None, single_buffer_weights=True):
    """params: dict with wq,bq,wk,bk,wv,bv,wf,bf. Weights (D, D) as (in, out); biases (1, D)."""
    orig_dtype = q.dtype
    B, Sq, D = q.shape
    _, Sk, _ = k.shape
    assert v.shape == k.shape and k.shape[0] == B and k.shape[2] == D
    assert D % heads == 0
    d_k = D // heads
    scale = 1.0 / math.sqrt(d_k)

    # Head grouping: group*d_k is the lane width of the projection / fc tiles.
    if head_group_size is None:
        group = _pick_group(heads, d_k, D)
    else:
        assert heads % head_group_size == 0
        group = head_group_size
    n_groups = heads // group
    gdk = group * d_k

    # Key tiling: cdiv + zero-padded last tile (masked in-kernel).
    if block_k is None:
        block_k = min(512, Sk)
    if block_k >= Sk:
        block_k = Sk
    else:
        block_k = _round_up(block_k, 8)
    nj = pl.cdiv(Sk, block_k)
    sk_pad = nj * block_k
    needs_kv_mask = sk_pad != Sk
    if needs_kv_mask:
        pad = sk_pad - Sk
        k = jnp.pad(k, ((0, 0), (0, pad), (0, 0)))
        v = jnp.pad(v, ((0, 0), (0, pad), (0, 0)))

    cdt = jnp.dtype(compute_dtype) if compute_dtype is not None else jnp.dtype(orig_dtype)
    q_c = q.astype(cdt)
    k_c = k.astype(cdt)
    v_c = v.astype(cdt)

    # Group-major weight layouts (lane dim = group*d_k >= 128 whenever D >= 128).
    wq_r = params["wq"].reshape(D, n_groups, gdk).transpose(1, 0, 2).astype(cdt)
    wk_r = params["wk"].reshape(D, n_groups, gdk).transpose(1, 0, 2).astype(cdt)
    wv_r = params["wv"].reshape(D, n_groups, gdk).transpose(1, 0, 2).astype(cdt)
    wf_r = params["wf"].reshape(n_groups, gdk, D).astype(cdt)
    bq_r = params["bq"].reshape(n_groups, 1, gdk).astype(jnp.float32)
    bk_r = params["bk"].reshape(n_groups, 1, gdk).astype(jnp.float32)
    bv_r = params["bv"].reshape(n_groups, 1, gdk).astype(jnp.float32)
    bf_r = params["bf"].astype(jnp.float32)

    kernel = functools.partial(_mha_kernel, scale=scale, d_k=d_k, group=group,
                               block_k=block_k, kv_len=Sk, needs_kv_mask=needs_kv_mask)

    grid = (B, nj, n_groups)
    q_spec = pl.BlockSpec((None, Sq, D), lambda b, j, g: (b, 0, 0))
    kv_spec = pl.BlockSpec((None, block_k, D), lambda b, j, g: (b, j, 0))
    out_spec = pl.BlockSpec((None, Sq, D), lambda b, j, g: (b, 0, 0))

    # VMEM budget (computed, not hard-coded): double-buffered activation tiles, weight
    # residency (single- or double-buffered), and the f32 scratch accumulators.
    cbytes = jnp.dtype(cdt).itemsize
    obytes = jnp.dtype(orig_dtype).itemsize
    p8, p128 = (lambda n: _round_up(n, 8)), (lambda n: _round_up(n, 128))
    wbuf = 1 if single_buffer_weights else 2
    est = (2 * p8(Sq) * p128(D) * cbytes                              # q (double-buffered)
           + 4 * p8(block_k) * p128(D) * cbytes                       # k, v (double-buffered)
           + 2 * p8(Sq) * p128(D) * obytes                            # out
           + wbuf * 3 * n_groups * p8(D) * p128(gdk) * cbytes         # wq, wk, wv
           + wbuf * n_groups * p8(gdk) * p128(D) * cbytes             # wf
           + wbuf * (3 * n_groups * 8 * p128(gdk) + 8 * p128(D)) * 4  # biases (f32)
           + n_groups * p8(Sq) * p128(gdk) * (cbytes + 4)             # qf cache + ctx acc
           + p8(Sq) * p128(D) * 4)                                    # fc accumulator
    vmem_limit = int(min(max(est * 3 // 2, 32 * 1024 * 1024), 64 * 1024 * 1024))

    def run(weight_mode):
        def w_spec(shape):
            nd = len(shape)
            idx = lambda b, j, g, _n=nd: (0,) * _n
            if weight_mode is None:
                return pl.BlockSpec(shape, idx)
            return pl.BlockSpec(shape, idx, pipeline_mode=weight_mode)

        return pl.pallas_call(
            kernel,
            out_shape=jax.ShapeDtypeStruct((B, Sq, D), orig_dtype),
            grid=grid,
            in_specs=[q_spec, kv_spec, kv_spec,
                      w_spec((n_groups, D, gdk)), w_spec((n_groups, 1, gdk)),
                      w_spec((n_groups, D, gdk)), w_spec((n_groups, 1, gdk)),
                      w_spec((n_groups, D, gdk)), w_spec((n_groups, 1, gdk)),
                      w_spec((n_groups, gdk, D)), w_spec((1, D))],
            out_specs=out_spec,
            scratch_shapes=[pltpu.VMEM((n_groups, Sq, gdk), cdt),          # qf cache
                            pltpu.VMEM((n_groups, Sq, gdk), jnp.float32),  # ctx accumulator
                            pltpu.VMEM((Sq, D), jnp.float32)],             # fc accumulator
            compiler_params=pltpu.CompilerParams(
                dimension_semantics=("parallel", "arbitrary", "arbitrary"),
                vmem_limit_bytes=vmem_limit),
        )(q_c, k_c, v_c, wq_r, bq_r, wk_r, bk_r, wv_r, bv_r, wf_r, bf_r)

    if single_buffer_weights:
        try:
            return run(pl.Buffered(1))
        except Exception:
            # TODO(synk): this jax build rejected pl.Buffered(1) single-buffering;
            # fall back to default double-buffered weight blocks (perf-neutral here).
            pass
    return run(None)


def mha_reference(q, k, v, params, *, heads):
    """Pure-JAX replica of the PyTorch forward (mask=None, dropout=eval)."""
    B, Sq, D = q.shape
    Sk = k.shape[1]
    d_k = D // heads
    scale = 1.0 / math.sqrt(d_k)
    Q = (q @ params["wq"] + params["bq"]).reshape(B, Sq, heads, d_k)
    K = (k @ params["wk"] + params["bk"]).reshape(B, Sk, heads, d_k)
    V = (v @ params["wv"] + params["bv"]).reshape(B, Sk, heads, d_k)
    scores = jnp.einsum('bihd,bjhd->bijh', Q, K) * scale
    attn = jax.nn.softmax(scores, axis=1)          # torch dim=1 == query-index axis
    x = jnp.einsum('bijh,bjhd->bihd', attn, V).reshape(B, Sq, D)
    return x @ params["wf"] + params["bf"]


if __name__ == "__main__":
    def make_inputs(key, B, Sq, Sk, D, heads):
        keys = jax.random.split(key, 11)

        def winit(kk, shape, fan_in):
            bound = 1.0 / math.sqrt(fan_in)
            return jax.random.uniform(kk, shape, jnp.float32, -bound, bound)

        params = {
            "wq": winit(keys[0], (D, D), D), "bq": winit(keys[1], (1, D), D),
            "wk": winit(keys[2], (D, D), D), "bk": winit(keys[3], (1, D), D),
            "wv": winit(keys[4], (D, D), D), "bv": winit(keys[5], (1, D), D),
            "wf": winit(keys[6], (D, D), D), "bf": winit(keys[7], (1, D), D),
        }
        q = jax.random.normal(keys[8], (B, Sq, D), jnp.float32)
        k = jax.random.normal(keys[9], (B, Sk, D), jnp.float32)
        v = jax.random.normal(keys[10], (B, Sk, D), jnp.float32)
        return q, k, v, params

    root = jax.random.PRNGKey(0)
    key1, key2, key3 = jax.random.split(root, 3)

    # 1) Tiny config implied by the module: batch=2, seq=8, d_model=32, heads=4.
    q, k, v, params = make_inputs(key1, 2, 8, 8, 32, 4)
    out = jax.block_until_ready(mha_forward(q, k, v, params, heads=4))
    ref = mha_reference(q, k, v, params, heads=4)
    assert out.shape == ref.shape
    err = float(jnp.max(jnp.abs(out - ref)))
    assert jnp.allclose(out, ref, atol=1e-4, rtol=1e-4), err

    # 2) Multi key-tile accumulation (nj=4), lane-dense d_model, single head group.
    q, k, v, params = make_inputs(key2, 2, 256, 256, 128, 8)
    out = jax.block_until_ready(mha_forward(q, k, v, params, heads=8, block_k=64))
    ref = mha_reference(q, k, v, params, heads=8)
    err = float(jnp.max(jnp.abs(out - ref)))
    assert jnp.allclose(out, ref, atol=1e-3, rtol=1e-3), err

    # 2b) bf16 MXU-operand path (recommended on v6e/v7x); accumulators stay f32.
    out_bf16 = jax.block_until_ready(
        mha_forward(q, k, v, params, heads=8, block_k=64, compute_dtype=jnp.bfloat16))
    err = float(jnp.max(jnp.abs(out_bf16 - ref)))
    assert jnp.allclose(out_bf16, ref, atol=5e-2, rtol=5e-2), err

    # 3) Cross-attention with ragged key length (cdiv tiling + masked padded tail) and
    #    multiple head groups (HG=2).
    q, k, v, params = make_inputs(key3, 2, 64, 200, 256, 8)
    out = jax.block_until_ready(
        mha_forward(q, k, v, params, heads=8, block_k=64, head_group_size=4))
    ref = mha_reference(q, k, v, params, heads=8)
    err = float(jnp.max(jnp.abs(out - ref)))
    assert jnp.allclose(out, ref, atol=2e-3, rtol=2e-3), err

    print("KERNEL_OK")
</pallas_src>

<mosaic_0001>
module attributes {stable_mosaic.version = 11 : i64} {
  func.func @_mha_kernel(%arg0: i32, %arg1: i32, %arg2: i32, %arg3: memref<1x8x32xf32, #tpu.memory_space<vmem>>, %arg4: memref<1x8x32xf32, #tpu.memory_space<vmem>>, %arg5: memref<1x8x32xf32, #tpu.memory_space<vmem>>, %arg6: memref<1x32x32xf32, #tpu.memory_space<vmem>>, %arg7: memref<1x1x32xf32, #tpu.memory_space<vmem>>, %arg8: memref<1x32x32xf32, #tpu.memory_space<vmem>>, %arg9: memref<1x1x32xf32, #tpu.memory_space<vmem>>, %arg10: memref<1x32x32xf32, #tpu.memory_space<vmem>>, %arg11: memref<1x1x32xf32, #tpu.memory_space<vmem>>, %arg12: memref<1x32x32xf32, #tpu.memory_space<vmem>>, %arg13: memref<1x32xf32, #tpu.memory_space<vmem>>, %arg14: memref<1x8x32xf32, #tpu.memory_space<vmem>>, %arg15: memref<1x8x32xf32, #tpu.memory_space<vmem>>, %arg16: memref<1x8x32xf32, #tpu.memory_space<vmem>>, %arg17: memref<8x32xf32, #tpu.memory_space<vmem>>) attributes {dimension_semantics = [#tpu.dimension_semantics<parallel>, #tpu.dimension_semantics<arbitrary>, #tpu.dimension_semantics<arbitrary>], iteration_bounds = array<i64: 2, 1, 1>, scalar_prefetch = 0 : i64, scratch_operands = 3 : i64, tpu.core_type = #tpu.core_type<tc>, window_params = [{transform_indices = @transform_0, window_bounds = array<i64: 1, 8, 32>}, {transform_indices = @transform_1, window_bounds = array<i64: 1, 8, 32>}, {transform_indices = @transform_2, window_bounds = array<i64: 1, 8, 32>}, {pipeline_mode = #tpu.pipeline_mode<synchronous>, transform_indices = @transform_3, window_bounds = array<i64: 1, 32, 32>}, {pipeline_mode = #tpu.pipeline_mode<synchronous>, transform_indices = @transform_4, window_bounds = array<i64: 1, 1, 32>}, {pipeline_mode = #tpu.pipeline_mode<synchronous>, transform_indices = @transform_5, window_bounds = array<i64: 1, 32, 32>}, {pipeline_mode = #tpu.pipeline_mode<synchronous>, transform_indices = @transform_6, window_bounds = array<i64: 1, 1, 32>}, {pipeline_mode = #tpu.pipeline_mode<synchronous>, transform_indices = @transform_7, window_bounds = array<i64: 1, 32, 32>}, {pipeline_mode = #tpu.pipeline_mode<synchronous>, transform_indices = @transform_8, window_bounds = array<i64: 1, 1, 32>}, {pipeline_mode = #tpu.pipeline_mode<synchronous>, transform_indices = @transform_9, window_bounds = array<i64: 1, 32, 32>}, {pipeline_mode = #tpu.pipeline_mode<synchronous>, transform_indices = @transform_10, window_bounds = array<i64: 1, 32>}, {transform_indices = @transform_11, window_bounds = array<i64: 1, 8, 32>}]} {
    %c0_i32 = arith.constant 0 : i32
    %0 = arith.cmpi eq, %arg1, %c0_i32 : i32
    %1 = arith.extui %0 : i1 to i32
    %c0_i32_0 = arith.constant 0 : i32
    %2 = arith.cmpi ne, %1, %c0_i32_0 : i32
    scf.if %2 {
      %c0_49 = arith.constant 0 : index
      %c0_50 = arith.constant 0 : index
      %c0_51 = arith.constant 0 : index
      %118 = vector.load %arg3[%c0_49, %c0_50, %c0_51] : memref<1x8x32xf32, #tpu.memory_space<vmem>>, vector<1x8x32xf32>
      %119 = vector.shape_cast %118 : vector<1x8x32xf32> to vector<8x32xf32>
      %120 = arith.index_cast %arg2 : i32 to index
      %c0_52 = arith.constant 0 : index
      %c0_53 = arith.constant 0 : index
      %121 = vector.load %arg6[%120, %c0_52, %c0_53] : memref<1x32x32xf32, #tpu.memory_space<vmem>>, vector<1x32x32xf32>
      %122 = vector.shape_cast %121 : vector<1x32x32xf32> to vector<32x32xf32>
      %cst_54 = arith.constant dense<0.000000e+00> : vector<8x32xf32>
      %123 = tpu.matmul %119, %122, %cst_54 {dimension_numbers = #tpu.dot_dimension_numbers<[1], [0], [0], [1], [0, 0, 1, 1], [], []>} : vector<8x32xf32>, vector<32x32xf32>, vector<8x32xf32> -> vector<8x32xf32>
      %124 = arith.index_cast %arg2 : i32 to index
      %c0_55 = arith.constant 0 : index
      %c0_56 = arith.constant 0 : index
      %125 = vector.load %arg7[%124, %c0_55, %c0_56] : memref<1x1x32xf32, #tpu.memory_space<vmem>>, vector<1x1x32xf32>
      %126 = vector.shape_cast %125 : vector<1x1x32xf32> to vector<1x32xf32>
      %127 = vector.broadcast %126 : vector<1x32xf32> to vector<8x32xf32>
      %128 = arith.addf %123, %127 : vector<8x32xf32>
      %129 = arith.index_cast %arg2 : i32 to index
      %c0_57 = arith.constant 0 : index
      %c0_58 = arith.constant 0 : index
      %130 = vector.load %arg15[%129, %c0_57, %c0_58] : memref<1x8x32xf32, #tpu.memory_space<vmem>>, vector<1x8x32xf32>
      %131 = vector.shape_cast %130 : vector<1x8x32xf32> to vector<8x32xf32>
      %132 = vector.shape_cast %128 : vector<8x32xf32> to vector<1x8x32xf32>
      tpu.vector_store %arg15[%129, %c0_57, %c0_58], %132 {strides = array<i32>} : memref<1x8x32xf32, #tpu.memory_space<vmem>>, vector<1x8x32xf32>,
      %cst_59 = arith.constant 0.000000e+00 : f32
      %133 = vector.broadcast %cst_59 : f32 to vector<8x32xf32>
      %134 = arith.index_cast %arg2 : i32 to index
      %c0_60 = arith.constant 0 : index
      %c0_61 = arith.constant 0 : index
      %135 = vector.load %arg16[%134, %c0_60, %c0_61] : memref<1x8x32xf32, #tpu.memory_space<vmem>>, vector<1x8x32xf32>
      %136 = vector.shape_cast %135 : vector<1x8x32xf32> to vector<8x32xf32>
      %137 = vector.shape_cast %133 : vector<8x32xf32> to vector<1x8x32xf32>
      tpu.vector_store %arg16[%134, %c0_60, %c0_61], %137 {strides = array<i32>} : memref<1x8x32xf32, #tpu.memory_space<vmem>>, vector<1x8x32xf32>,
    } else {
    }
    %c0 = arith.constant 0 : index
    %c0_1 = arith.constant 0 : index
    %c0_2 = arith.constant 0 : index
    %3 = vector.load %arg4[%c0, %c0_1, %c0_2] : memref<1x8x32xf32, #tpu.memory_space<vmem>>, vector<1x8x32xf32>
    %4 = vector.shape_cast %3 : vector<1x8x32xf32> to vector<8x32xf32>
    %5 = arith.index_cast %arg2 : i32 to index
    %c0_3 = arith.constant 0 : index
    %c0_4 = arith.constant 0 : index
    %6 = vector.load %arg8[%5, %c0_3, %c0_4] : memref<1x32x32xf32, #tpu.memory_space<vmem>>, vector<1x32x32xf32>
    %7 = vector.shape_cast %6 : vector<1x32x32xf32> to vector<32x32xf32>
    %cst = arith.constant dense<0.000000e+00> : vector<8x32xf32>
    %8 = tpu.matmul %4, %7, %cst {dimension_numbers = #tpu.dot_dimension_numbers<[1], [0], [0], [1], [0, 0, 1, 1], [], []>} : vector<8x32xf32>, vector<32x32xf32>, vector<8x32xf32> -> vector<8x32xf32>
    %9 = arith.index_cast %arg2 : i32 to index
    %c0_5 = arith.constant 0 : index
    %c0_6 = arith.constant 0 : index
    %10 = vector.load %arg9[%9, %c0_5, %c0_6] : memref<1x1x32xf32, #tpu.memory_space<vmem>>, vector<1x1x32xf32>
    %11 = vector.shape_cast %10 : vector<1x1x32xf32> to vector<1x32xf32>
    %12 = vector.broadcast %11 : vector<1x32xf32> to vector<8x32xf32>
    %13 = arith.addf %8, %12 : vector<8x32xf32>
    %c0_7 = arith.constant 0 : index
    %c0_8 = arith.constant 0 : index
    %c0_9 = arith.constant 0 : index
    %14 = vector.load %arg5[%c0_7, %c0_8, %c0_9] : memref<1x8x32xf32, #tpu.memory_space<vmem>>, vector<1x8x32xf32>
    %15 = vector.shape_cast %14 : vector<1x8x32xf32> to vector<8x32xf32>
    %16 = arith.index_cast %arg2 : i32 to index
    %c0_10 = arith.constant 0 : index
    %c0_11 = arith.constant 0 : index
    %17 = vector.load %arg10[%16, %c0_10, %c0_11] : memref<1x32x32xf32, #tpu.memory_space<vmem>>, vector<1x32x32xf32>
    %18 = vector.shape_cast %17 : vector<1x32x32xf32> to vector<32x32xf32>
    %cst_12 = arith.constant dense<0.000000e+00> : vector<8x32xf32>
    %19 = tpu.matmul %15, %18, %cst_12 {dimension_numbers = #tpu.dot_dimension_numbers<[1], [0], [0], [1], [0, 0, 1, 1], [], []>} : vector<8x32xf32>, vector<32x32xf32>, vector<8x32xf32> -> vector<8x32xf32>
    %20 = arith.index_cast %arg2 : i32 to index
    %c0_13 = arith.constant 0 : index
    %c0_14 = arith.constant 0 : index
    %21 = vector.load %arg11[%20, %c0_13, %c0_14] : memref<1x1x32xf32, #tpu.memory_space<vmem>>, vector<1x1x32xf32>
    %22 = vector.shape_cast %21 : vector<1x1x32xf32> to vector<1x32xf32>
    %23 = vector.broadcast %22 : vector<1x32xf32> to vector<8x32xf32>
    %24 = arith.addf %19, %23 : vector<8x32xf32>
    %25 = arith.index_cast %arg2 : i32 to index
    %c0_15 = arith.constant 0 : index
    %c0_16 = arith.constant 0 : index
    %26 = vector.load %arg15[%25, %c0_15, %c0_16] : memref<1x8x32xf32, #tpu.memory_space<vmem>>, vector<1x8x32xf32>
    %27 = vector.shape_cast %26 : vector<1x8x32xf32> to vector<8x32xf32>
    %28 = vector.extract_strided_slice %27 {offsets = [0, 0], sizes = [8, 8], strides = [1, 1]} : vector<8x32xf32> to vector<8x8xf32>
    %29 = vector.extract_strided_slice %13 {offsets = [0, 0], sizes = [8, 8], strides = [1, 1]} : vector<8x32xf32> to vector<8x8xf32>
    %30 = vector.extract_strided_slice %24 {offsets = [0, 0], sizes = [8, 8], strides = [1, 1]} : vector<8x32xf32> to vector<8x8xf32>
    %cst_17 = arith.constant dense<0.000000e+00> : vector<8x8xf32>
    %31 = tpu.matmul %28, %29, %cst_17 {dimension_numbers = #tpu.dot_dimension_numbers<[1], [1], [0], [0], [0, 0, 1, 0], [], []>} : vector<8x8xf32>, vector<8x8xf32>, vector<8x8xf32> -> vector<8x8xf32>
    %cst_18 = arith.constant 0.353553385 : f32
    %32 = vector.broadcast %cst_18 : f32 to vector<8x8xf32>
    %33 = arith.mulf %31, %32 : vector<8x8xf32>
    %cst_19 = arith.constant dense<0xFF800000> : vector<8xf32>
    %34 = vector.multi_reduction <maximumf>, %33, %cst_19 [0] : vector<8x8xf32> to vector<8xf32>
    %35 = vector.shape_cast %34 : vector<8xf32> to vector<1x8xf32>
    %36 = vector.broadcast %35 : vector<1x8xf32> to vector<8x8xf32>
    %37 = arith.subf %33, %36 : vector<8x8xf32>
    %38 = math.exp %37 : vector<8x8xf32>
    %cst_20 = arith.constant dense<0.000000e+00> : vector<8xf32>
    %39 = vector.multi_reduction <add>, %38, %cst_20 [0] : vector<8x8xf32> to vector<8xf32>
    %40 = vector.shape_cast %39 : vector<8xf32> to vector<1x8xf32>
    %41 = tpu.reciprocal %40 : vector<1x8xf32> -> vector<1x8xf32>
    %42 = vector.broadcast %41 : vector<1x8xf32> to vector<8x8xf32>
    %43 = arith.mulf %38, %42 : vector<8x8xf32>
    %cst_21 = arith.constant dense<0.000000e+00> : vector<8x8xf32>
    %44 = tpu.matmul %43, %30, %cst_21 {dimension_numbers = #tpu.dot_dimension_numbers<[1], [0], [0], [1], [0, 0, 1, 1], [], []>} : vector<8x8xf32>, vector<8x8xf32>, vector<8x8xf32> -> vector<8x8xf32>
    %45 = vector.extract_strided_slice %27 {offsets = [0, 8], sizes = [8, 8], strides = [1, 1]} : vector<8x32xf32> to vector<8x8xf32>
    %46 = vector.extract_strided_slice %13 {offsets = [0, 8], sizes = [8, 8], strides = [1, 1]} : vector<8x32xf32> to vector<8x8xf32>
    %47 = vector.extract_strided_slice %24 {offsets = [0, 8], sizes = [8, 8], strides = [1, 1]} : vector<8x32xf32> to vector<8x8xf32>
    %cst_22 = arith.constant dense<0.000000e+00> : vector<8x8xf32>
    %48 = tpu.matmul %45, %46, %cst_22 {dimension_numbers = #tpu.dot_dimension_numbers<[1], [1], [0], [0], [0, 0, 1, 0], [], []>} : vector<8x8xf32>, vector<8x8xf32>, vector<8x8xf32> -> vector<8x8xf32>
    %cst_23 = arith.constant 0.353553385 : f32
    %49 = vector.broadcast %cst_23 : f32 to vector<8x8xf32>
    %50 = arith.mulf %48, %49 : vector<8x8xf32>
    %cst_24 = arith.constant dense<0xFF800000> : vector<8xf32>
    %51 = vector.multi_reduction <maximumf>, %50, %cst_24 [0] : vector<8x8xf32> to vector<8xf32>
    %52 = vector.shape_cast %51 : vector<8xf32> to vector<1x8xf32>
    %53 = vector.broadcast %52 : vector<1x8xf32> to vector<8x8xf32>
    %54 = arith.subf %50, %53 : vector<8x8xf32>
    %55 = math.exp %54 : vector<8x8xf32>
    %cst_25 = arith.constant dense<0.000000e+00> : vector<8xf32>
    %56 = vector.multi_reduction <add>, %55, %cst_25 [0] : vector<8x8xf32> to vector<8xf32>
    %57 = vector.shape_cast %56 : vector<8xf32> to vector<1x8xf32>
    %58 = tpu.reciprocal %57 : vector<1x8xf32> -> vector<1x8xf32>
    %59 = vector.broadcast %58 : vector<1x8xf32> to vector<8x8xf32>
    %60 = arith.mulf %55, %59 : vector<8x8xf32>
    %cst_26 = arith.constant dense<0.000000e+00> : vector<8x8xf32>
    %61 = tpu.matmul %60, %47, %cst_26 {dimension_numbers = #tpu.dot_dimension_numbers<[1], [0], [0], [1], [0, 0, 1, 1], [], []>} : vector<8x8xf32>, vector<8x8xf32>, vector<8x8xf32> -> vector<8x8xf32>
    %62 = vector.extract_strided_slice %27 {offsets = [0, 16], sizes = [8, 8], strides = [1, 1]} : vector<8x32xf32> to vector<8x8xf32>
    %63 = vector.extract_strided_slice %13 {offsets = [0, 16], sizes = [8, 8], strides = [1, 1]} : vector<8x32xf32> to vector<8x8xf32>
    %64 = vector.extract_strided_slice %24 {offsets = [0, 16], sizes = [8, 8], strides = [1, 1]} : vector<8x32xf32> to vector<8x8xf32>
    %cst_27 = arith.constant dense<0.000000e+00> : vector<8x8xf32>
    %65 = tpu.matmul %62, %63, %cst_27 {dimension_numbers = #tpu.dot_dimension_numbers<[1], [1], [0], [0], [0, 0, 1, 0], [], []>} : vector<8x8xf32>, vector<8x8xf32>, vector<8x8xf32> -> vector<8x8xf32>
    %cst_28 = arith.constant 0.353553385 : f32
    %66 = vector.broadcast %cst_28 : f32 to vector<8x8xf32>
    %67 = arith.mulf %65, %66 : vector<8x8xf32>
    %cst_29 = arith.constant dense<0xFF800000> : vector<8xf32>
    %68 = vector.multi_reduction <maximumf>, %67, %cst_29 [0] : vector<8x8xf32> to vector<8xf32>
    %69 = vector.shape_cast %68 : vector<8xf32> to vector<1x8xf32>
    %70 = vector.broadcast %69 : vector<1x8xf32> to vector<8x8xf32>
    %71 = arith.subf %67, %70 : vector<8x8xf32>
    %72 = math.exp %71 : vector<8x8xf32>
    %cst_30 = arith.constant dense<0.000000e+00> : vector<8xf32>
    %73 = vector.multi_reduction <add>, %72, %cst_30 [0] : vector<8x8xf32> to vector<8xf32>
    %74 = vector.shape_cast %73 : vector<8xf32> to vector<1x8xf32>
    %75 = tpu.reciprocal %74 : vector<1x8xf32> -> vector<1x8xf32>
    %76 = vector.broadcast %75 : vector<1x8xf32> to vector<8x8xf32>
    %77 = arith.mulf %72, %76 : vector<8x8xf32>
    %cst_31 = arith.constant dense<0.000000e+00> : vector<8x8xf32>
    %78 = tpu.matmul %77, %64, %cst_31 {dimension_numbers = #tpu.dot_dimension_numbers<[1], [0], [0], [1], [0, 0, 1, 1], [], []>} : vector<8x8xf32>, vector<8x8xf32>, vector<8x8xf32> -> vector<8x8xf32>
    %79 = vector.extract_strided_slice %27 {offsets = [0, 24], sizes = [8, 8], strides = [1, 1]} : vector<8x32xf32> to vector<8x8xf32>
    %80 = vector.extract_strided_slice %13 {offsets = [0, 24], sizes = [8, 8], strides = [1, 1]} : vector<8x32xf32> to vector<8x8xf32>
    %81 = vector.extract_strided_slice %24 {offsets = [0, 24], sizes = [8, 8], strides = [1, 1]} : vector<8x32xf32> to vector<8x8xf32>
    %cst_32 = arith.constant dense<0.000000e+00> : vector<8x8xf32>
    %82 = tpu.matmul %79, %80, %cst_32 {dimension_numbers = #tpu.dot_dimension_numbers<[1], [1], [0], [0], [0, 0, 1, 0], [], []>} : vector<8x8xf32>, vector<8x8xf32>, vector<8x8xf32> -> vector<8x8xf32>
    %cst_33 = arith.constant 0.353553385 : f32
    %83 = vector.broadcast %cst_33 : f32 to vector<8x8xf32>
    %84 = arith.mulf %82, %83 : vector<8x8xf32>
    %cst_34 = arith.constant dense<0xFF800000> : vector<8xf32>
    %85 = vector.multi_reduction <maximumf>, %84, %cst_34 [0] : vector<8x8xf32> to vector<8xf32>
    %86 = vector.shape_cast %85 : vector<8xf32> to vector<1x8xf32>
    %87 = vector.broadcast %86 : vector<1x8xf32> to vector<8x8xf32>
    %88 = arith.subf %84, %87 : vector<8x8xf32>
    %89 = math.exp %88 : vector<8x8xf32>
    %cst_35 = arith.constant dense<0.000000e+00> : vector<8xf32>
    %90 = vector.multi_reduction <add>, %89, %cst_35 [0] : vector<8x8xf32> to vector<8xf32>
    %91 = vector.shape_cast %90 : vector<8xf32> to vector<1x8xf32>
    %92 = tpu.reciprocal %91 : vector<1x8xf32> -> vector<1x8xf32>
    %93 = vector.broadcast %92 : vector<1x8xf32> to vector<8x8xf32>
    %94 = arith.mulf %89, %93 : vector<8x8xf32>
    %cst_36 = arith.constant dense<0.000000e+00> : vector<8x8xf32>
    %95 = tpu.matmul %94, %81, %cst_36 {dimension_numbers = #tpu.dot_dimension_numbers<[1], [0], [0], [1], [0, 0, 1, 1], [], []>} : vector<8x8xf32>, vector<8x8xf32>, vector<8x8xf32> -> vector<8x8xf32>
    %96 = tpu.concatenate %44, %61, %78, %95 in 1 : vector<8x8xf32>, vector<8x8xf32>, vector<8x8xf32>, vector<8x8xf32> -> vector<8x32xf32>
    %97 = arith.index_cast %arg2 : i32 to index
    %c0_37 = arith.constant 0 : index
    %c0_38 = arith.constant 0 : index
    %98 = vector.load %arg16[%97, %c0_37, %c0_38] : memref<1x8x32xf32, #tpu.memory_space<vmem>>, vector<1x8x32xf32>
    %99 = vector.shape_cast %98 : vector<1x8x32xf32> to vector<8x32xf32>
    %100 = arith.addf %99, %96 : vector<8x32xf32>
    %101 = arith.index_cast %arg2 : i32 to index
    %c0_39 = arith.constant 0 : index
    %c0_40 = arith.constant 0 : index
    %102 = vector.load %arg16[%101, %c0_39, %c0_40] : memref<1x8x32xf32, #tpu.memory_space<vmem>>, vector<1x8x32xf32>
    %103 = vector.shape_cast %102 : vector<1x8x32xf32> to vector<8x32xf32>
    %104 = vector.shape_cast %100 : vector<8x32xf32> to vector<1x8x32xf32>
    tpu.vector_store %arg16[%101, %c0_39, %c0_40], %104 {strides = array<i32>} : memref<1x8x32xf32, #tpu.memory_space<vmem>>, vector<1x8x32xf32>,
    %c0_i32_41 = arith.constant 0 : i32
    %105 = arith.cmpi eq, %arg1, %c0_i32_41 : i32
    %c0_i32_42 = arith.constant 0 : i32
    %106 = arith.cmpi eq, %arg2, %c0_i32_42 : i32
    %107 = arith.andi %105, %106 : i1
    %108 = arith.extui %107 : i1 to i32
    %c0_i32_43 = arith.constant 0 : i32
    %109 = arith.cmpi ne, %108, %c0_i32_43 : i32
    scf.if %109 {
      %cst_49 = arith.constant 0.000000e+00 : f32
      %118 = vector.broadcast %cst_49 : f32 to vector<8x32xf32>
      %c0_50 = arith.constant 0 : index
      %c0_51 = arith.constant 0 : index
      %119 = vector.load %arg17[%c0_50, %c0_51] : memref<8x32xf32, #tpu.memory_space<vmem>>, vector<8x32xf32>
      tpu.vector_store %arg17[%c0_50, %c0_51], %118 {strides = array<i32>} : memref<8x32xf32, #tpu.memory_space<vmem>>, vector<8x32xf32>,
    } else {
    }
    %c0_i32_44 = arith.constant 0 : i32
    %110 = arith.cmpi eq, %arg1, %c0_i32_44 : i32
    %111 = arith.extui %110 : i1 to i32
    %c0_i32_45 = arith.constant 0 : i32
    %112 = arith.cmpi ne, %111, %c0_i32_45 : i32
    scf.if %112 {
      %c0_49 = arith.constant 0 : index
      %c0_50 = arith.constant 0 : index
      %118 = vector.load %arg17[%c0_49, %c0_50] : memref<8x32xf32, #tpu.memory_space<vmem>>, vector<8x32xf32>
      %119 = arith.index_cast %arg2 : i32 to index
      %c0_51 = arith.constant 0 : index
      %c0_52 = arith.constant 0 : index
      %120 = vector.load %arg16[%119, %c0_51, %c0_52] : memref<1x8x32xf32, #tpu.memory_space<vmem>>, vector<1x8x32xf32>
      %121 = vector.shape_cast %120 : vector<1x8x32xf32> to vector<8x32xf32>
      %122 = arith.index_cast %arg2 : i32 to index
      %c0_53 = arith.constant 0 : index
      %c0_54 = arith.constant 0 : index
      %123 = vector.load %arg12[%122, %c0_53, %c0_54] : memref<1x32x32xf32, #tpu.memory_space<vmem>>, vector<1x32x32xf32>
      %124 = vector.shape_cast %123 : vector<1x32x32xf32> to vector<32x32xf32>
      %cst_55 = arith.constant dense<0.000000e+00> : vector<8x32xf32>
      %125 = tpu.matmul %121, %124, %cst_55 {dimension_numbers = #tpu.dot_dimension_numbers<[1], [0], [0], [1], [0, 0, 1, 1], [], []>} : vector<8x32xf32>, vector<32x32xf32>, vector<8x32xf32> -> vector<8x32xf32>
      %126 = arith.addf %118, %125 : vector<8x32xf32>
      %c0_56 = arith.constant 0 : index
      %c0_57 = arith.constant 0 : index
      %127 = vector.load %arg17[%c0_56, %c0_57] : memref<8x32xf32, #tpu.memory_space<vmem>>, vector<8x32xf32>
      tpu.vector_store %arg17[%c0_56, %c0_57], %126 {strides = array<i32>} : memref<8x32xf32, #tpu.memory_space<vmem>>, vector<8x32xf32>,
    } else {
    }
    %c0_i32_46 = arith.constant 0 : i32
    %113 = arith.cmpi eq, %arg1, %c0_i32_46 : i32
    %c0_i32_47 = arith.constant 0 : i32
    %114 = arith.cmpi eq, %arg2, %c0_i32_47 : i32
    %115 = arith.andi %113, %114 : i1
    %116 = arith.extui %115 : i1 to i32
    %c0_i32_48 = arith.constant 0 : i32
    %117 = arith.cmpi ne, %116, %c0_i32_48 : i32
    scf.if %117 {
      %c0_49 = arith.constant 0 : index
      %c0_50 = arith.constant 0 : index
      %118 = vector.load %arg17[%c0_49, %c0_50] : memref<8x32xf32, #tpu.memory_space<vmem>>, vector<8x32xf32>
      %c0_51 = arith.constant 0 : index
      %c0_52 = arith.constant 0 : index
      %119 = vector.load %arg13[%c0_51, %c0_52] : memref<1x32xf32, #tpu.memory_space<vmem>>, vector<1x32xf32>
      %120 = vector.broadcast %119 : vector<1x32xf32> to vector<8x32xf32>
      %121 = arith.addf %118, %120 : vector<8x32xf32>
      %c0_53 = arith.constant 0 : index
      %c0_54 = arith.constant 0 : index
      %c0_55 = arith.constant 0 : index
      %122 = vector.load %arg14[%c0_53, %c0_54, %c0_55] : memref<1x8x32xf32, #tpu.memory_space<vmem>>, vector<1x8x32xf32>
      %123 = vector.shape_cast %122 : vector<1x8x32xf32> to vector<8x32xf32>
      %124 = vector.shape_cast %121 : vector<8x32xf32> to vector<1x8x32xf32>
      tpu.vector_store %arg14[%c0_53, %c0_54, %c0_55], %124 {strides = array<i32>} : memref<1x8x32xf32, #tpu.memory_space<vmem>>, vector<1x8x32xf32>,
    } else {
    }
    return
  }
  func.func @transform_0(%arg0: i32, %arg1: i32, %arg2: i32) -> (i32, i32, i32) {
    %c0_i32 = arith.constant 0 : i32
    %c0_i32_0 = arith.constant 0 : i32
    %c0_i32_1 = arith.constant 0 : i32
    return %arg0, %c0_i32, %c0_i32_0 : i32, i32, i32
  }
  func.func @transform_1(%arg0: i32, %arg1: i32, %arg2: i32) -> (i32, i32, i32) {
    %c0_i32 = arith.constant 0 : i32
    %c0_i32_0 = arith.constant 0 : i32
    return %arg0, %arg1, %c0_i32 : i32, i32, i32
  }
  func.func @transform_2(%arg0: i32, %arg1: i32, %arg2: i32) -> (i32, i32, i32) {
    %c0_i32 = arith.constant 0 : i32
    %c0_i32_0 = arith.constant 0 : i32
    return %arg0, %arg1, %c0_i32 : i32, i32, i32
  }
  func.func @transform_3(%arg0: i32, %arg1: i32, %arg2: i32) -> (i32, i32, i32) {
    %c0_i32 = arith.constant 0 : i32
    %c0_i32_0 = arith.constant 0 : i32
    %c0_i32_1 = arith.constant 0 : i32
    %c0_i32_2 = arith.constant 0 : i32
    return %c0_i32, %c0_i32_0, %c0_i32_1 : i32, i32, i32
  }
  func.func @transform_4(%arg0: i32, %arg1: i32, %arg2: i32) -> (i32, i32, i32) {
    %c0_i32 = arith.constant 0 : i32
    %c0_i32_0 = arith.constant 0 : i32
    %c0_i32_1 = arith.constant 0 : i32
    %c0_i32_2 = arith.constant 0 : i32
    return %c0_i32, %c0_i32_0, %c0_i32_1 : i32, i32, i32
  }
  func.func @transform_5(%arg0: i32, %arg1: i32, %arg2: i32) -> (i32, i32, i32) {
    %c0_i32 = arith.constant 0 : i32
    %c0_i32_0 = arith.constant 0 : i32
    %c0_i32_1 = arith.constant 0 : i32
    %c0_i32_2 = arith.constant 0 : i32
    return %c0_i32, %c0_i32_0, %c0_i32_1 : i32, i32, i32
  }
  func.func @transform_6(%arg0: i32, %arg1: i32, %arg2: i32) -> (i32, i32, i32) {
    %c0_i32 = arith.constant 0 : i32
    %c0_i32_0 = arith.constant 0 : i32
    %c0_i32_1 = arith.constant 0 : i32
    %c0_i32_2 = arith.constant 0 : i32
    return %c0_i32, %c0_i32_0, %c0_i32_1 : i32, i32, i32
  }
  func.func @transform_7(%arg0: i32, %arg1: i32, %arg2: i32) -> (i32, i32, i32) {
    %c0_i32 = arith.constant 0 : i32
    %c0_i32_0 = arith.constant 0 : i32
    %c0_i32_1 = arith.constant 0 : i32
    %c0_i32_2 = arith.constant 0 : i32
    return %c0_i32, %c0_i32_0, %c0_i32_1 : i32, i32, i32
  }
  func.func @transform_8(%arg0: i32, %arg1: i32, %arg2: i32) -> (i32, i32, i32) {
    %c0_i32 = arith.constant 0 : i32
    %c0_i32_0 = arith.constant 0 : i32
    %c0_i32_1 = arith.constant 0 : i32
    %c0_i32_2 = arith.constant 0 : i32
    return %c0_i32, %c0_i32_0, %c0_i32_1 : i32, i32, i32
  }
  func.func @transform_9(%arg0: i32, %arg1: i32, %arg2: i32) -> (i32, i32, i32) {
    %c0_i32 = arith.constant 0 : i32
    %c0_i32_0 = arith.constant 0 : i32
    %c0_i32_1 = arith.constant 0 : i32
    %c0_i32_2 = arith.constant 0 : i32
    return %c0_i32, %c0_i32_0, %c0_i32_1 : i32, i32, i32
  }
  func.func @transform_10(%arg0: i32, %arg1: i32, %arg2: i32) -> (i32, i32) {
    %c0_i32 = arith.constant 0 : i32
    %c0_i32_0 = arith.constant 0 : i32
    %c0_i32_1 = arith.constant 0 : i32
    return %c0_i32, %c0_i32_0 : i32, i32
  }
  func.func @transform_11(%arg0: i32, %arg1: i32, %arg2: i32) -> (i32, i32, i32) {
    %c0_i32 = arith.constant 0 : i32
    %c0_i32_0 = arith.constant 0 : i32
    %c0_i32_1 = arith.constant 0 : i32
    return %arg0, %c0_i32, %c0_i32_0 : i32, i32, i32
  }
}

module attributes {stable_mosaic.version = 11 : i64} {
  func.func @_mha_kernel(%arg0: i32, %arg1: i32, %arg2: i32, %arg3: memref<1x8x32xf32, #tpu.memory_space<vmem>>, %arg4: memref<1x8x32xf32, #tpu.memory_space<vmem>>, %arg5: memref<1x8x32xf32, #tpu.memory_space<vmem>>, %arg6: memref<1x32x32xf32, #tpu.memory_space<vmem>>, %arg7: memref<1x1x32xf32, #tpu.memory_space<vmem>>, %arg8: memref<1x32x32xf32, #tpu.memory_space<vmem>>, %arg9: memref<1x1x32xf32, #tpu.memory_space<vmem>>, %arg10: memref<1x32x32xf32, #tpu.memory_space<vmem>>, %arg11: memref<1x1x32xf32, #tpu.memory_space<vmem>>, %arg12: memref<1x32x32xf32, #tpu.memory_space<vmem>>, %arg13: memref<1x32xf32, #tpu.memory_space<vmem>>, %arg14: memref<1x8x32xf32, #tpu.memory_space<vmem>>, %arg15: memref<1x8x32xf32, #tpu.memory_space<vmem>>, %arg16: memref<1x8x32xf32, #tpu.memory_space<vmem>>, %arg17: memref<8x32xf32, #tpu.memory_space<vmem>>) attributes {dimension_semantics = [#tpu.dimension_semantics<parallel>, #tpu.dimension_semantics<arbitrary>, #tpu.dimension_semantics<arbitrary>], iteration_bounds = array<i64: 2, 1, 1>, scalar_prefetch = 0 : i64, scratch_operands = 3 : i64, tpu.core_type = #tpu.core_type<tc>, window_params = [{transform_indices = @transform_0, window_bounds = array<i64: 1, 8, 32>}, {transform_indices = @transform_1, window_bounds = array<i64: 1, 8, 32>}, {transform_indices = @transform_2, window_bounds = array<i64: 1, 8, 32>}, {pipeline_mode = #tpu.pipeline_mode<synchronous>, transform_indices = @transform_3, window_bounds = array<i64: 1, 32, 32>}, {pipeline_mode = #tpu.pipeline_mode<synchronous>, transform_indices = @transform_4, window_bounds = array<i64: 1, 1, 32>}, {pipeline_mode = #tpu.pipeline_mode<synchronous>, transform_indices = @transform_5, window_bounds = array<i64: 1, 32, 32>}, {pipeline_mode = #tpu.pipeline_mode<synchronous>, transform_indices = @transform_6, window_bounds = array<i64: 1, 1, 32>}, {pipeline_mode = #tpu.pipeline_mode<synchronous>, transform_indices = @transform_7, window_bounds = array<i64: 1, 32, 32>}, {pipeline_mode = #tpu.pipeline_mode<synchronous>, transform_indices = @transform_8, window_bounds = array<i64: 1, 1, 32>}, {pipeline_mode = #tpu.pipeline_mode<synchronous>, transform_indices = @transform_9, window_bounds = array<i64: 1, 32, 32>}, {pipeline_mode = #tpu.pipeline_mode<synchronous>, transform_indices = @transform_10, window_bounds = array<i64: 1, 32>}, {transform_indices = @transform_11, window_bounds = array<i64: 1, 8, 32>}]} {
    %c0_i32 = arith.constant 0 : i32
    %0 = arith.cmpi eq, %arg1, %c0_i32 : i32
    %1 = arith.extui %0 : i1 to i32
    %c0_i32_0 = arith.constant 0 : i32
    %2 = arith.cmpi ne, %1, %c0_i32_0 : i32
    scf.if %2 {
      %c0_49 = arith.constant 0 : index
      %c0_50 = arith.constant 0 : index
      %c0_51 = arith.constant 0 : index
      %118 = vector.load %arg3[%c0_49, %c0_50, %c0_51] : memref<1x8x32xf32, #tpu.memory_space<vmem>>, vector<1x8x32xf32>
      %119 = vector.shape_cast %118 : vector<1x8x32xf32> to vector<8x32xf32>
      %120 = arith.index_cast %arg2 : i32 to index
      %c0_52 = arith.constant 0 : index
      %c0_53 = arith.constant 0 : index
      %121 = vector.load %arg6[%120, %c0_52, %c0_53] : memref<1x32x32xf32, #tpu.memory_space<vmem>>, vector<1x32x32xf32>
      %122 = vector.shape_cast %121 : vector<1x32x32xf32> to vector<32x32xf32>
      %cst_54 = arith.constant dense<0.000000e+00> : vector<8x32xf32>
      %123 = tpu.matmul %119, %122, %cst_54 {dimension_numbers = #tpu.dot_dimension_numbers<[1], [0], [0], [1], [0, 0, 1, 1], [], []>} : vector<8x32xf32>, vector<32x32xf32>, vector<8x32xf32> -> vector<8x32xf32>
      %124 = arith.index_cast %arg2 : i32 to index
      %c0_55 = arith.constant 0 : index
      %c0_56 = arith.constant 0 : index
      %125 = vector.load %arg7[%124, %c0_55, %c0_56] : memref<1x1x32xf32, #tpu.memory_space<vmem>>, vector<1x1x32xf32>
      %126 = vector.shape_cast %125 : vector<1x1x32xf32> to vector<1x32xf32>
      %127 = vector.broadcast %126 : vector<1x32xf32> to vector<8x32xf32>
      %128 = arith.addf %123, %127 : vector<8x32xf32>
      %129 = arith.index_cast %arg2 : i32 to index
      %c0_57 = arith.constant 0 : index
      %c0_58 = arith.constant 0 : index
      %130 = vector.load %arg15[%129, %c0_57, %c0_58] : memref<1x8x32xf32, #tpu.memory_space<vmem>>, vector<1x8x32xf32>
      %131 = vector.shape_cast %130 : vector<1x8x32xf32> to vector<8x32xf32>
      %132 = vector.shape_cast %128 : vector<8x32xf32> to vector<1x8x32xf32>
      tpu.vector_store %arg15[%129, %c0_57, %c0_58], %132 {strides = array<i32>} : memref<1x8x32xf32, #tpu.memory_space<vmem>>, vector<1x8x32xf32>,
      %cst_59 = arith.constant 0.000000e+00 : f32
      %133 = vector.broadcast %cst_59 : f32 to vector<8x32xf32>
      %134 = arith.index_cast %arg2 : i32 to index
      %c0_60 = arith.constant 0 : index
      %c0_61 = arith.constant 0 : index
      %135 = vector.load %arg16[%134, %c0_60, %c0_61] : memref<1x8x32xf32, #tpu.memory_space<vmem>>, vector<1x8x32xf32>
      %136 = vector.shape_cast %135 : vector<1x8x32xf32> to vector<8x32xf32>
      %137 = vector.shape_cast %133 : vector<8x32xf32> to vector<1x8x32xf32>
      tpu.vector_store %arg16[%134, %c0_60, %c0_61], %137 {strides = array<i32>} : memref<1x8x32xf32, #tpu.memory_space<vmem>>, vector<1x8x32xf32>,
    } else {
    }
    %c0 = arith.constant 0 : index
    %c0_1 = arith.constant 0 : index
    %c0_2 = arith.constant 0 : index
    %3 = vector.load %arg4[%c0, %c0_1, %c0_2] : memref<1x8x32xf32, #tpu.memory_space<vmem>>, vector<1x8x32xf32>
    %4 = vector.shape_cast %3 : vector<1x8x32xf32> to vector<8x32xf32>
    %5 = arith.index_cast %arg2 : i32 to index
    %c0_3 = arith.constant 0 : index
    %c0_4 = arith.constant 0 : index
    %6 = vector.load %arg8[%5, %c0_3, %c0_4] : memref<1x32x32xf32, #tpu.memory_space<vmem>>, vector<1x32x32xf32>
    %7 = vector.shape_cast %6 : vector<1x32x32xf32> to vector<32x32xf32>
    %cst = arith.constant dense<0.000000e+00> : vector<8x32xf32>
    %8 = tpu.matmul %4, %7, %cst {dimension_numbers = #tpu.dot_dimension_numbers<[1], [0], [0], [1], [0, 0, 1, 1], [], []>} : vector<8x32xf32>, vector<32x32xf32>, vector<8x32xf32> -> vector<8x32xf32>
    %9 = arith.index_cast %arg2 : i32 to index
    %c0_5 = arith.constant 0 : index
    %c0_6 = arith.constant 0 : index
    %10 = vector.load %arg9[%9, %c0_5, %c0_6] : memref<1x1x32xf32, #tpu.memory_space<vmem>>, vector<1x1x32xf32>
    %11 = vector.shape_cast %10 : vector<1x1x32xf32> to vector<1x32xf32>
    %12 = vector.broadcast %11 : vector<1x32xf32> to vector<8x32xf32>
    %13 = arith.addf %8, %12 : vector<8x32xf32>
    %c0_7 = arith.constant 0 : index
    %c0_8 = arith.constant 0 : index
    %c0_9 = arith.constant 0 : index
    %14 = vector.load %arg5[%c0_7, %c0_8, %c0_9] : memref<1x8x32xf32, #tpu.memory_space<vmem>>, vector<1x8x32xf32>
    %15 = vector.shape_cast %14 : vector<1x8x32xf32> to vector<8x32xf32>
    %16 = arith.index_cast %arg2 : i32 to index
    %c0_10 = arith.constant 0 : index
    %c0_11 = arith.constant 0 : index
    %17 = vector.load %arg10[%16, %c0_10, %c0_11] : memref<1x32x32xf32, #tpu.memory_space<vmem>>, vector<1x32x32xf32>
    %18 = vector.shape_cast %17 : vector<1x32x32xf32> to vector<32x32xf32>
    %cst_12 = arith.constant dense<0.000000e+00> : vector<8x32xf32>
    %19 = tpu.matmul %15, %18, %cst_12 {dimension_numbers = #tpu.dot_dimension_numbers<[1], [0], [0], [1], [0, 0, 1, 1], [], []>} : vector<8x32xf32>, vector<32x32xf32>, vector<8x32xf32> -> vector<8x32xf32>
    %20 = arith.index_cast %arg2 : i32 to index
    %c0_13 = arith.constant 0 : index
    %c0_14 = arith.constant 0 : index
    %21 = vector.load %arg11[%20, %c0_13, %c0_14] : memref<1x1x32xf32, #tpu.memory_space<vmem>>, vector<1x1x32xf32>
    %22 = vector.shape_cast %21 : vector<1x1x32xf32> to vector<1x32xf32>
    %23 = vector.broadcast %22 : vector<1x32xf32> to vector<8x32xf32>
    %24 = arith.addf %19, %23 : vector<8x32xf32>
    %25 = arith.index_cast %arg2 : i32 to index
    %c0_15 = arith.constant 0 : index
    %c0_16 = arith.constant 0 : index
    %26 = vector.load %arg15[%25, %c0_15, %c0_16] : memref<1x8x32xf32, #tpu.memory_space<vmem>>, vector<1x8x32xf32>
    %27 = vector.shape_cast %26 : vector<1x8x32xf32> to vector<8x32xf32>
    %28 = vector.extract_strided_slice %27 {offsets = [0, 0], sizes = [8, 8], strides = [1, 1]} : vector<8x32xf32> to vector<8x8xf32>
    %29 = vector.extract_strided_slice %13 {offsets = [0, 0], sizes = [8, 8], strides = [1, 1]} : vector<8x32xf32> to vector<8x8xf32>
    %30 = vector.extract_strided_slice %24 {offsets = [0, 0], sizes = [8, 8], strides = [1, 1]} : vector<8x32xf32> to vector<8x8xf32>
    %cst_17 = arith.constant dense<0.000000e+00> : vector<8x8xf32>
    %31 = tpu.matmul %28, %29, %cst_17 {dimension_numbers = #tpu.dot_dimension_numbers<[1], [1], [0], [0], [0, 0, 1, 0], [], []>} : vector<8x8xf32>, vector<8x8xf32>, vector<8x8xf32> -> vector<8x8xf32>
    %cst_18 = arith.constant 0.353553385 : f32
    %32 = vector.broadcast %cst_18 : f32 to vector<8x8xf32>
    %33 = arith.mulf %31, %32 : vector<8x8xf32>
    %cst_19 = arith.constant dense<0xFF800000> : vector<8xf32>
    %34 = vector.multi_reduction <maximumf>, %33, %cst_19 [0] : vector<8x8xf32> to vector<8xf32>
    %35 = vector.shape_cast %34 : vector<8xf32> to vector<1x8xf32>
    %36 = vector.broadcast %35 : vector<1x8xf32> to vector<8x8xf32>
    %37 = arith.subf %33, %36 : vector<8x8xf32>
    %38 = math.exp %37 : vector<8x8xf32>
    %cst_20 = arith.constant dense<0.000000e+00> : vector<8xf32>
    %39 = vector.multi_reduction <add>, %38, %cst_20 [0] : vector<8x8xf32> to vector<8xf32>
    %40 = vector.shape_cast %39 : vector<8xf32> to vector<1x8xf32>
    %41 = tpu.reciprocal %40 : vector<1x8xf32> -> vector<1x8xf32>
    %42 = vector.broadcast %41 : vector<1x8xf32> to vector<8x8xf32>
    %43 = arith.mulf %38, %42 : vector<8x8xf32>
    %cst_21 = arith.constant dense<0.000000e+00> : vector<8x8xf32>
    %44 = tpu.matmul %43, %30, %cst_21 {dimension_numbers = #tpu.dot_dimension_numbers<[1], [0], [0], [1], [0, 0, 1, 1], [], []>} : vector<8x8xf32>, vector<8x8xf32>, vector<8x8xf32> -> vector<8x8xf32>
    %45 = vector.extract_strided_slice %27 {offsets = [0, 8], sizes = [8, 8], strides = [1, 1]} : vector<8x32xf32> to vector<8x8xf32>
    %46 = vector.extract_strided_slice %13 {offsets = [0, 8], sizes = [8, 8], strides = [1, 1]} : vector<8x32xf32> to vector<8x8xf32>
    %47 = vector.extract_strided_slice %24 {offsets = [0, 8], sizes = [8, 8], strides = [1, 1]} : vector<8x32xf32> to vector<8x8xf32>
    %cst_22 = arith.constant dense<0.000000e+00> : vector<8x8xf32>
    %48 = tpu.matmul %45, %46, %cst_22 {dimension_numbers = #tpu.dot_dimension_numbers<[1], [1], [0], [0], [0, 0, 1, 0], [], []>} : vector<8x8xf32>, vector<8x8xf32>, vector<8x8xf32> -> vector<8x8xf32>
    %cst_23 = arith.constant 0.353553385 : f32
    %49 = vector.broadcast %cst_23 : f32 to vector<8x8xf32>
    %50 = arith.mulf %48, %49 : vector<8x8xf32>
    %cst_24 = arith.constant dense<0xFF800000> : vector<8xf32>
    %51 = vector.multi_reduction <maximumf>, %50, %cst_24 [0] : vector<8x8xf32> to vector<8xf32>
    %52 = vector.shape_cast %51 : vector<8xf32> to vector<1x8xf32>
    %53 = vector.broadcast %52 : vector<1x8xf32> to vector<8x8xf32>
    %54 = arith.subf %50, %53 : vector<8x8xf32>
    %55 = math.exp %54 : vector<8x8xf32>
    %cst_25 = arith.constant dense<0.000000e+00> : vector<8xf32>
    %56 = vector.multi_reduction <add>, %55, %cst_25 [0] : vector<8x8xf32> to vector<8xf32>
    %57 = vector.shape_cast %56 : vector<8xf32> to vector<1x8xf32>
    %58 = tpu.reciprocal %57 : vector<1x8xf32> -> vector<1x8xf32>
    %59 = vector.broadcast %58 : vector<1x8xf32> to vector<8x8xf32>
    %60 = arith.mulf %55, %59 : vector<8x8xf32>
    %cst_26 = arith.constant dense<0.000000e+00> : vector<8x8xf32>
    %61 = tpu.matmul %60, %47, %cst_26 {dimension_numbers = #tpu.dot_dimension_numbers<[1], [0], [0], [1], [0, 0, 1, 1], [], []>} : vector<8x8xf32>, vector<8x8xf32>, vector<8x8xf32> -> vector<8x8xf32>
    %62 = vector.extract_strided_slice %27 {offsets = [0, 16], sizes = [8, 8], strides = [1, 1]} : vector<8x32xf32> to vector<8x8xf32>
    %63 = vector.extract_strided_slice %13 {offsets = [0, 16], sizes = [8, 8], strides = [1, 1]} : vector<8x32xf32> to vector<8x8xf32>
    %64 = vector.extract_strided_slice %24 {offsets = [0, 16], sizes = [8, 8], strides = [1, 1]} : vector<8x32xf32> to vector<8x8xf32>
    %cst_27 = arith.constant dense<0.000000e+00> : vector<8x8xf32>
    %65 = tpu.matmul %62, %63, %cst_27 {dimension_numbers = #tpu.dot_dimension_numbers<[1], [1], [0], [0], [0, 0, 1, 0], [], []>} : vector<8x8xf32>, vector<8x8xf32>, vector<8x8xf32> -> vector<8x8xf32>
    %cst_28 = arith.constant 0.353553385 : f32
    %66 = vector.broadcast %cst_28 : f32 to vector<8x8xf32>
    %67 = arith.mulf %65, %66 : vector<8x8xf32>
    %cst_29 = arith.constant dense<0xFF800000> : vector<8xf32>
    %68 = vector.multi_reduction <maximumf>, %67, %cst_29 [0] : vector<8x8xf32> to vector<8xf32>
    %69 = vector.shape_cast %68 : vector<8xf32> to vector<1x8xf32>
    %70 = vector.broadcast %69 : vector<1x8xf32> to vector<8x8xf32>
    %71 = arith.subf %67, %70 : vector<8x8xf32>
    %72 = math.exp %71 : vector<8x8xf32>
    %cst_30 = arith.constant dense<0.000000e+00> : vector<8xf32>
    %73 = vector.multi_reduction <add>, %72, %cst_30 [0] : vector<8x8xf32> to vector<8xf32>
    %74 = vector.shape_cast %73 : vector<8xf32> to vector<1x8xf32>
    %75 = tpu.reciprocal %74 : vector<1x8xf32> -> vector<1x8xf32>
    %76 = vector.broadcast %75 : vector<1x8xf32> to vector<8x8xf32>
    %77 = arith.mulf %72, %76 : vector<8x8xf32>
    %cst_31 = arith.constant dense<0.000000e+00> : vector<8x8xf32>
    %78 = tpu.matmul %77, %64, %cst_31 {dimension_numbers = #tpu.dot_dimension_numbers<[1], [0], [0], [1], [0, 0, 1, 1], [], []>} : vector<8x8xf32>, vector<8x8xf32>, vector<8x8xf32> -> vector<8x8xf32>
    %79 = vector.extract_strided_slice %27 {offsets = [0, 24], sizes = [8, 8], strides = [1, 1]} : vector<8x32xf32> to vector<8x8xf32>
    %80 = vector.extract_strided_slice %13 {offsets = [0, 24], sizes = [8, 8], strides = [1, 1]} : vector<8x32xf32> to vector<8x8xf32>
    %81 = vector.extract_strided_slice %24 {offsets = [0, 24], sizes = [8, 8], strides = [1, 1]} : vector<8x32xf32> to vector<8x8xf32>
    %cst_32 = arith.constant dense<0.000000e+00> : vector<8x8xf32>
    %82 = tpu.matmul %79, %80, %cst_32 {dimension_numbers = #tpu.dot_dimension_numbers<[1], [1], [0], [0], [0, 0, 1, 0], [], []>} : vector<8x8xf32>, vector<8x8xf32>, vector<8x8xf32> -> vector<8x8xf32>
    %cst_33 = arith.constant 0.353553385 : f32
    %83 = vector.broadcast %cst_33 : f32 to vector<8x8xf32>
    %84 = arith.mulf %82, %83 : vector<8x8xf32>
    %cst_34 = arith.constant dense<0xFF800000> : vector<8xf32>
    %85 = vector.multi_reduction <maximumf>, %84, %cst_34 [0] : vector<8x8xf32> to vector<8xf32>
    %86 = vector.shape_cast %85 : vector<8xf32> to vector<1x8xf32>
    %87 = vector.broadcast %86 : vector<1x8xf32> to vector<8x8xf32>
    %88 = arith.subf %84, %87 : vector<8x8xf32>
    %89 = math.exp %88 : vector<8x8xf32>
    %cst_35 = arith.constant dense<0.000000e+00> : vector<8xf32>
    %90 = vector.multi_reduction <add>, %89, %cst_35 [0] : vector<8x8xf32> to vector<8xf32>
    %91 = vector.shape_cast %90 : vector<8xf32> to vector<1x8xf32>
    %92 = tpu.reciprocal %91 : vector<1x8xf32> -> vector<1x8xf32>
    %93 = vector.broadcast %92 : vector<1x8xf32> to vector<8x8xf32>
    %94 = arith.mulf %89, %93 : vector<8x8xf32>
    %cst_36 = arith.constant dense<0.000000e+00> : vector<8x8xf32>
    %95 = tpu.matmul %94, %81, %cst_36 {dimension_numbers = #tpu.dot_dimension_numbers<[1], [0], [0], [1], [0, 0, 1, 1], [], []>} : vector<8x8xf32>, vector<8x8xf32>, vector<8x8xf32> -> vector<8x8xf32>
    %96 = tpu.concatenate %44, %61, %78, %95 in 1 : vector<8x8xf32>, vector<8x8xf32>, vector<8x8xf32>, vector<8x8xf32> -> vector<8x32xf32>
    %97 = arith.index_cast %arg2 : i32 to index
    %c0_37 = arith.constant 0 : index
    %c0_38 = arith.constant 0 : index
    %98 = vector.load %arg16[%97, %c0_37, %c0_38] : memref<1x8x32xf32, #tpu.memory_space<vmem>>, vector<1x8x32xf32>
    %99 = vector.shape_cast %98 : vector<1x8x32xf32> to vector<8x32xf32>
    %100 = arith.addf %99, %96 : vector<8x32xf32>
    %101 = arith.index_cast %arg2 : i32 to index
    %c0_39 = arith.constant 0 : index
    %c0_40 = arith.constant 0 : index
    %102 = vector.load %arg16[%101, %c0_39, %c0_40] : memref<1x8x32xf32, #tpu.memory_space<vmem>>, vector<1x8x32xf32>
    %103 = vector.shape_cast %102 : vector<1x8x32xf32> to vector<8x32xf32>
    %104 = vector.shape_cast %100 : vector<8x32xf32> to vector<1x8x32xf32>
    tpu.vector_store %arg16[%101, %c0_39, %c0_40], %104 {strides = array<i32>} : memref<1x8x32xf32, #tpu.memory_space<vmem>>, vector<1x8x32xf32>,
    %c0_i32_41 = arith.constant 0 : i32
    %105 = arith.cmpi eq, %arg1, %c0_i32_41 : i32
    %c0_i32_42 = arith.constant 0 : i32
    %106 = arith.cmpi eq, %arg2, %c0_i32_42 : i32
    %107 = arith.andi %105, %106 : i1
    %108 = arith.extui %107 : i1 to i32
    %c0_i32_43 = arith.constant 0 : i32
    %109 = arith.cmpi ne, %108, %c0_i32_43 : i32
    scf.if %109 {
      %cst_49 = arith.constant 0.000000e+00 : f32
      %118 = vector.broadcast %cst_49 : f32 to vector<8x32xf32>
      %c0_50 = arith.constant 0 : index
      %c0_51 = arith.constant 0 : index
      %119 = vector.load %arg17[%c0_50, %c0_51] : memref<8x32xf32, #tpu.memory_space<vmem>>, vector<8x32xf32>
      tpu.vector_store %arg17[%c0_50, %c0_51], %118 {strides = array<i32>} : memref<8x32xf32, #tpu.memory_space<vmem>>, vector<8x32xf32>,
    } else {
    }
    %c0_i32_44 = arith.constant 0 : i32
    %110 = arith.cmpi eq, %arg1, %c0_i32_44 : i32
    %111 = arith.extui %110 : i1 to i32
    %c0_i32_45 = arith.constant 0 : i32
    %112 = arith.cmpi ne, %111, %c0_i32_45 : i32
    scf.if %112 {
      %c0_49 = arith.constant 0 : index
      %c0_50 = arith.constant 0 : index
      %118 = vector.load %arg17[%c0_49, %c0_50] : memref<8x32xf32, #tpu.memory_space<vmem>>, vector<8x32xf32>
      %119 = arith.index_cast %arg2 : i32 to index
      %c0_51 = arith.constant 0 : index
      %c0_52 = arith.constant 0 : index
      %120 = vector.load %arg16[%119, %c0_51, %c0_52] : memref<1x8x32xf32, #tpu.memory_space<vmem>>, vector<1x8x32xf32>
      %121 = vector.shape_cast %120 : vector<1x8x32xf32> to vector<8x32xf32>
      %122 = arith.index_cast %arg2 : i32 to index
      %c0_53 = arith.constant 0 : index
      %c0_54 = arith.constant 0 : index
      %123 = vector.load %arg12[%122, %c0_53, %c0_54] : memref<1x32x32xf32, #tpu.memory_space<vmem>>, vector<1x32x32xf32>
      %124 = vector.shape_cast %123 : vector<1x32x32xf32> to vector<32x32xf32>
      %cst_55 = arith.constant dense<0.000000e+00> : vector<8x32xf32>
      %125 = tpu.matmul %121, %124, %cst_55 {dimension_numbers = #tpu.dot_dimension_numbers<[1], [0], [0], [1], [0, 0, 1, 1], [], []>} : vector<8x32xf32>, vector<32x32xf32>, vector<8x32xf32> -> vector<8x32xf32>
      %126 = arith.addf %118, %125 : vector<8x32xf32>
      %c0_56 = arith.constant 0 : index
      %c0_57 = arith.constant 0 : index
      %127 = vector.load %arg17[%c0_56, %c0_57] : memref<8x32xf32, #tpu.memory_space<vmem>>, vector<8x32xf32>
      tpu.vector_store %arg17[%c0_56, %c0_57], %126 {strides = array<i32>} : memref<8x32xf32, #tpu.memory_space<vmem>>, vector<8x32xf32>,
    } else {
    }
    %c0_i32_46 = arith.constant 0 : i32
    %113 = arith.cmpi eq, %arg1, %c0_i32_46 : i32
    %c0_i32_47 = arith.constant 0 : i32
    %114 = arith.cmpi eq, %arg2, %c0_i32_47 : i32
    %115 = arith.andi %113, %114 : i1
    %116 = arith.extui %115 : i1 to i32
    %c0_i32_48 = arith.constant 0 : i32
    %117 = arith.cmpi ne, %116, %c0_i32_48 : i32
    scf.if %117 {
      %c0_49 = arith.constant 0 : index
      %c0_50 = arith.constant 0 : index
      %118 = vector.load %arg17[%c0_49, %c0_50] : memref<8x32xf32, #tpu.memory_space<vmem>>, vector<8x32xf32>
      %c0_51 = arith.constant 0 : index
      %c0_52 = arith.constant 0 : index
      %119 = vector.load %arg13[%c0_51, %c0_52] : memref<1x32xf32, #tpu.memory_space<vmem>>, vector<1x32xf32>
      %120 = vector.broadcast %119 : vector<1x32xf32> to vector<8x32xf32>
      %121 = arith.addf %118, %120 : vector<8x32xf32>
      %c0_53 = arith.constant 0 : index
      %c0_54 = arith.constant 0 : index
      %c0_55 = arith.constant 0 : index
      %122 = vector.load %arg14[%c0_53, %c0_54, %c0_55] : memref<1x8x32xf32, #tpu.memory_space<vmem>>, vector<1x8x32xf32>
      %123 = vector.shape_cast %122 : vector<1x8x32xf32> to vector<8x32xf32>
      %124 = vector.shape_cast %121 : vector<8x32xf32> to vector<1x8x32xf32>
      tpu.vector_store %arg14[%c0_53, %c0_54, %c0_55], %124 {strides = array<i32>} : memref<1x8x32xf32, #tpu.memory_space<vmem>>, vector<1x8x32xf32>,
    } else {
    }
    return
  }
  func.func @transform_0(%arg0: i32, %arg1: i32, %arg2: i32) -> (i32, i32, i32) {
    %c0_i32 = arith.constant 0 : i32
    %c0_i32_0 = arith.constant 0 : i32
    %c0_i32_1 = arith.constant 0 : i32
    return %arg0, %c0_i32, %c0_i32_0 : i32, i32, i32
  }
  func.func @transform_1(%arg0: i32, %arg1: i32, %arg2: i32) -> (i32, i32, i32) {
    %c0_i32 = arith.constant 0 : i32
    %c0_i32_0 = arith.constant 0 : i32
    return %arg0, %arg1, %c0_i32 : i32, i32, i32
  }
  func.func @transform_2(%arg0: i32, %arg1: i32, %arg2: i32) -> (i32, i32, i32) {
    %c0_i32 = arith.constant 0 : i32
    %c0_i32_0 = arith.constant 0 : i32
    return %arg0, %arg1, %c0_i32 : i32, i32, i32
  }
  func.func @transform_3(%arg0: i32, %arg1: i32, %arg2: i32) -> (i32, i32, i32) {
    %c0_i32 = arith.constant 0 : i32
    %c0_i32_0 = arith.constant 0 : i32
    %c0_i32_1 = arith.constant 0 : i32
    %c0_i32_2 = arith.constant 0 : i32
    return %c0_i32, %c0_i32_0, %c0_i32_1 : i32, i32, i32
  }
  func.func @transform_4(%arg0: i32, %arg1: i32, %arg2: i32) -> (i32, i32, i32) {
    %c0_i32 = arith.constant 0 : i32
    %c0_i32_0 = arith.constant 0 : i32
    %c0_i32_1 = arith.constant 0 : i32
    %c0_i32_2 = arith.constant 0 : i32
    return %c0_i32, %c0_i32_0, %c0_i32_1 : i32, i32, i32
  }
  func.func @transform_5(%arg0: i32, %arg1: i32, %arg2: i32) -> (i32, i32, i32) {
    %c0_i32 = arith.constant 0 : i32
    %c0_i32_0 = arith.constant 0 : i32
    %c0_i32_1 = arith.constant 0 : i32
    %c0_i32_2 = arith.constant 0 : i32
    return %c0_i32, %c0_i32_0, %c0_i32_1 : i32, i32, i32
  }
  func.func @transform_6(%arg0: i32, %arg1: i32, %arg2: i32) -> (i32, i32, i32) {
    %c0_i32 = arith.constant 0 : i32
    %c0_i32_0 = arith.constant 0 : i32
    %c0_i32_1 = arith.constant 0 : i32
    %c0_i32_2 = arith.constant 0 : i32
    return %c0_i32, %c0_i32_0, %c0_i32_1 : i32, i32, i32
  }
  func.func @transform_7(%arg0: i32, %arg1: i32, %arg2: i32) -> (i32, i32, i32) {
    %c0_i32 = arith.constant 0 : i32
    %c0_i32_0 = arith.constant 0 : i32
    %c0_i32_1 = arith.constant 0 : i32
    %c0_i32_2 = arith.constant 0 : i32
    return %c0_i32, %c0_i32_0, %c0_i32_1 : i32, i32, i32
  }
  func.func @transform_8(%arg0: i32, %arg1: i32, %arg2: i32) -> (i32, i32, i32) {
    %c0_i32 = arith.constant 0 : i32
    %c0_i32_0 = arith.constant 0 : i32
    %c0_i32_1 = arith.constant 0 : i32
    %c0_i32_2 = arith.constant 0 : i32
    return %c0_i32, %c0_i32_0, %c0_i32_1 : i32, i32, i32
  }
  func.func @transform_9(%arg0: i32, %arg1: i32, %arg2: i32) -> (i32, i32, i32) {
    %c0_i32 = arith.constant 0 : i32
    %c0_i32_0 = arith.constant 0 : i32
    %c0_i32_1 = arith.constant 0 : i32
    %c0_i32_2 = arith.constant 0 : i32
    return %c0_i32, %c0_i32_0, %c0_i32_1 : i32, i32, i32
  }
  func.func @transform_10(%arg0: i32, %arg1: i32, %arg2: i32) -> (i32, i32) {
    %c0_i32 = arith.constant 0 : i32
    %c0_i32_0 = arith.constant 0 : i32
    %c0_i32_1 = arith.constant 0 : i32
    return %c0_i32, %c0_i32_0 : i32, i32
  }
  func.func @transform_11(%arg0: i32, %arg1: i32, %arg2: i32) -> (i32, i32, i32) {
    %c0_i32 = arith.constant 0 : i32
    %c0_i32_0 = arith.constant 0 : i32
    %c0_i32_1 = arith.constant 0 : i32
    return %arg0, %c0_i32, %c0_i32_0 : i32, i32, i32
  }
}

</mosaic_0001>

<llo_original>
// kernel: tpu_custom_call.1
$region0: #{tpu_custom_call.1}
  #allocation0 [shape = 'u32[]', space=smem, size = 0x4, offset = 0x4, fixed_abs, tag = 'smem constant byte address 0x4 - core index']
  #allocation1 [shape = 'u32[144,128]{1,0:T(1,128)}', space=vmem, size = 0x12000, scoped, tag = 'internal scratch']
  #allocation2 [shape = 'f32[1,8,32]{2,1,0:T(8,128)}', space=vmem, size = 0x1000, scoped, tag = 'scratch operand']
  #allocation3 [shape = 'f32[1,8,32]{2,1,0:T(8,128)}', space=vmem, size = 0x1000, scoped, tag = 'scratch operand']
  #allocation4 [shape = 'f32[8,32]{1,0:T(8,128)}', space=vmem, size = 0x1000, scoped, tag = 'scratch operand']
  %s0 = inlined_call_operand.hbm [shape: f32[2,8,32], index: 0, kind: input, shape index: {}]
  %s1 = inlined_call_operand.hbm [shape: f32[2,8,32], index: 1, kind: input, shape index: {}]
  %s2 = inlined_call_operand.hbm [shape: f32[2,8,32], index: 2, kind: input, shape index: {}]
  %s3 = inlined_call_operand.hbm [shape: f32[1,32,32], index: 3, kind: input, shape index: {}]
  %s4 = inlined_call_operand.vmem [shape: f32[1,1,32], index: 4, kind: input, shape index: {}]
  %s5 = inlined_call_operand.hbm [shape: f32[1,32,32], index: 5, kind: input, shape index: {}]
  %s6 = inlined_call_operand.vmem [shape: f32[1,1,32], index: 6, kind: input, shape index: {}]
  %s7 = inlined_call_operand.hbm [shape: f32[1,32,32], index: 7, kind: input, shape index: {}]
  %s8 = inlined_call_operand.hbm [shape: f32[1,1,32], index: 8, kind: input, shape index: {}]
  %s9 = inlined_call_operand.vmem [shape: f32[1,32,32], index: 9, kind: input, shape index: {}]
  %s10 = inlined_call_operand.vmem [shape: f32[1,32], index: 10, kind: input, shape index: {}]
  %s11 = inlined_call_operand.hbm [shape: f32[2,8,32], index: 11, kind: output, shape index: {}]
  %s12 = sld [smem:[#allocation0]]
  $region121: #{tpu_custom_call.1} parent=0
    _
  %s14 = ssub.s32 1, %s12
  %s15 = scalar_select 0, %s14, %s12
  $region1: #{tpu_custom_call.1} parent=0
    #allocation5 [shape = 'u8[8192]{0}', space=vmem, size = 0x2000, scoped, tag = 'input window, operand 0']
    #allocation6 [shape = 's32[2]{0}', space=sflag, size = 0x8, scoped, tag = 'scoped memory for tpu_custom_call.1']
    #allocation7 [shape = 's32[2]{0}', space=sflag, size = 0x8, scoped, tag = 'scoped memory for tpu_custom_call.1']
    #allocation8 [shape = 'u8[8192]{0}', space=vmem, size = 0x2000, scoped, tag = 'input window, operand 1']
    #allocation9 [shape = 's32[2]{0}', space=sflag, size = 0x8, scoped, tag = 'scoped memory for tpu_custom_call.1']
    #allocation10 [shape = 'u8[8192]{0}', space=vmem, size = 0x2000, scoped, tag = 'input window, operand 2']
    #allocation11 [shape = 'u8[16384]{0}', space=vmem, size = 0x4000, scoped, tag = 'input window, operand 3, single buffered']
    #allocation12 [shape = 's32[1]{0}', space=sflag, size = 0x4, scoped, tag = 'scoped memory for tpu_custom_call.1']
    #allocation13 [shape = 'u8[16384]{0}', space=vmem, size = 0x4000, scoped, tag = 'input window, operand 5, single buffered']
    #allocation14 [shape = 'u8[16384]{0}', space=vmem, size = 0x4000, scoped, tag = 'input window, operand 7, single buffered']
    #allocation15 [shape = 's32[1]{0}', space=sflag, size = 0x4, scoped, tag = 'scoped memory for tpu_custom_call.1']
    #allocation16 [shape = 'u8[512]{0}', space=vmem, size = 0x400, scoped, tag = 'input window, operand 8, single buffered']
    #allocation17 [shape = 'u8[8192]{0}', space=vmem, size = 0x2000, scoped, tag = 'output window, operand 0']
    %16 = vsyncpa [#allocation6], 0
    %s17 = scalar_lea.sflag [#allocation6], 1
    %18 = vsyncpa %s17, 0
    %19 = vsyncpa [#allocation9], 0
    %s20 = scalar_lea.sflag [#allocation9], 1
    %21 = vsyncpa %s20, 0
    %22 = vsyncpa [#allocation12], 0
    %23 = vsyncpa [#allocation15], 0
    %24 = vsyncpa [#allocation7], 0
    %s25 = scalar_lea.sflag [#allocation7], 1
    %26 = vsyncpa %s25, 0
    loop: start=0, step=1, limit=4
    $region2: #{tpu_custom_call.1} parent=1 // loop_pre_header
      _
    $region3: #{tpu_custom_call.1} parent=1 // loop_header
      %s28 = sphi 0, %s32
      %p29 = scmp.ge.s32.totalorder %s28, 4
      %s35 = sphi 0, %s54
      %s36 = sphi 0, %s50
      %s37 = sphi 0, %s46
      %s38 = sphi 0, %s35
      %s39 = sphi 0, %s36
      %s40 = sphi 0, %s37
      %s41 = sphi 0, %s38
      %s42 = sphi 0, %s39
      %s43 = sphi 0, %s40
      %s57 = sphi 0, %s59
      %s60 = sphi 0, %s57
      %s61 = sphi 0, %s60
      %s77 = sphi 0, %s61
      %s85 = sphi 0, %s87
      %s88 = sphi 0, %s85
      %s89 = sphi 0, %s88
      %s105 = sphi 0, %s89
      %s113 = sphi 0, %s115
      %s116 = sphi 0, %s113
      %s117 = sphi 0, %s116
      %s133 = sphi 0, %s117
      %s137 = sphi 0, %s137
      %s139 = sphi 0, %s137
      %s140 = sphi 0, %s139
      %s154 = sphi 0, %s140
      %s158 = sphi 0, %s158
      %s160 = sphi 0, %s158
      %s161 = sphi 0, %s160
      %s175 = sphi 0, %s161
      %s179 = sphi 0, %s179
      %s181 = sphi 0, %s179
      %s182 = sphi 0, %s181
      %s196 = sphi 0, %s182
      %s200 = sphi 0, %s200
      %s202 = sphi 0, %s200
      %s203 = sphi 0, %s202
      %s217 = sphi 0, %s203
      %s221 = sphi 0, %s221
      %s223 = sphi 0, %s221
      %s224 = sphi 0, %s223
      %s238 = sphi 0, %s224
      %s242 = sphi 0, %s242
      %s244 = sphi 0, %s242
      %s245 = sphi 0, %s244
      %s259 = sphi 0, %s245
      %s263 = sphi 0, %s263
      %s265 = sphi 0, %s263
      %s266 = sphi 0, %s265
      %s280 = sphi 0, %s266
      %s284 = sphi 0, %s284
      %s286 = sphi 0, %s284
      %s287 = sphi 0, %s286
      %s301 = sphi 0, %s287
      %s307 = sphi 0, %s309
      %s310 = sphi 0, %s307
      %s311 = sphi 0, %s310
      %s327 = sphi 0, %s311
    $region4: #{tpu_custom_call.1} parent=1 // loop_header_branch
      %31 = sbr.rel (%p29) target = $region8
    $region5: #{tpu_custom_call.1} parent=1 // loop_body
      %s33 = ssub.s32 %s28, 1
      %s34 = ssub.s32 %s28, 2
      %s44 = sadd.s32 1, %s37
      %p45 = scmp.ge.s32.totalorder %s44, 1
      %s46 = scalar_select %p45, 0, %s44
      %s47 = sadd.s32 1, %s36
      %s48 = scalar_select %p45, %s47, %s36
      %p49 = scmp.ge.s32.totalorder %s48, 1
      %s50 = scalar_select %p49, 0, %s48
      %s51 = sadd.s32 1, %s35
      %s52 = scalar_select %p49, %s51, %s35
      %p53 = scmp.ge.s32.totalorder %s52, 2
      %s54 = scalar_select %p53, 0, %s52
      %s55 = ssub.s32 %s35, %s54
      %p56 = scmp.eq.s32.totalorder %s55, 0
      %s58 = sadd.s32 %s57, 1
      %s59 = scalar_select %p56, %s57, %s58
      %p62 = pneg %p56
      %p63 = scmp.eq.s32.totalorder %s28, 1
      %p64 = por %p62, %p63
      %p65 = scmp.ne.s32.totalorder %s57, %s60
      %p66 = scmp.eq.s32.totalorder %s28, 0
      %p67 = por %p65, %p66
      %p68 = scmp.ne.s32.totalorder %s57, %s60
      %p69 = scmp.eq.s32.totalorder %s33, 1
      %p70 = por %p68, %p69
      %p71 = scmp.ne.s32.totalorder %s60, %s61
      %p72 = scmp.eq.s32.totalorder %s33, 0
      %p73 = por %p71, %p72
      %p74 = scmp.ne.s32.totalorder %s60, %s61
      %p75 = scmp.eq.s32.totalorder %s34, 1
      %p76 = por %p74, %p75
      %p78 = scmp.ne.s32.totalorder %s61, %s77
      %p79 = scmp.eq.s32.totalorder %s34, 0
      %p80 = por %p78, %p79
      %s81 = ssub.s32 %s35, %s54
      %s82 = ssub.s32 %s36, %s50
      %s83 = sor.u32 %s81, %s82
      %p84 = scmp.eq.s32.totalorder %s83, 0
      %s86 = sadd.s32 %s85, 1
      %s87 = scalar_select %p84, %s85, %s86
      %p90 = pneg %p84
      %p91 = scmp.eq.s32.totalorder %s28, 1
      %p92 = por %p90, %p91
      %p93 = scmp.ne.s32.totalorder %s85, %s88
      %p94 = scmp.eq.s32.totalorder %s28, 0
      %p95 = por %p93, %p94
      %p96 = scmp.ne.s32.totalorder %s85, %s88
      %p97 = scmp.eq.s32.totalorder %s33, 1
      %p98 = por %p96, %p97
      %p99 = scmp.ne.s32.totalorder %s88, %s89
      %p100 = scmp.eq.s32.totalorder %s33, 0
      %p101 = por %p99, %p100
      %p102 = scmp.ne.s32.totalorder %s88, %s89
      %p103 = scmp.eq.s32.totalorder %s34, 1
      %p104 = por %p102, %p103
      %p106 = scmp.ne.s32.totalorder %s89, %s105
      %p107 = scmp.eq.s32.totalorder %s34, 0
      %p108 = por %p106, %p107
      %s109 = ssub.s32 %s35, %s54
      %s110 = ssub.s32 %s36, %s50
      %s111 = sor.u32 %s109, %s110
      %p112 = scmp.eq.s32.totalorder %s111, 0
      %s114 = sadd.s32 %s113, 1
      %s115 = scalar_select %p112, %s113, %s114
      %p118 = pneg %p112
      %p119 = scmp.eq.s32.totalorder %s28, 1
      %p120 = por %p118, %p119
      %p121 = scmp.ne.s32.totalorder %s113, %s116
      %p122 = scmp.eq.s32.totalorder %s28, 0
      %p123 = por %p121, %p122
      %p124 = scmp.ne.s32.totalorder %s113, %s116
      %p125 = scmp.eq.s32.totalorder %s33, 1
      %p126 = por %p124, %p125
      %p127 = scmp.ne.s32.totalorder %s116, %s117
      %p128 = scmp.eq.s32.totalorder %s33, 0
      %p129 = por %p127, %p128
      %p130 = scmp.ne.s32.totalorder %s116, %s117
      %p131 = scmp.eq.s32.totalorder %s34, 1
      %p132 = por %p130, %p131
      %p134 = scmp.ne.s32.totalorder %s117, %s133
      %p135 = scmp.eq.s32.totalorder %s34, 0
      %p136 = por %p134, %p135
      %s138 = sadd.s32 %s137, 1
      %p141 = scmp.eq.s32.totalorder %s28, 1
      %p142 = scmp.ne.s32.totalorder %s137, %s139
      %p143 = scmp.eq.s32.totalorder %s28, 0
      %p144 = por %p142, %p143
      %p145 = scmp.ne.s32.totalorder %s137, %s139
      %p146 = scmp.eq.s32.totalorder %s33, 1
      %p147 = por %p145, %p146
      %p148 = scmp.ne.s32.totalorder %s139, %s140
      %p149 = scmp.eq.s32.totalorder %s33, 0
      %p150 = por %p148, %p149
      %p151 = scmp.ne.s32.totalorder %s139, %s140
      %p152 = scmp.eq.s32.totalorder %s34, 1
      %p153 = por %p151, %p152
      %p155 = scmp.ne.s32.totalorder %s140, %s154
      %p156 = scmp.eq.s32.totalorder %s34, 0
      %p157 = por %p155, %p156
      %s159 = sadd.s32 %s158, 1
      %p162 = scmp.eq.s32.totalorder %s28, 1
      %p163 = scmp.ne.s32.totalorder %s158, %s160
      %p164 = scmp.eq.s32.totalorder %s28, 0
      %p165 = por %p163, %p164
      %p166 = scmp.ne.s32.totalorder %s158, %s160
      %p167 = scmp.eq.s32.totalorder %s33, 1
      %p168 = por %p166, %p167
      %p169 = scmp.ne.s32.totalorder %s160, %s161
      %p170 = scmp.eq.s32.totalorder %s33, 0
      %p171 = por %p169, %p170
      %p172 = scmp.ne.s32.totalorder %s160, %s161
      %p173 = scmp.eq.s32.totalorder %s34, 1
      %p174 = por %p172, %p173
      %p176 = scmp.ne.s32.totalorder %s161, %s175
      %p177 = scmp.eq.s32.totalorder %s34, 0
      %p178 = por %p176, %p177
      %s180 = sadd.s32 %s179, 1
      %p183 = scmp.eq.s32.totalorder %s28, 1
      %p184 = scmp.ne.s32.totalorder %s179, %s181
      %p185 = scmp.eq.s32.totalorder %s28, 0
      %p186 = por %p184, %p185
      %p187 = scmp.ne.s32.totalorder %s179, %s181
      %p188 = scmp.eq.s32.totalorder %s33, 1
      %p189 = por %p187, %p188
      %p190 = scmp.ne.s32.totalorder %s181, %s182
      %p191 = scmp.eq.s32.totalorder %s33, 0
      %p192 = por %p190, %p191
      %p193 = scmp.ne.s32.totalorder %s181, %s182
      %p194 = scmp.eq.s32.totalorder %s34, 1
      %p195 = por %p193, %p194
      %p197 = scmp.ne.s32.totalorder %s182, %s196
      %p198 = scmp.eq.s32.totalorder %s34, 0
      %p199 = por %p197, %p198
      %s201 = sadd.s32 %s200, 1
      %p204 = scmp.eq.s32.totalorder %s28, 1
      %p205 = scmp.ne.s32.totalorder %s200, %s202
      %p206 = scmp.eq.s32.totalorder %s28, 0
      %p207 = por %p205, %p206
      %p208 = scmp.ne.s32.totalorder %s200, %s202
      %p209 = scmp.eq.s32.totalorder %s33, 1
      %p210 = por %p208, %p209
      %p211 = scmp.ne.s32.totalorder %s202, %s203
      %p212 = scmp.eq.s32.totalorder %s33, 0
      %p213 = por %p211, %p212
      %p214 = scmp.ne.s32.totalorder %s202, %s203
      %p215 = scmp.eq.s32.totalorder %s34, 1
      %p216 = por %p214, %p215
      %p218 = scmp.ne.s32.totalorder %s203, %s217
      %p219 = scmp.eq.s32.totalorder %s34, 0
      %p220 = por %p218, %p219
      %s222 = sadd.s32 %s221, 1
      %p225 = scmp.eq.s32.totalorder %s28, 1
      %p226 = scmp.ne.s32.totalorder %s221, %s223
      %p227 = scmp.eq.s32.totalorder %s28, 0
      %p228 = por %p226, %p227
      %p229 = scmp.ne.s32.totalorder %s221, %s223
      %p230 = scmp.eq.s32.totalorder %s33, 1
      %p231 = por %p229, %p230
      %p232 = scmp.ne.s32.totalorder %s223, %s224
      %p233 = scmp.eq.s32.totalorder %s33, 0
      %p234 = por %p232, %p233
      %p235 = scmp.ne.s32.totalorder %s223, %s224
      %p236 = scmp.eq.s32.totalorder %s34, 1
      %p237 = por %p235, %p236
      %p239 = scmp.ne.s32.totalorder %s224, %s238
      %p240 = scmp.eq.s32.totalorder %s34, 0
      %p241 = por %p239, %p240
      %s243 = sadd.s32 %s242, 1
      %p246 = scmp.eq.s32.totalorder %s28, 1
      %p247 = scmp.ne.s32.totalorder %s242, %s244
      %p248 = scmp.eq.s32.totalorder %s28, 0
      %p249 = por %p247, %p248
      %p250 = scmp.ne.s32.totalorder %s242, %s244
      %p251 = scmp.eq.s32.totalorder %s33, 1
      %p252 = por %p250, %p251
      %p253 = scmp.ne.s32.totalorder %s244, %s245
      %p254 = scmp.eq.s32.totalorder %s33, 0
      %p255 = por %p253, %p254
      %p256 = scmp.ne.s32.totalorder %s244, %s245
      %p257 = scmp.eq.s32.totalorder %s34, 1
      %p258 = por %p256, %p257
      %p260 = scmp.ne.s32.totalorder %s245, %s259
      %p261 = scmp.eq.s32.totalorder %s34, 0
      %p262 = por %p260, %p261
      %s264 = sadd.s32 %s263, 1
      %p267 = scmp.eq.s32.totalorder %s28, 1
      %p268 = scmp.ne.s32.totalorder %s263, %s265
      %p269 = scmp.eq.s32.totalorder %s28, 0
      %p270 = por %p268, %p269
      %p271 = scmp.ne.s32.totalorder %s263, %s265
      %p272 = scmp.eq.s32.totalorder %s33, 1
      %p273 = por %p271, %p272
      %p274 = scmp.ne.s32.totalorder %s265, %s266
      %p275 = scmp.eq.s32.totalorder %s33, 0
      %p276 = por %p274, %p275
      %p277 = scmp.ne.s32.totalorder %s265, %s266
      %p278 = scmp.eq.s32.totalorder %s34, 1
      %p279 = por %p277, %p278
      %p281 = scmp.ne.s32.totalorder %s266, %s280
      %p282 = scmp.eq.s32.totalorder %s34, 0
      %p283 = por %p281, %p282
      %s285 = sadd.s32 %s284, 1
      %p288 = scmp.eq.s32.totalorder %s28, 1
      %p289 = scmp.ne.s32.totalorder %s284, %s286
      %p290 = scmp.eq.s32.totalorder %s28, 0
      %p291 = por %p289, %p290
      %p292 = scmp.ne.s32.totalorder %s284, %s286
      %p293 = scmp.eq.s32.totalorder %s33, 1
      %p294 = por %p292, %p293
      %p295 = scmp.ne.s32.totalorder %s286, %s287
      %p296 = scmp.eq.s32.totalorder %s33, 0
      %p297 = por %p295, %p296
      %p298 = scmp.ne.s32.totalorder %s286, %s287
      %p299 = scmp.eq.s32.totalorder %s34, 1
      %p300 = por %p298, %p299
      %p302 = scmp.ne.s32.totalorder %s287, %s301
      %p303 = scmp.eq.s32.totalorder %s34, 0
      %p304 = por %p302, %p303
      %s305 = ssub.s32 %s35, %s54
      %p306 = scmp.eq.s32.totalorder %s305, 0
      %s308 = sadd.s32 %s307, 1
      %s309 = scalar_select %p306, %s307, %s308
      %p312 = pneg %p306
      %p313 = scmp.eq.s32.totalorder %s28, 1
      %p314 = por %p312, %p313
      %p315 = scmp.ne.s32.totalorder %s307, %s310
      %p316 = scmp.eq.s32.totalorder %s28, 0
      %p317 = por %p315, %p316
      %p318 = scmp.ne.s32.totalorder %s307, %s310
      %p319 = scmp.eq.s32.totalorder %s33, 1
      %p320 = por %p318, %p319
      %p321 = scmp.ne.s32.totalorder %s310, %s311
      %p322 = scmp.eq.s32.totalorder %s33, 0
      %p323 = por %p321, %p322
      %p324 = scmp.ne.s32.totalorder %s310, %s311
      %p325 = scmp.eq.s32.totalorder %s34, 1
      %p326 = por %p324, %p325
      %p328 = scmp.ne.s32.totalorder %s311, %s327
      %p329 = scmp.eq.s32.totalorder %s34, 0
      %p330 = por %p328, %p329
      %p331 = scmp.le.s32.totalorder 1, %s28
      %p332 = scmp.lt.s32.totalorder %s28, 3
      %p333 = pnand %p331, %p332
      %p334 = pneg %p333
      // Predicated region
      $region9: #{tpu_custom_call.1} parent=5 // pred_check
        _
      $region10: #{tpu_custom_call.1} parent=5 // pred_check_branch
        %336 = sbr.rel (%p333) target = $region12
      $region11: #{tpu_custom_call.1} parent=5 // pred_region
        %s337 = ssub.s32 %s28, 1
        // Predicated region
        $region13: #{tpu_custom_call.1} parent=11 // pred_check
          %p338 = pneg %p150
        $region14: #{tpu_custom_call.1} parent=11 // pred_check_branch
          %340 = sbr.rel (%p338) target = $region16
        $region15: #{tpu_custom_call.1} parent=11 // pred_region
          %s342 = ssub.s32 512, 512
          %343 = vsyncadd [#allocation12], %s342
          %s344 = sshll.u32 [#allocation11], 4
          %s345 = int_to_ptr.vmem [resolvable:$true] %s344
          %350 = dma.hbm_to_vmem [thread:$0]  %s3, 512, %s345, [#allocation12], 128, 128, 8
        $region16: #{tpu_custom_call.1} parent=11 // pred_fallthru
          _
        // Predicated region
        $region17: #{tpu_custom_call.1} parent=11 // pred_check
          %p351 = pneg %p171
        $region18: #{tpu_custom_call.1} parent=11 // pred_check_branch
          %353 = sbr.rel (%p351) target = $region20
        $region19: #{tpu_custom_call.1} parent=11 // pred_region
          _
        $region20: #{tpu_custom_call.1} parent=11 // pred_fallthru
          _
        // Predicated region
        $region21: #{tpu_custom_call.1} parent=11 // pred_check
          %p354 = pneg %p192
        $region22: #{tpu_custom_call.1} parent=11 // pred_check_branch
          %356 = sbr.rel (%p354) target = $region24
        $region23: #{tpu_custom_call.1} parent=11 // pred_region
          %s358 = ssub.s32 512, 512
          %359 = vsyncadd [#allocation12], %s358
          %s360 = sshll.u32 [#allocation13], 4
          %s361 = int_to_ptr.vmem [resolvable:$true] %s360
          %366 = dma.hbm_to_vmem [thread:$0]  %s5, 512, %s361, [#allocation12], 128, 128, 8
        $region24: #{tpu_custom_call.1} parent=11 // pred_fallthru
          _
        // Predicated region
        $region25: #{tpu_custom_call.1} parent=11 // pred_check
          %p367 = pneg %p213
        $region26: #{tpu_custom_call.1} parent=11 // pred_check_branch
          %369 = sbr.rel (%p367) target = $region28
        $region27: #{tpu_custom_call.1} parent=11 // pred_region
          _
        $region28: #{tpu_custom_call.1} parent=11 // pred_fallthru
          _
        // Predicated region
        $region29: #{tpu_custom_call.1} parent=11 // pred_check
          %p370 = pneg %p234
        $region30: #{tpu_custom_call.1} parent=11 // pred_check_branch
          %372 = sbr.rel (%p370) target = $region32
        $region31: #{tpu_custom_call.1} parent=11 // pred_region
          %s374 = ssub.s32 512, 512
          %375 = vsyncadd [#allocation15], %s374
          %s376 = sshll.u32 [#allocation14], 4
          %s377 = int_to_ptr.vmem [resolvable:$true] %s376
          %382 = dma.hbm_to_vmem [thread:$0]  %s7, 512, %s377, [#allocation15], 128, 128, 8
        $region32: #{tpu_custom_call.1} parent=11 // pred_fallthru
          _
        // Predicated region
        $region33: #{tpu_custom_call.1} parent=11 // pred_check
          %p383 = pneg %p255
        $region34: #{tpu_custom_call.1} parent=11 // pred_check_branch
          %385 = sbr.rel (%p383) target = $region36
        $region35: #{tpu_custom_call.1} parent=11 // pred_region
          %s387 = ssub.s32 16, 16
          %388 = vsyncadd [#allocation15], %s387
          %s390 = sshll.u32 [#allocation16], 4
          %s391 = int_to_ptr.vmem [resolvable:$true] %s390
          %393 = dma.hbm_to_vmem [thread:$0]  %s8, 16, %s391, [#allocation15]
        $region36: #{tpu_custom_call.1} parent=11 // pred_fallthru
          _
        // Predicated region
        $region37: #{tpu_custom_call.1} parent=11 // pred_check
          %p394 = pneg %p276
        $region38: #{tpu_custom_call.1} parent=11 // pred_check_branch
          %396 = sbr.rel (%p394) target = $region40
        $region39: #{tpu_custom_call.1} parent=11 // pred_region
          _
        $region40: #{tpu_custom_call.1} parent=11 // pred_fallthru
          _
        // Predicated region
        $region41: #{tpu_custom_call.1} parent=11 // pred_check
          %p397 = pneg %p297
        $region42: #{tpu_custom_call.1} parent=11 // pred_check_branch
          %399 = sbr.rel (%p397) target = $region44
        $region43: #{tpu_custom_call.1} parent=11 // pred_region
          _
        $region44: #{tpu_custom_call.1} parent=11 // pred_fallthru
          _
      $region12: #{tpu_custom_call.1} parent=5 // pred_fallthru
        _
      %p400 = scmp.lt.s32.totalorder %s28, 2
      // Predicated region
      $region45: #{tpu_custom_call.1} parent=5 // pred_check
        %p401 = pneg %p400
      $region46: #{tpu_custom_call.1} parent=5 // pred_check_branch
        %403 = sbr.rel (%p401) target = $region48
      $region47: #{tpu_custom_call.1} parent=5 // pred_region
        // Predicated region
        $region49: #{tpu_custom_call.1} parent=47 // pred_check
          %p404 = pneg %p67
        $region50: #{tpu_custom_call.1} parent=47 // pred_check_branch
          %406 = sbr.rel (%p404) target = $region52
        $region51: #{tpu_custom_call.1} parent=47 // pred_region
          %s407 = sand.u32 %s57, 1
          %s408 = scalar_lea.sflag [#allocation6], %s407
          %s409 = sand.u32 %s57, 1
          %s410 = smul.addr %s409, 8
          %s411 = scalar_lea.vmem [#allocation5], %s410
          %s413 = ssub.s32 128, 128
          %414 = vsyncadd %s408, %s413
          %s415 = smul.addr %s35, 128
          %s416 = scalar_lea.hbm %s0, %s415
          %s418 = sshll.u32 %s411, 4
          %s419 = int_to_ptr.vmem [resolvable:$true] %s418
          %421 = dma.hbm_to_vmem [thread:$0]  %s416, 128, %s419, %s408
        $region52: #{tpu_custom_call.1} parent=47 // pred_fallthru
          _
        // Predicated region
        $region53: #{tpu_custom_call.1} parent=47 // pred_check
          %p422 = pneg %p95
        $region54: #{tpu_custom_call.1} parent=47 // pred_check_branch
          %424 = sbr.rel (%p422) target = $region56
        $region55: #{tpu_custom_call.1} parent=47 // pred_region
          %s425 = sand.u32 %s28, 1
          %s426 = scalar_lea.sflag [#allocation9], %s425
          %s427 = sand.u32 %s85, 1
          %s428 = smul.addr %s427, 8
          %s429 = scalar_lea.vmem [#allocation8], %s428
          %s431 = ssub.s32 128, 128
          %432 = vsyncadd %s426, %s431
          %s433 = sadd.s32 %s36, %s35
          %s434 = smul.addr %s433, 128
          %s435 = scalar_lea.hbm %s1, %s434
          %s437 = sshll.u32 %s429, 4
          %s438 = int_to_ptr.vmem [resolvable:$true] %s437
          %440 = dma.hbm_to_vmem [thread:$0]  %s435, 128, %s438, %s426
        $region56: #{tpu_custom_call.1} parent=47 // pred_fallthru
          _
        // Predicated region
        $region57: #{tpu_custom_call.1} parent=47 // pred_check
          %p441 = pneg %p123
        $region58: #{tpu_custom_call.1} parent=47 // pred_check_branch
          %443 = sbr.rel (%p441) target = $region60
        $region59: #{tpu_custom_call.1} parent=47 // pred_region
          %s444 = sand.u32 %s28, 1
          %s445 = scalar_lea.sflag [#allocation9], %s444
          %s446 = sand.u32 %s113, 1
          %s447 = smul.addr %s446, 8
          %s448 = scalar_lea.vmem [#allocation10], %s447
          %s450 = ssub.s32 128, 128
          %451 = vsyncadd %s445, %s450
          %s452 = sadd.s32 %s36, %s35
          %s453 = smul.addr %s452, 128
          %s454 = scalar_lea.hbm %s2, %s453
          %s456 = sshll.u32 %s448, 4
          %s457 = int_to_ptr.vmem [resolvable:$true] %s456
          %459 = dma.hbm_to_vmem [thread:$0]  %s454, 128, %s457, %s445
        $region60: #{tpu_custom_call.1} parent=47 // pred_fallthru
          _
      $region48: #{tpu_custom_call.1} parent=5 // pred_fallthru
        _
      %p460 = scmp.le.s32.totalorder 1, %s28
      %p461 = scmp.lt.s32.totalorder %s28, 3
      %p462 = pnand %p460, %p461
      %p463 = pneg %p462
      // Predicated region
      $region61: #{tpu_custom_call.1} parent=5 // pred_check
        _
      $region62: #{tpu_custom_call.1} parent=5 // pred_check_branch
        %465 = sbr.rel (%p462) target = $region64
      $region63: #{tpu_custom_call.1} parent=5 // pred_region
        %s466 = ssub.s32 %s28, 1
        %s467 = sand.u32 %s60, 1
        %s468 = scalar_lea.sflag [#allocation6], %s467
        %s469 = sand.u32 %s60, 1
        %s470 = smul.addr %s469, 8
        %s471 = scalar_lea.vmem [#allocation5], %s470
        // Predicated region
        $region65: #{tpu_custom_call.1} parent=63 // pred_check
          %p472 = pneg %p73
        $region66: #{tpu_custom_call.1} parent=63 // pred_check_branch
          %474 = sbr.rel (%p472) target = $region68
        $region67: #{tpu_custom_call.1} parent=63 // pred_region
          %475 = dma.done %s468, 128
        $region68: #{tpu_custom_call.1} parent=63 // pred_fallthru
          _
        %s476 = sand.u32 %s33, 1
        %s477 = scalar_lea.sflag [#allocation9], %s476
        %s478 = sand.u32 %s88, 1
        %s479 = smul.addr %s478, 8
        %s480 = scalar_lea.vmem [#allocation8], %s479
        // Predicated region
        $region69: #{tpu_custom_call.1} parent=63 // pred_check
          %p481 = pneg %p101
        $region70: #{tpu_custom_call.1} parent=63 // pred_check_branch
          %483 = sbr.rel (%p481) target = $region72
        $region71: #{tpu_custom_call.1} parent=63 // pred_region
          %484 = dma.done %s477, 128
        $region72: #{tpu_custom_call.1} parent=63 // pred_fallthru
          _
        %s485 = sand.u32 %s33, 1
        %s486 = scalar_lea.sflag [#allocation9], %s485
        %s487 = sand.u32 %s116, 1
        %s488 = smul.addr %s487, 8
        %s489 = scalar_lea.vmem [#allocation10], %s488
        // Predicated region
        $region73: #{tpu_custom_call.1} parent=63 // pred_check
          %p490 = pneg %p129
        $region74: #{tpu_custom_call.1} parent=63 // pred_check_branch
          %492 = sbr.rel (%p490) target = $region76
        $region75: #{tpu_custom_call.1} parent=63 // pred_region
          %493 = dma.done %s486, 128
        $region76: #{tpu_custom_call.1} parent=63 // pred_fallthru
          _
        // Predicated region
        $region77: #{tpu_custom_call.1} parent=63 // pred_check
          %p494 = pneg %p150
        $region78: #{tpu_custom_call.1} parent=63 // pred_check_branch
          %496 = sbr.rel (%p494) target = $region80
        $region79: #{tpu_custom_call.1} parent=63 // pred_region
          %497 = dma.done [#allocation12], 512
        $region80: #{tpu_custom_call.1} parent=63 // pred_fallthru
          _
        // Predicated region
        $region81: #{tpu_custom_call.1} parent=63 // pred_check
          %p498 = pneg %p192
        $region82: #{tpu_custom_call.1} parent=63 // pred_check_branch
          %500 = sbr.rel (%p498) target = $region84
        $region83: #{tpu_custom_call.1} parent=63 // pred_region
          %501 = dma.done [#allocation12], 512
        $region84: #{tpu_custom_call.1} parent=63 // pred_fallthru
          _
        // Predicated region
        $region85: #{tpu_custom_call.1} parent=63 // pred_check
          %p502 = pneg %p234
        $region86: #{tpu_custom_call.1} parent=63 // pred_check_branch
          %504 = sbr.rel (%p502) target = $region88
        $region87: #{tpu_custom_call.1} parent=63 // pred_region
          %505 = dma.done [#allocation15], 512
        $region88: #{tpu_custom_call.1} parent=63 // pred_fallthru
          _
        // Predicated region
        $region89: #{tpu_custom_call.1} parent=63 // pred_check
          %p506 = pneg %p255
        $region90: #{tpu_custom_call.1} parent=63 // pred_check_branch
          %508 = sbr.rel (%p506) target = $region92
        $region91: #{tpu_custom_call.1} parent=63 // pred_region
          %509 = dma.done [#allocation15], 16
        $region92: #{tpu_custom_call.1} parent=63 // pred_fallthru
          _
        %s510 = sand.u32 %s60, 1
        %s511 = scalar_lea.sflag [#allocation6], %s510
        %s512 = sand.u32 %s60, 1
        %s513 = smul.addr %s512, 8
        %s514 = scalar_lea.vmem [#allocation5], %s513
        %p515 = pneg %p73
        %p516 = pneg %p70
        %s517 = sand.u32 %s33, 1
        %s518 = scalar_lea.sflag [#allocation9], %s517
        %s519 = sand.u32 %s88, 1
        %s520 = smul.addr %s519, 8
        %s521 = scalar_lea.vmem [#allocation8], %s520
        %p522 = pneg %p101
        %p523 = pneg %p98
        %s524 = sand.u32 %s33, 1
        %s525 = scalar_lea.sflag [#allocation9], %s524
        %s526 = sand.u32 %s116, 1
        %s527 = smul.addr %s526, 8
        %s528 = scalar_lea.vmem [#allocation10], %s527
        %p529 = pneg %p129
        %p530 = pneg %p126
        %p531 = pneg %p150
        %p532 = pneg %p147
        %p533 = pneg %p171
        %p534 = pneg %p168
        %p535 = pneg %p192
        %p536 = pneg %p189
        %p537 = pneg %p213
        %p538 = pneg %p210
        %p539 = pneg %p234
        %p540 = pneg %p231
        %p541 = pneg %p255
        %p542 = pneg %p252
        %p543 = pneg %p276
        %p544 = pneg %p273
        %p545 = pneg %p297
        %p546 = pneg %p294
        %p547 = pneg %p323
        %p548 = pneg %p320
        %s549 = sand.u32 %s310, 1
        %s550 = scalar_lea.sflag [#allocation7], %s549
        %s551 = sand.u32 %s310, 1
        %s552 = smul.addr %s551, 8
        %s553 = scalar_lea.vmem [#allocation17], %s552
        %p554 = scmp.eq.s32.totalorder %s39, 0
        // Predicated region
        $region93: #{tpu_custom_call.1} parent=63 // pred_check
          %p555 = pneg %p554
        $region94: #{tpu_custom_call.1} parent=63 // pred_check_branch
          %557 = sbr.rel (%p555) target = $region96
        $region95: #{tpu_custom_call.1} parent=63 // pred_region
          %v558 = vld [vmem:[%s471] sm:$0xff]
          %s559 = smul.u32 %s40, 32
          %s560 = scalar_lea.vmem [#allocation11], %s559
          %v561 = vld [vmem:[%s560] sm:$0xff]
          %v562 = vld [vmem:[%s560 + $0x8] sm:$0xff]
          %v563 = vld [vmem:[%s560 + $0x10] sm:$0xff]
          %v564 = vld [vmem:[%s560 + $0x18] sm:$0xff]
          %s565 = scalar_lea.vmem %s4, %s40
          %v566 = vld [vmem:[%s565] sm:$0x1]
          %v568 = vlaneseq
          %v569 = vshrl.u32 %v568, 7
          %v570 = vsub.s32 0, %v569
          %v571 = vrot.slane %v566, %v570
          %vm573 = vcmask 261120
          %v575 = vsel %vm573, %v558, 0
          %577 = vmatprep.subr.mxu0 0.0
          %578 = vmatpush1.msra.mxu0 %v561
          %579 = vmatprep.subr.mxu0 0.0
          %580 = vmatpush1.msra.mxu0 %v562
          %581 = vmatprep.subr.mxu0 0.0
          %582 = vmatpush1.msra.mxu0 %v563
          %583 = vmatprep.subr.mxu0 0.0
          %584 = vmatpush1.msra.mxu0 %v564
          %585 = vmatprep.subr.mxu0 0.0
          %586 = vmatpush1.msra.mxu0 0.0
          %587 = vmatprep.subr.mxu0 0.0
          %588 = vmatpush1.msra.mxu0 0.0
          %589 = vmatprep.subr.mxu0 0.0
          %590 = vmatpush1.msra.mxu0 0.0
          %591 = vmatprep.subr.mxu0 0.0
          %592 = vmatpush1.msra.mxu0 0.0
          %593 = vmatprep.subr.mxu0 0.0
          %594 = vmatpush1.msra.mxu0 0.0
          %595 = vmatprep.subr.mxu0 0.0
          %596 = vmatpush1.msra.mxu0 0.0
          %597 = vmatprep.subr.mxu0 0.0
          %598 = vmatpush1.msra.mxu0 0.0
          %599 = vmatprep.subr.mxu0 0.0
          %600 = vmatpush1.msra.mxu0 0.0
          %601 = vmatprep.subr.mxu0 0.0
          %602 = vmatpush1.msra.mxu0 0.0
          %603 = vmatprep.subr.mxu0 0.0
          %604 = vmatpush1.msra.mxu0 0.0
          %605 = vmatprep.subr.mxu0 0.0
          %606 = vmatpush1.msra.mxu0 0.0
          %607 = vmatprep.subr.mxu0 0.0
          %608 = vmatpush1.msra.mxu0 0.0
          %609 = vmatprep.subr.mxu0 0.0
          %610 = vmatpush1.msra.mxu0 0.0
          %611 = vmatprep.subr.mxu0 0.0
          %612 = vmatpush1.msra.mxu0 0.0
          %613 = vmatprep.subr.mxu0 0.0
          %614 = vmatpush1.msra.mxu0 0.0
          %615 = vmatprep.subr.mxu0 0.0
          %616 = vmatpush1.msra.mxu0 0.0
          %617 = vmatprep.subr.mxu0 0.0
          %618 = vmatpush1.msra.mxu0 0.0
          %619 = vmatprep.subr.mxu0 0.0
          %620 = vmatpush1.msra.mxu0 0.0
          %621 = vmatprep.subr.mxu0 0.0
          %622 = vmatpush1.msra.mxu0 0.0
          %623 = vmatprep.subr.mxu0 0.0
          %624 = vmatpush1.msra.mxu0 0.0
          %625 = vmatprep.subr.mxu0 0.0
          %626 = vmatpush1.msra.mxu0 0.0
          %627 = vmatprep.subr.mxu0 0.0
          %628 = vmatpush1.msra.mxu0 0.0
          %629 = vmatprep.subr.mxu0 0.0
          %630 = vmatpush1.msra.mxu0 0.0
          %631 = vmatprep.subr.mxu0 0.0
          %632 = vmatpush1.msra.mxu0 0.0
          %633 = vmatprep.subr.mxu0 0.0
          %634 = vmatpush1.msra.mxu0 0.0
          %635 = vmatprep.subr.mxu0 0.0
          %636 = vmatpush1.msra.mxu0 0.0
          %637 = vmatprep.subr.mxu0 0.0
          %638 = vmatpush1.msra.mxu0 0.0
          %639 = vmatprep.subr.mxu0 0.0
          %640 = vmatpush1.msra.mxu0 0.0
          %641 = vmatprep.mubr.f32.mxu0 0.0
          %642 = vmatmul.mubr.f32.gmra.mrb[0].mxu0 %v575
          %v643 = vpop.f32.mrb[0].mxu0
          %v644 = vadd.f32 %v571, %v643
          %v645 = vpop.f32.mrb[0].mxu0
          %646 = vdwg.mxu0
          %s647 = smul.u32 %s40, 8
          %s648 = scalar_lea.vmem [#allocation2], %s647
          %649 = vst.msk [vmem:[%s648] sm:$0xff] %vm573, %v644
          %s650 = scalar_lea.vmem [#allocation3], %s647
          %651 = vst.msk [vmem:[%s650] sm:$0xff] %vm573, 0.0
        $region96: #{tpu_custom_call.1} parent=63 // pred_fallthru
          _
        %v652 = vld [vmem:[%s480] sm:$0xff]
        %s653 = smul.u32 %s40, 32
        %s654 = scalar_lea.vmem [#allocation13], %s653
        %v655 = vld [vmem:[%s654] sm:$0xff]
        %v656 = vld [vmem:[%s654 + $0x8] sm:$0xff]
        %v657 = vld [vmem:[%s654 + $0x10] sm:$0xff]
        %v658 = vld [vmem:[%s654 + $0x18] sm:$0xff]
        %s659 = scalar_lea.vmem %s6, %s40
        %v660 = vld [vmem:[%s659] sm:$0x1]
        %v662 = vlaneseq
        %v663 = vshrl.u32 %v662, 7
        %v664 = vsub.s32 0, %v663
        %v665 = vrot.slane %v660, %v664
        %vm667 = vcmask 261120
        %v669 = vsel %vm667, %v652, 0
        %671 = vmatprep.subr.mxu0 0.0
        %672 = vmatpush1.msra.mxu0 %v655
        %673 = vmatprep.subr.mxu0 0.0
        %674 = vmatpush1.msra.mxu0 %v656
        %675 = vmatprep.subr.mxu0 0.0
        %676 = vmatpush1.msra.mxu0 %v657
        %677 = vmatprep.subr.mxu0 0.0
        %678 = vmatpush1.msra.mxu0 %v658
        %679 = vmatprep.subr.mxu0 0.0
        %680 = vmatpush1.msra.mxu0 0.0
        %681 = vmatprep.subr.mxu0 0.0
        %682 = vmatpush1.msra.mxu0 0.0
        %683 = vmatprep.subr.mxu0 0.0
        %684 = vmatpush1.msra.mxu0 0.0
        %685 = vmatprep.subr.mxu0 0.0
        %686 = vmatpush1.msra.mxu0 0.0
        %687 = vmatprep.subr.mxu0 0.0
        %688 = vmatpush1.msra.mxu0 0.0
        %689 = vmatprep.subr.mxu0 0.0
        %690 = vmatpush1.msra.mxu0 0.0
        %691 = vmatprep.subr.mxu0 0.0
        %692 = vmatpush1.msra.mxu0 0.0
        %693 = vmatprep.subr.mxu0 0.0
        %694 = vmatpush1.msra.mxu0 0.0
        %695 = vmatprep.subr.mxu0 0.0
        %696 = vmatpush1.msra.mxu0 0.0
        %697 = vmatprep.subr.mxu0 0.0
        %698 = vmatpush1.msra.mxu0 0.0
        %699 = vmatprep.subr.mxu0 0.0
        %700 = vmatpush1.msra.mxu0 0.0
        %701 = vmatprep.subr.mxu0 0.0
        %702 = vmatpush1.msra.mxu0 0.0
        %703 = vmatprep.subr.mxu0 0.0
        %704 = vmatpush1.msra.mxu0 0.0
        %705 = vmatprep.subr.mxu0 0.0
        %706 = vmatpush1.msra.mxu0 0.0
        %707 = vmatprep.subr.mxu0 0.0
        %708 = vmatpush1.msra.mxu0 0.0
        %709 = vmatprep.subr.mxu0 0.0
        %710 = vmatpush1.msra.mxu0 0.0
        %711 = vmatprep.subr.mxu0 0.0
        %712 = vmatpush1.msra.mxu0 0.0
        %713 = vmatprep.subr.mxu0 0.0
        %714 = vmatpush1.msra.mxu0 0.0
        %715 = vmatprep.subr.mxu0 0.0
        %716 = vmatpush1.msra.mxu0 0.0
        %717 = vmatprep.subr.mxu0 0.0
        %718 = vmatpush1.msra.mxu0 0.0
        %719 = vmatprep.subr.mxu0 0.0
        %720 = vmatpush1.msra.mxu0 0.0
        %721 = vmatprep.subr.mxu0 0.0
        %722 = vmatpush1.msra.mxu0 0.0
        %723 = vmatprep.subr.mxu0 0.0
        %724 = vmatpush1.msra.mxu0 0.0
        %725 = vmatprep.subr.mxu0 0.0
        %726 = vmatpush1.msra.mxu0 0.0
        %727 = vmatprep.subr.mxu0 0.0
        %728 = vmatpush1.msra.mxu0 0.0
        %729 = vmatprep.subr.mxu0 0.0
        %730 = vmatpush1.msra.mxu0 0.0
        %731 = vmatprep.subr.mxu0 0.0
        %732 = vmatpush1.msra.mxu0 0.0
        %733 = vmatprep.subr.mxu0 0.0
        %734 = vmatpush1.msra.mxu0 0.0
        %735 = vmatprep.mubr.f32.mxu0 0.0
        %736 = vmatmul.mubr.f32.gmra.mrb[0].mxu0 %v669
        %v737 = vpop.f32.mrb[0].mxu0
        %v738 = vadd.f32 %v665, %v737
        %v739 = vpop.f32.mrb[0].mxu0
        %740 = vdwg.mxu0
        %v741 = vld [vmem:[%s489] sm:$0xff]
        %s742 = scalar_lea.vmem [#allocation14], %s653
        %v743 = vld [vmem:[%s742] sm:$0xff]
        %v744 = vld [vmem:[%s742 + $0x8] sm:$0xff]
        %v745 = vld [vmem:[%s742 + $0x10] sm:$0xff]
        %v746 = vld [vmem:[%s742 + $0x18] sm:$0xff]
        %s747 = scalar_lea.vmem [#allocation16], %s40
        %v748 = vld [vmem:[%s747] sm:$0x1]
        %v750 = vlaneseq
        %v751 = vshrl.u32 %v750, 7
        %v752 = vsub.s32 0, %v751
        %v753 = vrot.slane %v748, %v752
        %v756 = vsel %vm667, %v741, 0
        %758 = vmatprep.subr.mxu0 0.0
        %759 = vmatpush1.msra.mxu0 %v743
        %760 = vmatprep.subr.mxu0 0.0
        %761 = vmatpush1.msra.mxu0 %v744
        %762 = vmatprep.subr.mxu0 0.0
        %763 = vmatpush1.msra.mxu0 %v745
        %764 = vmatprep.subr.mxu0 0.0
        %765 = vmatpush1.msra.mxu0 %v746
        %766 = vmatprep.subr.mxu0 0.0
        %767 = vmatpush1.msra.mxu0 0.0
        %768 = vmatprep.subr.mxu0 0.0
        %769 = vmatpush1.msra.mxu0 0.0
        %770 = vmatprep.subr.mxu0 0.0
        %771 = vmatpush1.msra.mxu0 0.0
        %772 = vmatprep.subr.mxu0 0.0
        %773 = vmatpush1.msra.mxu0 0.0
        %774 = vmatprep.subr.mxu0 0.0
        %775 = vmatpush1.msra.mxu0 0.0
        %776 = vmatprep.subr.mxu0 0.0
        %777 = vmatpush1.msra.mxu0 0.0
        %778 = vmatprep.subr.mxu0 0.0
        %779 = vmatpush1.msra.mxu0 0.0
        %780 = vmatprep.subr.mxu0 0.0
        %781 = vmatpush1.msra.mxu0 0.0
        %782 = vmatprep.subr.mxu0 0.0
        %783 = vmatpush1.msra.mxu0 0.0
        %784 = vmatprep.subr.mxu0 0.0
        %785 = vmatpush1.msra.mxu0 0.0
        %786 = vmatprep.subr.mxu0 0.0
        %787 = vmatpush1.msra.mxu0 0.0
        %788 = vmatprep.subr.mxu0 0.0
        %789 = vmatpush1.msra.mxu0 0.0
        %790 = vmatprep.subr.mxu0 0.0
        %791 = vmatpush1.msra.mxu0 0.0
        %792 = vmatprep.subr.mxu0 0.0
        %793 = vmatpush1.msra.mxu0 0.0
        %794 = vmatprep.subr.mxu0 0.0
        %795 = vmatpush1.msra.mxu0 0.0
        %796 = vmatprep.subr.mxu0 0.0
        %797 = vmatpush1.msra.mxu0 0.0
        %798 = vmatprep.subr.mxu0 0.0
        %799 = vmatpush1.msra.mxu0 0.0
        %800 = vmatprep.subr.mxu0 0.0
        %801 = vmatpush1.msra.mxu0 0.0
        %802 = vmatprep.subr.mxu0 0.0
        %803 = vmatpush1.msra.mxu0 0.0
        %804 = vmatprep.subr.mxu0 0.0
        %805 = vmatpush1.msra.mxu0 0.0
        %806 = vmatprep.subr.mxu0 0.0
        %807 = vmatpush1.msra.mxu0 0.0
        %808 = vmatprep.subr.mxu0 0.0
        %809 = vmatpush1.msra.mxu0 0.0
        %810 = vmatprep.subr.mxu0 0.0
        %811 = vmatpush1.msra.mxu0 0.0
        %812 = vmatprep.subr.mxu0 0.0
        %813 = vmatpush1.msra.mxu0 0.0
        %814 = vmatprep.subr.mxu0 0.0
        %815 = vmatpush1.msra.mxu0 0.0
        %816 = vmatprep.subr.mxu0 0.0
        %817 = vmatpush1.msra.mxu0 0.0
        %818 = vmatprep.subr.mxu0 0.0
        %819 = vmatpush1.msra.mxu0 0.0
        %820 = vmatprep.subr.mxu0 0.0
        %821 = vmatpush1.msra.mxu0 0.0
        %822 = vmatprep.mubr.f32.mxu0 0.0
        %823 = vmatmul.mubr.f32.gmra.mrb[0].mxu0 %v756
        %v824 = vpop.f32.mrb[0].mxu0
        %v825 = vadd.f32 %v753, %v824
        %v826 = vpop.f32.mrb[0].mxu0
        %827 = vdwg.mxu0
        %s828 = smul.u32 %s40, 8
        %s829 = scalar_lea.vmem [#allocation2], %s828
        %v830 = vld [vmem:[%s829] sm:$0xff]
        %vm831 = vcmask 64512
        %v833 = vsel %vm831, %v830, 0
        %v836 = vsel %vm831, %v738, 0
        %838 = vmatprep.subr.mxu0 0.0
        %839 = vmatpush1.xpose.msra.mxu0 %v836
        %840 = vmatprep.subr.mxu0 0.0
        %841 = vmatpush1.xpose.msra.mxu0 0.0
        %842 = vmatprep.subr.mxu0 0.0
        %843 = vmatpush1.xpose.msra.mxu0 0.0
        %844 = vmatprep.subr.mxu0 0.0
        %845 = vmatpush1.xpose.msra.mxu0 0.0
        %846 = vmatprep.subr.mxu0 0.0
        %847 = vmatpush1.xpose.msra.mxu0 0.0
        %848 = vmatprep.subr.mxu0 0.0
        %849 = vmatpush1.xpose.msra.mxu0 0.0
        %850 = vmatprep.subr.mxu0 0.0
        %851 = vmatpush1.xpose.msra.mxu0 0.0
        %852 = vmatprep.subr.mxu0 0.0
        %853 = vmatpush1.xpose.msra.mxu0 0.0
        %854 = vmatprep.subr.mxu0 0.0
        %855 = vmatpush1.xpose.msra.mxu0 0.0
        %856 = vmatprep.subr.mxu0 0.0
        %857 = vmatpush1.xpose.msra.mxu0 0.0
        %858 = vmatprep.subr.mxu0 0.0
        %859 = vmatpush1.xpose.msra.mxu0 0.0
        %860 = vmatprep.subr.mxu0 0.0
        %861 = vmatpush1.xpose.msra.mxu0 0.0
        %862 = vmatprep.subr.mxu0 0.0
        %863 = vmatpush1.xpose.msra.mxu0 0.0
        %864 = vmatprep.subr.mxu0 0.0
        %865 = vmatpush1.xpose.msra.mxu0 0.0
        %866 = vmatprep.subr.mxu0 0.0
        %867 = vmatpush1.xpose.msra.mxu0 0.0
        %868 = vmatprep.subr.mxu0 0.0
        %869 = vmatpush1.xpose.msra.mxu0 0.0
        %870 = vmatprep.subr.mxu0 0.0
        %871 = vmatpush1.xpose.msra.mxu0 0.0
        %872 = vmatprep.subr.mxu0 0.0
        %873 = vmatpush1.xpose.msra.mxu0 0.0
        %874 = vmatprep.subr.mxu0 0.0
        %875 = vmatpush1.xpose.msra.mxu0 0.0
        %876 = vmatprep.subr.mxu0 0.0
        %877 = vmatpush1.xpose.msra.mxu0 0.0
        %878 = vmatprep.subr.mxu0 0.0
        %879 = vmatpush1.xpose.msra.mxu0 0.0
        %880 = vmatprep.subr.mxu0 0.0
        %881 = vmatpush1.xpose.msra.mxu0 0.0
        %882 = vmatprep.subr.mxu0 0.0
        %883 = vmatpush1.xpose.msra.mxu0 0.0
        %884 = vmatprep.subr.mxu0 0.0
        %885 = vmatpush1.xpose.msra.mxu0 0.0
        %886 = vmatprep.subr.mxu0 0.0
        %887 = vmatpush1.xpose.msra.mxu0 0.0
        %888 = vmatprep.subr.mxu0 0.0
        %889 = vmatpush1.xpose.msra.mxu0 0.0
        %890 = vmatprep.subr.mxu0 0.0
        %891 = vmatpush1.xpose.msra.mxu0 0.0
        %892 = vmatprep.subr.mxu0 0.0
        %893 = vmatpush1.xpose.msra.mxu0 0.0
        %894 = vmatprep.subr.mxu0 0.0
        %895 = vmatpush1.xpose.msra.mxu0 0.0
        %896 = vmatprep.subr.mxu0 0.0
        %897 = vmatpush1.xpose.msra.mxu0 0.0
        %898 = vmatprep.subr.mxu0 0.0
        %899 = vmatpush1.xpose.msra.mxu0 0.0
        %900 = vmatprep.subr.mxu0 0.0
        %901 = vmatpush1.xpose.msra.mxu0 0.0
        %902 = vmatprep.mubr.f32.mxu0 0.0
        %903 = vmatmul.mubr.f32.gmra.mrb[0].mxu0 %v833
        %v904 = vpop.f32.mrb[0].mxu0
        %v905 = vadd.f32 0.0, %v904
        %v906 = vpop.f32.mrb[0].mxu0
        %907 = vdwg.mxu0
        %v908 = vmul.f32 %v905, 0.35355338
        %v909 = vsel %vm831, %v908, -inf
        %v910 = vrot.slane %v909, 4
        %v911 = vmax.f32 %v909, %v910
        %v912 = vrot.slane %v911, 2
        %v913 = vmax.f32 %v911, %v912
        %v914 = vrot.slane %v913, 1
        %v915 = vmax.f32 %v913, %v914
        %v916 = vsub.f32 %v908, %v915
        %v917 = vmul.f32 %v916, 1.442695
        %v918 = vpow.pop %v917
        %v919 = vsel %vm831, %v918, 0.0
        %v920 = vrot.slane %v919, 4
        %v921 = vadd.f32 %v919, %v920
        %v922 = vrot.slane %v921, 2
        %v923 = vadd.f32 %v921, %v922
        %v924 = vrot.slane %v923, 1
        %v925 = vadd.f32 %v923, %v924
        %v926 = vrcp.pop %v925
        %v927 = vmul.f32 %v918, %v926
        %v929 = vsel %vm831, %v927, 0
        %931 = vmatprep.subr.mxu0 0.0
        %932 = vmatpush1.msra.mxu0 %v825
        %933 = vmatprep.subr.mxu0 0.0
        %934 = vmatpush1.msra.mxu0 0.0
        %935 = vmatprep.subr.mxu0 0.0
        %936 = vmatpush1.msra.mxu0 0.0
        %937 = vmatprep.subr.mxu0 0.0
        %938 = vmatpush1.msra.mxu0 0.0
        %939 = vmatprep.subr.mxu0 0.0
        %940 = vmatpush1.msra.mxu0 0.0
        %941 = vmatprep.subr.mxu0 0.0
        %942 = vmatpush1.msra.mxu0 0.0
        %943 = vmatprep.subr.mxu0 0.0
        %944 = vmatpush1.msra.mxu0 0.0
        %945 = vmatprep.subr.mxu0 0.0
        %946 = vmatpush1.msra.mxu0 0.0
        %947 = vmatprep.subr.mxu0 0.0
        %948 = vmatpush1.msra.mxu0 0.0
        %949 = vmatprep.subr.mxu0 0.0
        %950 = vmatpush1.msra.mxu0 0.0
        %951 = vmatprep.subr.mxu0 0.0
        %952 = vmatpush1.msra.mxu0 0.0
        %953 = vmatprep.subr.mxu0 0.0
        %954 = vmatpush1.msra.mxu0 0.0
        %955 = vmatprep.subr.mxu0 0.0
        %956 = vmatpush1.msra.mxu0 0.0
        %957 = vmatprep.subr.mxu0 0.0
        %958 = vmatpush1.msra.mxu0 0.0
        %959 = vmatprep.subr.mxu0 0.0
        %960 = vmatpush1.msra.mxu0 0.0
        %961 = vmatprep.subr.mxu0 0.0
        %962 = vmatpush1.msra.mxu0 0.0
        %963 = vmatprep.subr.mxu0 0.0
        %964 = vmatpush1.msra.mxu0 0.0
        %965 = vmatprep.subr.mxu0 0.0
        %966 = vmatpush1.msra.mxu0 0.0
        %967 = vmatprep.subr.mxu0 0.0
        %968 = vmatpush1.msra.mxu0 0.0
        %969 = vmatprep.subr.mxu0 0.0
        %970 = vmatpush1.msra.mxu0 0.0
        %971 = vmatprep.subr.mxu0 0.0
        %972 = vmatpush1.msra.mxu0 0.0
        %973 = vmatprep.subr.mxu0 0.0
        %974 = vmatpush1.msra.mxu0 0.0
        %975 = vmatprep.subr.mxu0 0.0
        %976 = vmatpush1.msra.mxu0 0.0
        %977 = vmatprep.subr.mxu0 0.0
        %978 = vmatpush1.msra.mxu0 0.0
        %979 = vmatprep.subr.mxu0 0.0
        %980 = vmatpush1.msra.mxu0 0.0
        %981 = vmatprep.subr.mxu0 0.0
        %982 = vmatpush1.msra.mxu0 0.0
        %983 = vmatprep.subr.mxu0 0.0
        %984 = vmatpush1.msra.mxu0 0.0
        %985 = vmatprep.subr.mxu0 0.0
        %986 = vmatpush1.msra.mxu0 0.0
        %987 = vmatprep.subr.mxu0 0.0
        %988 = vmatpush1.msra.mxu0 0.0
        %989 = vmatprep.subr.mxu0 0.0
        %990 = vmatpush1.msra.mxu0 0.0
        %991 = vmatprep.subr.mxu0 0.0
        %992 = vmatpush1.msra.mxu0 0.0
        %993 = vmatprep.subr.mxu0 0.0
        %994 = vmatpush1.msra.mxu0 0.0
        %995 = vmatprep.mubr.f32.mxu0 0.0
        %996 = vmatmul.mubr.f32.gmra.mrb[0].mxu0 %v929
        %v997 = vpop.f32.mrb[0].mxu0
        %v998 = vadd.f32 0.0, %v997
        %v999 = vpop.f32.mrb[0].mxu0
        %1000 = vdwg.mxu0
        %1001 = vrot.lane.b32.xlu0 %v830, 120
        %v1002 = vpop.permute.xlu0 %1001
        %1003 = vrot.lane.b32.xlu0 %v738, 120
        %v1004 = vpop.permute.xlu0 %1003
        %v1005 = vsel %vm831, %v1002, 0
        %v1007 = vsel %vm831, %v1004, 0
        %1009 = vmatprep.subr.mxu0 0.0
        %1010 = vmatpush1.xpose.msra.mxu0 %v1007
        %1011 = vmatprep.subr.mxu0 0.0
        %1012 = vmatpush1.xpose.msra.mxu0 0.0
        %1013 = vmatprep.subr.mxu0 0.0
        %1014 = vmatpush1.xpose.msra.mxu0 0.0
        %1015 = vmatprep.subr.mxu0 0.0
        %1016 = vmatpush1.xpose.msra.mxu0 0.0
        %1017 = vmatprep.subr.mxu0 0.0
        %1018 = vmatpush1.xpose.msra.mxu0 0.0
        %1019 = vmatprep.subr.mxu0 0.0
        %1020 = vmatpush1.xpose.msra.mxu0 0.0
        %1021 = vmatprep.subr.mxu0 0.0
        %1022 = vmatpush1.xpose.msra.mxu0 0.0
        %1023 = vmatprep.subr.mxu0 0.0
        %1024 = vmatpush1.xpose.msra.mxu0 0.0
        %1025 = vmatprep.subr.mxu0 0.0
        %1026 = vmatpush1.xpose.msra.mxu0 0.0
        %1027 = vmatprep.subr.mxu0 0.0
        %1028 = vmatpush1.xpose.msra.mxu0 0.0
        %1029 = vmatprep.subr.mxu0 0.0
        %1030 = vmatpush1.xpose.msra.mxu0 0.0
        %1031 = vmatprep.subr.mxu0 0.0
        %1032 = vmatpush1.xpose.msra.mxu0 0.0
        %1033 = vmatprep.subr.mxu0 0.0
        %1034 = vmatpush1.xpose.msra.mxu0 0.0
        %1035 = vmatprep.subr.mxu0 0.0
        %1036 = vmatpush1.xpose.msra.mxu0 0.0
        %1037 = vmatprep.subr.mxu0 0.0
        %1038 = vmatpush1.xpose.msra.mxu0 0.0
        %1039 = vmatprep.subr.mxu0 0.0
        %1040 = vmatpush1.xpose.msra.mxu0 0.0
        %1041 = vmatprep.subr.mxu0 0.0
        %1042 = vmatpush1.xpose.msra.mxu0 0.0
        %1043 = vmatprep.subr.mxu0 0.0
        %1044 = vmatpush1.xpose.msra.mxu0 0.0
        %1045 = vmatprep.subr.mxu0 0.0
        %1046 = vmatpush1.xpose.msra.mxu0 0.0
        %1047 = vmatprep.subr.mxu0 0.0
        %1048 = vmatpush1.xpose.msra.mxu0 0.0
        %1049 = vmatprep.subr.mxu0 0.0
        %1050 = vmatpush1.xpose.msra.mxu0 0.0
        %1051 = vmatprep.subr.mxu0 0.0
        %1052 = vmatpush1.xpose.msra.mxu0 0.0
        %1053 = vmatprep.subr.mxu0 0.0
        %1054 = vmatpush1.xpose.msra.mxu0 0.0
        %1055 = vmatprep.subr.mxu0 0.0
        %1056 = vmatpush1.xpose.msra.mxu0 0.0
        %1057 = vmatprep.subr.mxu0 0.0
        %1058 = vmatpush1.xpose.msra.mxu0 0.0
        %1059 = vmatprep.subr.mxu0 0.0
        %1060 = vmatpush1.xpose.msra.mxu0 0.0
        %1061 = vmatprep.subr.mxu0 0.0
        %1062 = vmatpush1.xpose.msra.mxu0 0.0
        %1063 = vmatprep.subr.mxu0 0.0
        %1064 = vmatpush1.xpose.msra.mxu0 0.0
        %1065 = vmatprep.subr.mxu0 0.0
        %1066 = vmatpush1.xpose.msra.mxu0 0.0
        %1067 = vmatprep.subr.mxu0 0.0
        %1068 = vmatpush1.xpose.msra.mxu0 0.0
        %1069 = vmatprep.subr.mxu0 0.0
        %1070 = vmatpush1.xpose.msra.mxu0 0.0
        %1071 = vmatprep.subr.mxu0 0.0
        %1072 = vmatpush1.xpose.msra.mxu0 0.0
        %1073 = vmatprep.mubr.f32.mxu0 0.0
        %1074 = vmatmul.mubr.f32.gmra.mrb[0].mxu0 %v1005
        %v1075 = vpop.f32.mrb[0].mxu0
        %v1076 = vadd.f32 0.0, %v1075
        %v1077 = vpop.f32.mrb[0].mxu0
        %1078 = vdwg.mxu0
        %v1079 = vmul.f32 %v1076, 0.35355338
        %v1080 = vsel %vm831, %v1079, -inf
        %v1081 = vrot.slane %v1080, 4
        %v1082 = vmax.f32 %v1080, %v1081
        %v1083 = vrot.slane %v1082, 2
        %v1084 = vmax.f32 %v1082, %v1083
        %v1085 = vrot.slane %v1084, 1
        %v1086 = vmax.f32 %v1084, %v1085
        %v1087 = vsub.f32 %v1079, %v1086
        %v1088 = vmul.f32 %v1087, 1.442695
        %v1089 = vpow.pop %v1088
        %v1090 = vsel %vm831, %v1089, 0.0
        %v1091 = vrot.slane %v1090, 4
        %v1092 = vadd.f32 %v1090, %v1091
        %v1093 = vrot.slane %v1092, 2
        %v1094 = vadd.f32 %v1092, %v1093
        %v1095 = vrot.slane %v1094, 1
        %v1096 = vadd.f32 %v1094, %v1095
        %v1097 = vrcp.pop %v1096
        %v1098 = vmul.f32 %v1089, %v1097
        %1100 = vrot.lane.b32.xlu0 %v825, 120
        %v1101 = vpop.permute.xlu0 %1100
        %v1104 = vsel %vm831, %v1098, 0
        %1106 = vmatprep.subr.mxu0 0.0
        %1107 = vmatpush1.msra.mxu0 %v1101
        %1108 = vmatprep.subr.mxu0 0.0
        %1109 = vmatpush1.msra.mxu0 0.0
        %1110 = vmatprep.subr.mxu0 0.0
        %1111 = vmatpush1.msra.mxu0 0.0
        %1112 = vmatprep.subr.mxu0 0.0
        %1113 = vmatpush1.msra.mxu0 0.0
        %1114 = vmatprep.subr.mxu0 0.0
        %1115 = vmatpush1.msra.mxu0 0.0
        %1116 = vmatprep.subr.mxu0 0.0
        %1117 = vmatpush1.msra.mxu0 0.0
        %1118 = vmatprep.subr.mxu0 0.0
        %1119 = vmatpush1.msra.mxu0 0.0
        %1120 = vmatprep.subr.mxu0 0.0
        %1121 = vmatpush1.msra.mxu0 0.0
        %1122 = vmatprep.subr.mxu0 0.0
        %1123 = vmatpush1.msra.mxu0 0.0
        %1124 = vmatprep.subr.mxu0 0.0
        %1125 = vmatpush1.msra.mxu0 0.0
        %1126 = vmatprep.subr.mxu0 0.0
        %1127 = vmatpush1.msra.mxu0 0.0
        %1128 = vmatprep.subr.mxu0 0.0
        %1129 = vmatpush1.msra.mxu0 0.0
        %1130 = vmatprep.subr.mxu0 0.0
        %1131 = vmatpush1.msra.mxu0 0.0
        %1132 = vmatprep.subr.mxu0 0.0
        %1133 = vmatpush1.msra.mxu0 0.0
        %1134 = vmatprep.subr.mxu0 0.0
        %1135 = vmatpush1.msra.mxu0 0.0
        %1136 = vmatprep.subr.mxu0 0.0
        %1137 = vmatpush1.msra.mxu0 0.0
        %1138 = vmatprep.subr.mxu0 0.0
        %1139 = vmatpush1.msra.mxu0 0.0
        %1140 = vmatprep.subr.mxu0 0.0
        %1141 = vmatpush1.msra.mxu0 0.0
        %1142 = vmatprep.subr.mxu0 0.0
        %1143 = vmatpush1.msra.mxu0 0.0
        %1144 = vmatprep.subr.mxu0 0.0
        %1145 = vmatpush1.msra.mxu0 0.0
        %1146 = vmatprep.subr.mxu0 0.0
        %1147 = vmatpush1.msra.mxu0 0.0
        %1148 = vmatprep.subr.mxu0 0.0
        %1149 = vmatpush1.msra.mxu0 0.0
        %1150 = vmatprep.subr.mxu0 0.0
        %1151 = vmatpush1.msra.mxu0 0.0
        %1152 = vmatprep.subr.mxu0 0.0
        %1153 = vmatpush1.msra.mxu0 0.0
        %1154 = vmatprep.subr.mxu0 0.0
        %1155 = vmatpush1.msra.mxu0 0.0
        %1156 = vmatprep.subr.mxu0 0.0
        %1157 = vmatpush1.msra.mxu0 0.0
        %1158 = vmatprep.subr.mxu0 0.0
        %1159 = vmatpush1.msra.mxu0 0.0
        %1160 = vmatprep.subr.mxu0 0.0
        %1161 = vmatpush1.msra.mxu0 0.0
        %1162 = vmatprep.subr.mxu0 0.0
        %1163 = vmatpush1.msra.mxu0 0.0
        %1164 = vmatprep.subr.mxu0 0.0
        %1165 = vmatpush1.msra.mxu0 0.0
        %1166 = vmatprep.subr.mxu0 0.0
        %1167 = vmatpush1.msra.mxu0 0.0
        %1168 = vmatprep.subr.mxu0 0.0
        %1169 = vmatpush1.msra.mxu0 0.0
        %1170 = vmatprep.mubr.f32.mxu0 0.0
        %1171 = vmatmul.mubr.f32.gmra.mrb[0].mxu0 %v1104
        %v1172 = vpop.f32.mrb[0].mxu0
        %v1173 = vadd.f32 0.0, %v1172
        %v1174 = vpop.f32.mrb[0].mxu0
        %1175 = vdwg.mxu0
        %1176 = vrot.lane.b32.xlu0 %v830, 112
        %v1177 = vpop.permute.xlu0 %1176
        %1178 = vrot.lane.b32.xlu0 %v738, 112
        %v1179 = vpop.permute.xlu0 %1178
        %v1180 = vsel %vm831, %v1177, 0
        %v1182 = vsel %vm831, %v1179, 0
        %1184 = vmatprep.subr.mxu0 0.0
        %1185 = vmatpush1.xpose.msra.mxu0 %v1182
        %1186 = vmatprep.subr.mxu0 0.0
        %1187 = vmatpush1.xpose.msra.mxu0 0.0
        %1188 = vmatprep.subr.mxu0 0.0
        %1189 = vmatpush1.xpose.msra.mxu0 0.0
        %1190 = vmatprep.subr.mxu0 0.0
        %1191 = vmatpush1.xpose.msra.mxu0 0.0
        %1192 = vmatprep.subr.mxu0 0.0
        %1193 = vmatpush1.xpose.msra.mxu0 0.0
        %1194 = vmatprep.subr.mxu0 0.0
        %1195 = vmatpush1.xpose.msra.mxu0 0.0
        %1196 = vmatprep.subr.mxu0 0.0
        %1197 = vmatpush1.xpose.msra.mxu0 0.0
        %1198 = vmatprep.subr.mxu0 0.0
        %1199 = vmatpush1.xpose.msra.mxu0 0.0
        %1200 = vmatprep.subr.mxu0 0.0
        %1201 = vmatpush1.xpose.msra.mxu0 0.0
        %1202 = vmatprep.subr.mxu0 0.0
        %1203 = vmatpush1.xpose.msra.mxu0 0.0
        %1204 = vmatprep.subr.mxu0 0.0
        %1205 = vmatpush1.xpose.msra.mxu0 0.0
        %1206 = vmatprep.subr.mxu0 0.0
        %1207 = vmatpush1.xpose.msra.mxu0 0.0
        %1208 = vmatprep.subr.mxu0 0.0
        %1209 = vmatpush1.xpose.msra.mxu0 0.0
        %1210 = vmatprep.subr.mxu0 0.0
        %1211 = vmatpush1.xpose.msra.mxu0 0.0
        %1212 = vmatprep.subr.mxu0 0.0
        %1213 = vmatpush1.xpose.msra.mxu0 0.0
        %1214 = vmatprep.subr.mxu0 0.0
        %1215 = vmatpush1.xpose.msra.mxu0 0.0
        %1216 = vmatprep.subr.mxu0 0.0
        %1217 = vmatpush1.xpose.msra.mxu0 0.0
        %1218 = vmatprep.subr.mxu0 0.0
        %1219 = vmatpush1.xpose.msra.mxu0 0.0
        %1220 = vmatprep.subr.mxu0 0.0
        %1221 = vmatpush1.xpose.msra.mxu0 0.0
        %1222 = vmatprep.subr.mxu0 0.0
        %1223 = vmatpush1.xpose.msra.mxu0 0.0
        %1224 = vmatprep.subr.mxu0 0.0
        %1225 = vmatpush1.xpose.msra.mxu0 0.0
        %1226 = vmatprep.subr.mxu0 0.0
        %1227 = vmatpush1.xpose.msra.mxu0 0.0
        %1228 = vmatprep.subr.mxu0 0.0
        %1229 = vmatpush1.xpose.msra.mxu0 0.0
        %1230 = vmatprep.subr.mxu0 0.0
        %1231 = vmatpush1.xpose.msra.mxu0 0.0
        %1232 = vmatprep.subr.mxu0 0.0
        %1233 = vmatpush1.xpose.msra.mxu0 0.0
        %1234 = vmatprep.subr.mxu0 0.0
        %1235 = vmatpush1.xpose.msra.mxu0 0.0
        %1236 = vmatprep.subr.mxu0 0.0
        %1237 = vmatpush1.xpose.msra.mxu0 0.0
        %1238 = vmatprep.subr.mxu0 0.0
        %1239 = vmatpush1.xpose.msra.mxu0 0.0
        %1240 = vmatprep.subr.mxu0 0.0
        %1241 = vmatpush1.xpose.msra.mxu0 0.0
        %1242 = vmatprep.subr.mxu0 0.0
        %1243 = vmatpush1.xpose.msra.mxu0 0.0
        %1244 = vmatprep.subr.mxu0 0.0
        %1245 = vmatpush1.xpose.msra.mxu0 0.0
        %1246 = vmatprep.subr.mxu0 0.0
        %1247 = vmatpush1.xpose.msra.mxu0 0.0
        %1248 = vmatprep.mubr.f32.mxu0 0.0
        %1249 = vmatmul.mubr.f32.gmra.mrb[0].mxu0 %v1180
        %v1250 = vpop.f32.mrb[0].mxu0
        %v1251 = vadd.f32 0.0, %v1250
        %v1252 = vpop.f32.mrb[0].mxu0
        %1253 = vdwg.mxu0
        %v1254 = vmul.f32 %v1251, 0.35355338
        %v1255 = vsel %vm831, %v1254, -inf
        %v1256 = vrot.slane %v1255, 4
        %v1257 = vmax.f32 %v1255, %v1256
        %v1258 = vrot.slane %v1257, 2
        %v1259 = vmax.f32 %v1257, %v1258
        %v1260 = vrot.slane %v1259, 1
        %v1261 = vmax.f32 %v1259, %v1260
        %v1262 = vsub.f32 %v1254, %v1261
        %v1263 = vmul.f32 %v1262, 1.442695
        %v1264 = vpow.pop %v1263
        %v1265 = vsel %vm831, %v1264, 0.0
        %v1266 = vrot.slane %v1265, 4
        %v1267 = vadd.f32 %v1265, %v1266
        %v1268 = vrot.slane %v1267, 2
        %v1269 = vadd.f32 %v1267, %v1268
        %v1270 = vrot.slane %v1269, 1
        %v1271 = vadd.f32 %v1269, %v1270
        %v1272 = vrcp.pop %v1271
        %v1273 = vmul.f32 %v1264, %v1272
        %1274 = vrot.lane.b32.xlu0 %v825, 112
        %v1275 = vpop.permute.xlu0 %1274
        %v1278 = vsel %vm831, %v1273, 0
        %1280 = vmatprep.subr.mxu0 0.0
        %1281 = vmatpush1.msra.mxu0 %v1275
        %1282 = vmatprep.subr.mxu0 0.0
        %1283 = vmatpush1.msra.mxu0 0.0
        %1284 = vmatprep.subr.mxu0 0.0
        %1285 = vmatpush1.msra.mxu0 0.0
        %1286 = vmatprep.subr.mxu0 0.0
        %1287 = vmatpush1.msra.mxu0 0.0
        %1288 = vmatprep.subr.mxu0 0.0
        %1289 = vmatpush1.msra.mxu0 0.0
        %1290 = vmatprep.subr.mxu0 0.0
        %1291 = vmatpush1.msra.mxu0 0.0
        %1292 = vmatprep.subr.mxu0 0.0
        %1293 = vmatpush1.msra.mxu0 0.0
        %1294 = vmatprep.subr.mxu0 0.0
        %1295 = vmatpush1.msra.mxu0 0.0
        %1296 = vmatprep.subr.mxu0 0.0
        %1297 = vmatpush1.msra.mxu0 0.0
        %1298 = vmatprep.subr.mxu0 0.0
        %1299 = vmatpush1.msra.mxu0 0.0
        %1300 = vmatprep.subr.mxu0 0.0
        %1301 = vmatpush1.msra.mxu0 0.0
        %1302 = vmatprep.subr.mxu0 0.0
        %1303 = vmatpush1.msra.mxu0 0.0
        %1304 = vmatprep.subr.mxu0 0.0
        %1305 = vmatpush1.msra.mxu0 0.0
        %1306 = vmatprep.subr.mxu0 0.0
        %1307 = vmatpush1.msra.mxu0 0.0
        %1308 = vmatprep.subr.mxu0 0.0
        %1309 = vmatpush1.msra.mxu0 0.0
        %1310 = vmatprep.subr.mxu0 0.0
        %1311 = vmatpush1.msra.mxu0 0.0
        %1312 = vmatprep.subr.mxu0 0.0
        %1313 = vmatpush1.msra.mxu0 0.0
        %1314 = vmatprep.subr.mxu0 0.0
        %1315 = vmatpush1.msra.mxu0 0.0
        %1316 = vmatprep.subr.mxu0 0.0
        %1317 = vmatpush1.msra.mxu0 0.0
        %1318 = vmatprep.subr.mxu0 0.0
        %1319 = vmatpush1.msra.mxu0 0.0
        %1320 = vmatprep.subr.mxu0 0.0
        %1321 = vmatpush1.msra.mxu0 0.0
        %1322 = vmatprep.subr.mxu0 0.0
        %1323 = vmatpush1.msra.mxu0 0.0
        %1324 = vmatprep.subr.mxu0 0.0
        %1325 = vmatpush1.msra.mxu0 0.0
        %1326 = vmatprep.subr.mxu0 0.0
        %1327 = vmatpush1.msra.mxu0 0.0
        %1328 = vmatprep.subr.mxu0 0.0
        %1329 = vmatpush1.msra.mxu0 0.0
        %1330 = vmatprep.subr.mxu0 0.0
        %1331 = vmatpush1.msra.mxu0 0.0
        %1332 = vmatprep.subr.mxu0 0.0
        %1333 = vmatpush1.msra.mxu0 0.0
        %1334 = vmatprep.subr.mxu0 0.0
        %1335 = vmatpush1.msra.mxu0 0.0
        %1336 = vmatprep.subr.mxu0 0.0
        %1337 = vmatpush1.msra.mxu0 0.0
        %1338 = vmatprep.subr.mxu0 0.0
        %1339 = vmatpush1.msra.mxu0 0.0
        %1340 = vmatprep.subr.mxu0 0.0
        %1341 = vmatpush1.msra.mxu0 0.0
        %1342 = vmatprep.subr.mxu0 0.0
        %1343 = vmatpush1.msra.mxu0 0.0
        %1344 = vmatprep.mubr.f32.mxu0 0.0
        %1345 = vmatmul.mubr.f32.gmra.mrb[0].mxu0 %v1278
        %v1346 = vpop.f32.mrb[0].mxu0
        %v1347 = vadd.f32 0.0, %v1346
        %v1348 = vpop.f32.mrb[0].mxu0
        %1349 = vdwg.mxu0
        %1350 = vrot.lane.b32.xlu0 %v830, 104
        %v1351 = vpop.permute.xlu0 %1350
        %1352 = vrot.lane.b32.xlu0 %v738, 104
        %v1353 = vpop.permute.xlu0 %1352
        %v1354 = vsel %vm831, %v1351, 0
        %v1356 = vsel %vm831, %v1353, 0
        %1358 = vmatprep.subr.mxu0 0.0
        %1359 = vmatpush1.xpose.msra.mxu0 %v1356
        %1360 = vmatprep.subr.mxu0 0.0
        %1361 = vmatpush1.xpose.msra.mxu0 0.0
        %1362 = vmatprep.subr.mxu0 0.0
        %1363 = vmatpush1.xpose.msra.mxu0 0.0
        %1364 = vmatprep.subr.mxu0 0.0
        %1365 = vmatpush1.xpose.msra.mxu0 0.0
        %1366 = vmatprep.subr.mxu0 0.0
        %1367 = vmatpush1.xpose.msra.mxu0 0.0
        %1368 = vmatprep.subr.mxu0 0.0
        %1369 = vmatpush1.xpose.msra.mxu0 0.0
        %1370 = vmatprep.subr.mxu0 0.0
        %1371 = vmatpush1.xpose.msra.mxu0 0.0
        %1372 = vmatprep.subr.mxu0 0.0
        %1373 = vmatpush1.xpose.msra.mxu0 0.0
        %1374 = vmatprep.subr.mxu0 0.0
        %1375 = vmatpush1.xpose.msra.mxu0 0.0
        %1376 = vmatprep.subr.mxu0 0.0
        %1377 = vmatpush1.xpose.msra.mxu0 0.0
        %1378 = vmatprep.subr.mxu0 0.0
        %1379 = vmatpush1.xpose.msra.mxu0 0.0
        %1380 = vmatprep.subr.mxu0 0.0
        %1381 = vmatpush1.xpose.msra.mxu0 0.0
        %1382 = vmatprep.subr.mxu0 0.0
        %1383 = vmatpush1.xpose.msra.mxu0 0.0
        %1384 = vmatprep.subr.mxu0 0.0
        %1385 = vmatpush1.xpose.msra.mxu0 0.0
        %1386 = vmatprep.subr.mxu0 0.0
        %1387 = vmatpush1.xpose.msra.mxu0 0.0
        %1388 = vmatprep.subr.mxu0 0.0
        %1389 = vmatpush1.xpose.msra.mxu0 0.0
        %1390 = vmatprep.subr.mxu0 0.0
        %1391 = vmatpush1.xpose.msra.mxu0 0.0
        %1392 = vmatprep.subr.mxu0 0.0
        %1393 = vmatpush1.xpose.msra.mxu0 0.0
        %1394 = vmatprep.subr.mxu0 0.0
        %1395 = vmatpush1.xpose.msra.mxu0 0.0
        %1396 = vmatprep.subr.mxu0 0.0
        %1397 = vmatpush1.xpose.msra.mxu0 0.0
        %1398 = vmatprep.subr.mxu0 0.0
        %1399 = vmatpush1.xpose.msra.mxu0 0.0
        %1400 = vmatprep.subr.mxu0 0.0
        %1401 = vmatpush1.xpose.msra.mxu0 0.0
        %1402 = vmatprep.subr.mxu0 0.0
        %1403 = vmatpush1.xpose.msra.mxu0 0.0
        %1404 = vmatprep.subr.mxu0 0.0
        %1405 = vmatpush1.xpose.msra.mxu0 0.0
        %1406 = vmatprep.subr.mxu0 0.0
        %1407 = vmatpush1.xpose.msra.mxu0 0.0
        %1408 = vmatprep.subr.mxu0 0.0
        %1409 = vmatpush1.xpose.msra.mxu0 0.0
        %1410 = vmatprep.subr.mxu0 0.0
        %1411 = vmatpush1.xpose.msra.mxu0 0.0
        %1412 = vmatprep.subr.mxu0 0.0
        %1413 = vmatpush1.xpose.msra.mxu0 0.0
        %1414 = vmatprep.subr.mxu0 0.0
        %1415 = vmatpush1.xpose.msra.mxu0 0.0
        %1416 = vmatprep.subr.mxu0 0.0
        %1417 = vmatpush1.xpose.msra.mxu0 0.0
        %1418 = vmatprep.subr.mxu0 0.0
        %1419 = vmatpush1.xpose.msra.mxu0 0.0
        %1420 = vmatprep.subr.mxu0 0.0
        %1421 = vmatpush1.xpose.msra.mxu0 0.0
        %1422 = vmatprep.mubr.f32.mxu0 0.0
        %1423 = vmatmul.mubr.f32.gmra.mrb[0].mxu0 %v1354
        %v1424 = vpop.f32.mrb[0].mxu0
        %v1425 = vadd.f32 0.0, %v1424
        %v1426 = vpop.f32.mrb[0].mxu0
        %1427 = vdwg.mxu0
        %v1428 = vmul.f32 %v1425, 0.35355338
        %v1429 = vsel %vm831, %v1428, -inf
        %v1430 = vrot.slane %v1429, 4
        %v1431 = vmax.f32 %v1429, %v1430
        %v1432 = vrot.slane %v1431, 2
        %v1433 = vmax.f32 %v1431, %v1432
        %v1434 = vrot.slane %v1433, 1
        %v1435 = vmax.f32 %v1433, %v1434
        %v1436 = vsub.f32 %v1428, %v1435
        %v1437 = vmul.f32 %v1436, 1.442695
        %v1438 = vpow.pop %v1437
        %v1439 = vsel %vm831, %v1438, 0.0
        %v1440 = vrot.slane %v1439, 4
        %v1441 = vadd.f32 %v1439, %v1440
        %v1442 = vrot.slane %v1441, 2
        %v1443 = vadd.f32 %v1441, %v1442
        %v1444 = vrot.slane %v1443, 1
        %v1445 = vadd.f32 %v1443, %v1444
        %v1446 = vrcp.pop %v1445
        %v1447 = vmul.f32 %v1438, %v1446
        %1448 = vrot.lane.b32.xlu0 %v825, 104
        %v1449 = vpop.permute.xlu0 %1448
        %v1452 = vsel %vm831, %v1447, 0
        %1454 = vmatprep.subr.mxu0 0.0
        %1455 = vmatpush1.msra.mxu0 %v1449
        %1456 = vmatprep.subr.mxu0 0.0
        %1457 = vmatpush1.msra.mxu0 0.0
        %1458 = vmatprep.subr.mxu0 0.0
        %1459 = vmatpush1.msra.mxu0 0.0
        %1460 = vmatprep.subr.mxu0 0.0
        %1461 = vmatpush1.msra.mxu0 0.0
        %1462 = vmatprep.subr.mxu0 0.0
        %1463 = vmatpush1.msra.mxu0 0.0
        %1464 = vmatprep.subr.mxu0 0.0
        %1465 = vmatpush1.msra.mxu0 0.0
        %1466 = vmatprep.subr.mxu0 0.0
        %1467 = vmatpush1.msra.mxu0 0.0
        %1468 = vmatprep.subr.mxu0 0.0
        %1469 = vmatpush1.msra.mxu0 0.0
        %1470 = vmatprep.subr.mxu0 0.0
        %1471 = vmatpush1.msra.mxu0 0.0
        %1472 = vmatprep.subr.mxu0 0.0
        %1473 = vmatpush1.msra.mxu0 0.0
        %1474 = vmatprep.subr.mxu0 0.0
        %1475 = vmatpush1.msra.mxu0 0.0
        %1476 = vmatprep.subr.mxu0 0.0
        %1477 = vmatpush1.msra.mxu0 0.0
        %1478 = vmatprep.subr.mxu0 0.0
        %1479 = vmatpush1.msra.mxu0 0.0
        %1480 = vmatprep.subr.mxu0 0.0
        %1481 = vmatpush1.msra.mxu0 0.0
        %1482 = vmatprep.subr.mxu0 0.0
        %1483 = vmatpush1.msra.mxu0 0.0
        %1484 = vmatprep.subr.mxu0 0.0
        %1485 = vmatpush1.msra.mxu0 0.0
        %1486 = vmatprep.subr.mxu0 0.0
        %1487 = vmatpush1.msra.mxu0 0.0
        %1488 = vmatprep.subr.mxu0 0.0
        %1489 = vmatpush1.msra.mxu0 0.0
        %1490 = vmatprep.subr.mxu0 0.0
        %1491 = vmatpush1.msra.mxu0 0.0
        %1492 = vmatprep.subr.mxu0 0.0
        %1493 = vmatpush1.msra.mxu0 0.0
        %1494 = vmatprep.subr.mxu0 0.0
        %1495 = vmatpush1.msra.mxu0 0.0
        %1496 = vmatprep.subr.mxu0 0.0
        %1497 = vmatpush1.msra.mxu0 0.0
        %1498 = vmatprep.subr.mxu0 0.0
        %1499 = vmatpush1.msra.mxu0 0.0
        %1500 = vmatprep.subr.mxu0 0.0
        %1501 = vmatpush1.msra.mxu0 0.0
        %1502 = vmatprep.subr.mxu0 0.0
        %1503 = vmatpush1.msra.mxu0 0.0
        %1504 = vmatprep.subr.mxu0 0.0
        %1505 = vmatpush1.msra.mxu0 0.0
        %1506 = vmatprep.subr.mxu0 0.0
        %1507 = vmatpush1.msra.mxu0 0.0
        %1508 = vmatprep.subr.mxu0 0.0
        %1509 = vmatpush1.msra.mxu0 0.0
        %1510 = vmatprep.subr.mxu0 0.0
        %1511 = vmatpush1.msra.mxu0 0.0
        %1512 = vmatprep.subr.mxu0 0.0
        %1513 = vmatpush1.msra.mxu0 0.0
        %1514 = vmatprep.subr.mxu0 0.0
        %1515 = vmatpush1.msra.mxu0 0.0
        %1516 = vmatprep.subr.mxu0 0.0
        %1517 = vmatpush1.msra.mxu0 0.0
        %1518 = vmatprep.mubr.f32.mxu0 0.0
        %1519 = vmatmul.mubr.f32.gmra.mrb[0].mxu0 %v1452
        %v1520 = vpop.f32.mrb[0].mxu0
        %v1521 = vadd.f32 0.0, %v1520
        %v1522 = vpop.f32.mrb[0].mxu0
        %1523 = vdwg.mxu0
        %1525 = vrot.lane.b32.xlu0 %v1173, 8
        %v1526 = vpop.permute.xlu0 %1525
        %1529 = vrot.lane.b32.xlu0 %v1347, 16
        %v1530 = vpop.permute.xlu0 %1529
        %1533 = vrot.lane.b32.xlu0 %v1521, 24
        %v1534 = vpop.permute.xlu0 %1533
        %v1536 = vsel %vm831, %v998, %v1526
        %vm1537 = vcmask 130048
        %v1538 = vsel %vm1537, %v1536, %v1530
        %vm1539 = vcmask 195584
        %v1540 = vsel %vm1539, %v1538, %v1534
        %s1541 = scalar_lea.vmem [#allocation3], %s828
        %v1542 = vld [vmem:[%s1541] sm:$0xff]
        %v1543 = vadd.f32 %v1542, %v1540
        %1544 = vst.msk [vmem:[%s1541] sm:$0xff] %vm667, %v1543
        %p1545 = scmp.eq.s32.totalorder %s40, 0
        %p1546 = pnand %p554, %p1545
        %p1547 = pneg %p1546
        // Predicated region
        $region97: #{tpu_custom_call.1} parent=63 // pred_check
          _
        $region98: #{tpu_custom_call.1} parent=63 // pred_check_branch
          %1549 = sbr.rel (%p1546) target = $region100
        $region99: #{tpu_custom_call.1} parent=63 // pred_region
          %1550 = vst.msk [vmem:[#allocation4] sm:$0xff] %vm667, 0.0
        $region100: #{tpu_custom_call.1} parent=63 // pred_fallthru
          _
        // Predicated region
        $region101: #{tpu_custom_call.1} parent=63 // pred_check
          %p1551 = pneg %p554
        $region102: #{tpu_custom_call.1} parent=63 // pred_check_branch
          %1553 = sbr.rel (%p1551) target = $region104
        $region103: #{tpu_custom_call.1} parent=63 // pred_region
          %v1554 = vld [vmem:[#allocation4] sm:$0xff]
          %v1555 = vld [vmem:[%s1541] sm:$0xff]
          %s1556 = scalar_lea.vmem %s9, %s653
          %v1557 = vld [vmem:[%s1556] sm:$0xff]
          %v1558 = vld [vmem:[%s1556 + $0x8] sm:$0xff]
          %v1559 = vld [vmem:[%s1556 + $0x10] sm:$0xff]
          %v1560 = vld [vmem:[%s1556 + $0x18] sm:$0xff]
          %v1562 = vsel %vm667, %v1555, 0
          %1564 = vmatprep.subr.mxu0 0.0
          %1565 = vmatpush1.msra.mxu0 %v1557
          %1566 = vmatprep.subr.mxu0 0.0
          %1567 = vmatpush1.msra.mxu0 %v1558
          %1568 = vmatprep.subr.mxu0 0.0
          %1569 = vmatpush1.msra.mxu0 %v1559
          %1570 = vmatprep.subr.mxu0 0.0
          %1571 = vmatpush1.msra.mxu0 %v1560
          %1572 = vmatprep.subr.mxu0 0.0
          %1573 = vmatpush1.msra.mxu0 0.0
          %1574 = vmatprep.subr.mxu0 0.0
          %1575 = vmatpush1.msra.mxu0 0.0
          %1576 = vmatprep.subr.mxu0 0.0
          %1577 = vmatpush1.msra.mxu0 0.0
          %1578 = vmatprep.subr.mxu0 0.0
          %1579 = vmatpush1.msra.mxu0 0.0
          %1580 = vmatprep.subr.mxu0 0.0
          %1581 = vmatpush1.msra.mxu0 0.0
          %1582 = vmatprep.subr.mxu0 0.0
          %1583 = vmatpush1.msra.mxu0 0.0
          %1584 = vmatprep.subr.mxu0 0.0
          %1585 = vmatpush1.msra.mxu0 0.0
          %1586 = vmatprep.subr.mxu0 0.0
          %1587 = vmatpush1.msra.mxu0 0.0
          %1588 = vmatprep.subr.mxu0 0.0
          %1589 = vmatpush1.msra.mxu0 0.0
          %1590 = vmatprep.subr.mxu0 0.0
          %1591 = vmatpush1.msra.mxu0 0.0
          %1592 = vmatprep.subr.mxu0 0.0
          %1593 = vmatpush1.msra.mxu0 0.0
          %1594 = vmatprep.subr.mxu0 0.0
          %1595 = vmatpush1.msra.mxu0 0.0
          %1596 = vmatprep.subr.mxu0 0.0
          %1597 = vmatpush1.msra.mxu0 0.0
          %1598 = vmatprep.subr.mxu0 0.0
          %1599 = vmatpush1.msra.mxu0 0.0
          %1600 = vmatprep.subr.mxu0 0.0
          %1601 = vmatpush1.msra.mxu0 0.0
          %1602 = vmatprep.subr.mxu0 0.0
          %1603 = vmatpush1.msra.mxu0 0.0
          %1604 = vmatprep.subr.mxu0 0.0
          %1605 = vmatpush1.msra.mxu0 0.0
          %1606 = vmatprep.subr.mxu0 0.0
          %1607 = vmatpush1.msra.mxu0 0.0
          %1608 = vmatprep.subr.mxu0 0.0
          %1609 = vmatpush1.msra.mxu0 0.0
          %1610 = vmatprep.subr.mxu0 0.0
          %1611 = vmatpush1.msra.mxu0 0.0
          %1612 = vmatprep.subr.mxu0 0.0
          %1613 = vmatpush1.msra.mxu0 0.0
          %1614 = vmatprep.subr.mxu0 0.0
          %1615 = vmatpush1.msra.mxu0 0.0
          %1616 = vmatprep.subr.mxu0 0.0
          %1617 = vmatpush1.msra.mxu0 0.0
          %1618 = vmatprep.subr.mxu0 0.0
          %1619 = vmatpush1.msra.mxu0 0.0
          %1620 = vmatprep.subr.mxu0 0.0
          %1621 = vmatpush1.msra.mxu0 0.0
          %1622 = vmatprep.subr.mxu0 0.0
          %1623 = vmatpush1.msra.mxu0 0.0
          %1624 = vmatprep.subr.mxu0 0.0
          %1625 = vmatpush1.msra.mxu0 0.0
          %1626 = vmatprep.subr.mxu0 0.0
          %1627 = vmatpush1.msra.mxu0 0.0
          %1628 = vmatprep.mubr.f32.mxu0 0.0
          %1629 = vmatmul.mubr.f32.gmra.mrb[0].mxu0 %v1562
          %v1630 = vpop.f32.mrb[0].mxu0
          %v1631 = vadd.f32 0.0, %v1630
          %v1632 = vpop.f32.mrb[0].mxu0
          %1633 = vdwg.mxu0
          %v1634 = vadd.f32 %v1554, %v1631
          %1635 = vst.msk [vmem:[#allocation4] sm:$0xff] %vm667, %v1634
        $region104: #{tpu_custom_call.1} parent=63 // pred_fallthru
          _
        // Predicated region
        $region105: #{tpu_custom_call.1} parent=63 // pred_check
          _
        $region106: #{tpu_custom_call.1} parent=63 // pred_check_branch
          %1637 = sbr.rel (%p1546) target = $region108
        $region107: #{tpu_custom_call.1} parent=63 // pred_region
          %v1638 = vld [vmem:[#allocation4] sm:$0xff]
          %v1639 = vld [vmem:[%s10] sm:$0x1]
          %v1641 = vlaneseq
          %v1642 = vshrl.u32 %v1641, 7
          %v1643 = vsub.s32 0, %v1642
          %v1644 = vrot.slane %v1639, %v1643
          %v1646 = vadd.f32 %v1638, %v1644
          %1647 = vst.msk [vmem:[%s553] sm:$0xff] %vm667, %v1646
        $region108: #{tpu_custom_call.1} parent=63 // pred_fallthru
          _
        %s1648 = sand.u32 %s310, 1
        %s1649 = scalar_lea.sflag [#allocation7], %s1648
        %s1650 = sand.u32 %s310, 1
        %s1651 = smul.addr %s1650, 8
        %s1652 = scalar_lea.vmem [#allocation17], %s1651
        // Predicated region
        $region109: #{tpu_custom_call.1} parent=63 // pred_check
          %p1653 = pneg %p320
        $region110: #{tpu_custom_call.1} parent=63 // pred_check_branch
          %1655 = sbr.rel (%p1653) target = $region112
        $region111: #{tpu_custom_call.1} parent=63 // pred_region
          %s1657 = ssub.s32 128, 128
          %1658 = vsyncadd %s1649, %s1657
          %s1659 = smul.addr %s38, 128
          %s1660 = scalar_lea.hbm %s11, %s1659
          %s1662 = sshll.u32 %s1652, 4
          %s1663 = int_to_ptr.vmem [resolvable:$true] %s1662
          %1665 = dma.vmem_to_hbm [thread:$0]  %s1663, 128, %s1660, %s1649
        $region112: #{tpu_custom_call.1} parent=63 // pred_fallthru
          _
      $region64: #{tpu_custom_call.1} parent=5 // pred_fallthru
        _
      %p1666 = scmp.le.s32.totalorder 2, %s28
      // Predicated region
      $region113: #{tpu_custom_call.1} parent=5 // pred_check
        %p1667 = pneg %p1666
      $region114: #{tpu_custom_call.1} parent=5 // pred_check_branch
        %1669 = sbr.rel (%p1667) target = $region116
      $region115: #{tpu_custom_call.1} parent=5 // pred_region
        %s1670 = ssub.s32 %s28, 2
        // Predicated region
        $region117: #{tpu_custom_call.1} parent=115 // pred_check
          %p1671 = pneg %p326
        $region118: #{tpu_custom_call.1} parent=115 // pred_check_branch
          %1673 = sbr.rel (%p1671) target = $region120
        $region119: #{tpu_custom_call.1} parent=115 // pred_region
          %s1674 = sand.u32 %s311, 1
          %s1675 = scalar_lea.sflag [#allocation7], %s1674
          %s1676 = sand.u32 %s311, 1
          %s1677 = smul.addr %s1676, 8
          %s1678 = scalar_lea.vmem [#allocation17], %s1677
          %1679 = dma.done %s1675, 128
        $region120: #{tpu_custom_call.1} parent=115 // pred_fallthru
          _
      $region116: #{tpu_custom_call.1} parent=5 // pred_fallthru
        _
    $region6: #{tpu_custom_call.1} parent=1 // loop_footer
      %s32 = sadd.s32 1, %s28
    $region7: #{tpu_custom_call.1} parent=1 // loop_footer_branch
      %27 = sbr.rel target = $region3
    $region8: #{tpu_custom_call.1} parent=1 // loop_exit
      _
    %1680 = vsyncpa [#allocation6], 1
    %s1681 = scalar_lea.sflag [#allocation6], 1
    %1682 = vsyncpa %s1681, 1
    %1683 = vsyncpa [#allocation9], 1
    %s1684 = scalar_lea.sflag [#allocation9], 1
    %1685 = vsyncpa %s1684, 1
    %1686 = vsyncpa [#allocation12], 1
    %1687 = vsyncpa [#allocation15], 1
    %1688 = vsyncpa [#allocation7], 1
    %s1689 = scalar_lea.sflag [#allocation7], 1
    %1690 = vsyncpa %s1689, 1

// kernel: tpu_custom_call.1
$region0: #{tpu_custom_call.1}
  #allocation0 [shape = 'u32[]', space=smem, size = 0x4, offset = 0x4, fixed_abs, tag = 'smem constant byte address 0x4 - core index']
  #allocation1 [shape = 'u32[144,128]{1,0:T(1,128)}', space=vmem, size = 0x12000, scoped, tag = 'internal scratch']
  #allocation2 [shape = 'f32[1,8,32]{2,1,0:T(8,128)}', space=vmem, size = 0x1000, scoped, tag = 'scratch operand']
  #allocation3 [shape = 'f32[1,8,32]{2,1,0:T(8,128)}', space=vmem, size = 0x1000, scoped, tag = 'scratch operand']
  #allocation4 [shape = 'f32[8,32]{1,0:T(8,128)}', space=vmem, size = 0x1000, scoped, tag = 'scratch operand']
  %s0 = inlined_call_operand.hbm [shape: f32[2,8,32], index: 0, kind: input, shape index: {}]
  %s1 = inlined_call_operand.hbm [shape: f32[2,8,32], index: 1, kind: input, shape index: {}]
  %s2 = inlined_call_operand.hbm [shape: f32[2,8,32], index: 2, kind: input, shape index: {}]
  %s3 = inlined_call_operand.hbm [shape: f32[1,32,32], index: 3, kind: input, shape index: {}]
  %s4 = inlined_call_operand.vmem [shape: f32[1,1,32], index: 4, kind: input, shape index: {}]
  %s5 = inlined_call_operand.hbm [shape: f32[1,32,32], index: 5, kind: input, shape index: {}]
  %s6 = inlined_call_operand.vmem [shape: f32[1,1,32], index: 6, kind: input, shape index: {}]
  %s7 = inlined_call_operand.hbm [shape: f32[1,32,32], index: 7, kind: input, shape index: {}]
  %s8 = inlined_call_operand.hbm [shape: f32[1,1,32], index: 8, kind: input, shape index: {}]
  %s9 = inlined_call_operand.vmem [shape: f32[1,32,32], index: 9, kind: input, shape index: {}]
  %s10 = inlined_call_operand.vmem [shape: f32[1,32], index: 10, kind: input, shape index: {}]
  %s11 = inlined_call_operand.hbm [shape: f32[2,8,32], index: 11, kind: output, shape index: {}]
  %s12 = sld [smem:[#allocation0]]
  $region121: #{tpu_custom_call.1} parent=0
    _
  %s14 = ssub.s32 1, %s12
  %s15 = scalar_select 0, %s14, %s12
  $region1: #{tpu_custom_call.1} parent=0
    #allocation5 [shape = 'u8[8192]{0}', space=vmem, size = 0x2000, scoped, tag = 'input window, operand 0']
    #allocation6 [shape = 's32[2]{0}', space=sflag, size = 0x8, scoped, tag = 'scoped memory for tpu_custom_call.1']
    #allocation7 [shape = 's32[2]{0}', space=sflag, size = 0x8, scoped, tag = 'scoped memory for tpu_custom_call.1']
    #allocation8 [shape = 'u8[8192]{0}', space=vmem, size = 0x2000, scoped, tag = 'input window, operand 1']
    #allocation9 [shape = 's32[2]{0}', space=sflag, size = 0x8, scoped, tag = 'scoped memory for tpu_custom_call.1']
    #allocation10 [shape = 'u8[8192]{0}', space=vmem, size = 0x2000, scoped, tag = 'input window, operand 2']
    #allocation11 [shape = 'u8[16384]{0}', space=vmem, size = 0x4000, scoped, tag = 'input window, operand 3, single buffered']
    #allocation12 [shape = 's32[1]{0}', space=sflag, size = 0x4, scoped, tag = 'scoped memory for tpu_custom_call.1']
    #allocation13 [shape = 'u8[16384]{0}', space=vmem, size = 0x4000, scoped, tag = 'input window, operand 5, single buffered']
    #allocation14 [shape = 'u8[16384]{0}', space=vmem, size = 0x4000, scoped, tag = 'input window, operand 7, single buffered']
    #allocation15 [shape = 's32[1]{0}', space=sflag, size = 0x4, scoped, tag = 'scoped memory for tpu_custom_call.1']
    #allocation16 [shape = 'u8[512]{0}', space=vmem, size = 0x400, scoped, tag = 'input window, operand 8, single buffered']
    #allocation17 [shape = 'u8[8192]{0}', space=vmem, size = 0x2000, scoped, tag = 'output window, operand 0']
    %16 = vsyncpa [#allocation6], 0
    %s17 = scalar_lea.sflag [#allocation6], 1
    %18 = vsyncpa %s17, 0
    %19 = vsyncpa [#allocation9], 0
    %s20 = scalar_lea.sflag [#allocation9], 1
    %21 = vsyncpa %s20, 0
    %22 = vsyncpa [#allocation12], 0
    %23 = vsyncpa [#allocation15], 0
    %24 = vsyncpa [#allocation7], 0
    %s25 = scalar_lea.sflag [#allocation7], 1
    %26 = vsyncpa %s25, 0
    loop: start=0, step=1, limit=4
    $region2: #{tpu_custom_call.1} parent=1 // loop_pre_header
      _
    $region3: #{tpu_custom_call.1} parent=1 // loop_header
      %s28 = sphi 0, %s32
      %p29 = scmp.ge.s32.totalorder %s28, 4
      %s35 = sphi 0, %s54
      %s36 = sphi 0, %s50
      %s37 = sphi 0, %s46
      %s38 = sphi 0, %s35
      %s39 = sphi 0, %s36
      %s40 = sphi 0, %s37
      %s41 = sphi 0, %s38
      %s42 = sphi 0, %s39
      %s43 = sphi 0, %s40
      %s57 = sphi 0, %s59
      %s60 = sphi 0, %s57
      %s61 = sphi 0, %s60
      %s77 = sphi 0, %s61
      %s85 = sphi 0, %s87
      %s88 = sphi 0, %s85
      %s89 = sphi 0, %s88
      %s105 = sphi 0, %s89
      %s113 = sphi 0, %s115
      %s116 = sphi 0, %s113
      %s117 = sphi 0, %s116
      %s133 = sphi 0, %s117
      %s137 = sphi 0, %s137
      %s139 = sphi 0, %s137
      %s140 = sphi 0, %s139
      %s154 = sphi 0, %s140
      %s158 = sphi 0, %s158
      %s160 = sphi 0, %s158
      %s161 = sphi 0, %s160
      %s175 = sphi 0, %s161
      %s179 = sphi 0, %s179
      %s181 = sphi 0, %s179
      %s182 = sphi 0, %s181
      %s196 = sphi 0, %s182
      %s200 = sphi 0, %s200
      %s202 = sphi 0, %s200
      %s203 = sphi 0, %s202
      %s217 = sphi 0, %s203
      %s221 = sphi 0, %s221
      %s223 = sphi 0, %s221
      %s224 = sphi 0, %s223
      %s238 = sphi 0, %s224
      %s242 = sphi 0, %s242
      %s244 = sphi 0, %s242
      %s245 = sphi 0, %s244
      %s259 = sphi 0, %s245
      %s263 = sphi 0, %s263
      %s265 = sphi 0, %s263
      %s266 = sphi 0, %s265
      %s280 = sphi 0, %s266
      %s284 = sphi 0, %s284
      %s286 = sphi 0, %s284
      %s287 = sphi 0, %s286
      %s301 = sphi 0, %s287
      %s307 = sphi 0, %s309
      %s310 = sphi 0, %s307
      %s311 = sphi 0, %s310
      %s327 = sphi 0, %s311
    $region4: #{tpu_custom_call.1} parent=1 // loop_header_branch
      %31 = sbr.rel (%p29) target = $region8
    $region5: #{tpu_custom_call.1} parent=1 // loop_body
      %s33 = ssub.s32 %s28, 1
      %s34 = ssub.s32 %s28, 2
      %s44 = sadd.s32 1, %s37
      %p45 = scmp.ge.s32.totalorder %s44, 1
      %s46 = scalar_select %p45, 0, %s44
      %s47 = sadd.s32 1, %s36
      %s48 = scalar_select %p45, %s47, %s36
      %p49 = scmp.ge.s32.totalorder %s48, 1
      %s50 = scalar_select %p49, 0, %s48
      %s51 = sadd.s32 1, %s35
      %s52 = scalar_select %p49, %s51, %s35
      %p53 = scmp.ge.s32.totalorder %s52, 2
      %s54 = scalar_select %p53, 0, %s52
      %s55 = ssub.s32 %s35, %s54
      %p56 = scmp.eq.s32.totalorder %s55, 0
      %s58 = sadd.s32 %s57, 1
      %s59 = scalar_select %p56, %s57, %s58
      %p62 = pneg %p56
      %p63 = scmp.eq.s32.totalorder %s28, 1
      %p64 = por %p62, %p63
      %p65 = scmp.ne.s32.totalorder %s57, %s60
      %p66 = scmp.eq.s32.totalorder %s28, 0
      %p67 = por %p65, %p66
      %p68 = scmp.ne.s32.totalorder %s57, %s60
      %p69 = scmp.eq.s32.totalorder %s33, 1
      %p70 = por %p68, %p69
      %p71 = scmp.ne.s32.totalorder %s60, %s61
      %p72 = scmp.eq.s32.totalorder %s33, 0
      %p73 = por %p71, %p72
      %p74 = scmp.ne.s32.totalorder %s60, %s61
      %p75 = scmp.eq.s32.totalorder %s34, 1
      %p76 = por %p74, %p75
      %p78 = scmp.ne.s32.totalorder %s61, %s77
      %p79 = scmp.eq.s32.totalorder %s34, 0
      %p80 = por %p78, %p79
      %s81 = ssub.s32 %s35, %s54
      %s82 = ssub.s32 %s36, %s50
      %s83 = sor.u32 %s81, %s82
      %p84 = scmp.eq.s32.totalorder %s83, 0
      %s86 = sadd.s32 %s85, 1
      %s87 = scalar_select %p84, %s85, %s86
      %p90 = pneg %p84
      %p91 = scmp.eq.s32.totalorder %s28, 1
      %p92 = por %p90, %p91
      %p93 = scmp.ne.s32.totalorder %s85, %s88
      %p94 = scmp.eq.s32.totalorder %s28, 0
      %p95 = por %p93, %p94
      %p96 = scmp.ne.s32.totalorder %s85, %s88
      %p97 = scmp.eq.s32.totalorder %s33, 1
      %p98 = por %p96, %p97
      %p99 = scmp.ne.s32.totalorder %s88, %s89
      %p100 = scmp.eq.s32.totalorder %s33, 0
      %p101 = por %p99, %p100
      %p102 = scmp.ne.s32.totalorder %s88, %s89
      %p103 = scmp.eq.s32.totalorder %s34, 1
      %p104 = por %p102, %p103
      %p106 = scmp.ne.s32.totalorder %s89, %s105
      %p107 = scmp.eq.s32.totalorder %s34, 0
      %p108 = por %p106, %p107
      %s109 = ssub.s32 %s35, %s54
      %s110 = ssub.s32 %s36, %s50
      %s111 = sor.u32 %s109, %s110
      %p112 = scmp.eq.s32.totalorder %s111, 0
      %s114 = sadd.s32 %s113, 1
      %s115 = scalar_select %p112, %s113, %s114
      %p118 = pneg %p112
      %p119 = scmp.eq.s32.totalorder %s28, 1
      %p120 = por %p118, %p119
      %p121 = scmp.ne.s32.totalorder %s113, %s116
      %p122 = scmp.eq.s32.totalorder %s28, 0
      %p123 = por %p121, %p122
      %p124 = scmp.ne.s32.totalorder %s113, %s116
      %p125 = scmp.eq.s32.totalorder %s33, 1
      %p126 = por %p124, %p125
      %p127 = scmp.ne.s32.totalorder %s116, %s117
      %p128 = scmp.eq.s32.totalorder %s33, 0
      %p129 = por %p127, %p128
      %p130 = scmp.ne.s32.totalorder %s116, %s117
      %p131 = scmp.eq.s32.totalorder %s34, 1
      %p132 = por %p130, %p131
      %p134 = scmp.ne.s32.totalorder %s117, %s133
      %p135 = scmp.eq.s32.totalorder %s34, 0
      %p136 = por %p134, %p135
      %s138 = sadd.s32 %s137, 1
      %p141 = scmp.eq.s32.totalorder %s28, 1
      %p142 = scmp.ne.s32.totalorder %s137, %s139
      %p143 = scmp.eq.s32.totalorder %s28, 0
      %p144 = por %p142, %p143
      %p145 = scmp.ne.s32.totalorder %s137, %s139
      %p146 = scmp.eq.s32.totalorder %s33, 1
      %p147 = por %p145, %p146
      %p148 = scmp.ne.s32.totalorder %s139, %s140
      %p149 = scmp.eq.s32.totalorder %s33, 0
      %p150 = por %p148, %p149
      %p151 = scmp.ne.s32.totalorder %s139, %s140
      %p152 = scmp.eq.s32.totalorder %s34, 1
      %p153 = por %p151, %p152
      %p155 = scmp.ne.s32.totalorder %s140, %s154
      %p156 = scmp.eq.s32.totalorder %s34, 0
      %p157 = por %p155, %p156
      %s159 = sadd.s32 %s158, 1
      %p162 = scmp.eq.s32.totalorder %s28, 1
      %p163 = scmp.ne.s32.totalorder %s158, %s160
      %p164 = scmp.eq.s32.totalorder %s28, 0
      %p165 = por %p163, %p164
      %p166 = scmp.ne.s32.totalorder %s158, %s160
      %p167 = scmp.eq.s32.totalorder %s33, 1
      %p168 = por %p166, %p167
      %p169 = scmp.ne.s32.totalorder %s160, %s161
      %p170 = scmp.eq.s32.totalorder %s33, 0
      %p171 = por %p169, %p170
      %p172 = scmp.ne.s32.totalorder %s160, %s161
      %p173 = scmp.eq.s32.totalorder %s34, 1
      %p174 = por %p172, %p173
      %p176 = scmp.ne.s32.totalorder %s161, %s175
      %p177 = scmp.eq.s32.totalorder %s34, 0
      %p178 = por %p176, %p177
      %s180 = sadd.s32 %s179, 1
      %p183 = scmp.eq.s32.totalorder %s28, 1
      %p184 = scmp.ne.s32.totalorder %s179, %s181
      %p185 = scmp.eq.s32.totalorder %s28, 0
      %p186 = por %p184, %p185
      %p187 = scmp.ne.s32.totalorder %s179, %s181
      %p188 = scmp.eq.s32.totalorder %s33, 1
      %p189 = por %p187, %p188
      %p190 = scmp.ne.s32.totalorder %s181, %s182
      %p191 = scmp.eq.s32.totalorder %s33, 0
      %p192 = por %p190, %p191
      %p193 = scmp.ne.s32.totalorder %s181, %s182
      %p194 = scmp.eq.s32.totalorder %s34, 1
      %p195 = por %p193, %p194
      %p197 = scmp.ne.s32.totalorder %s182, %s196
      %p198 = scmp.eq.s32.totalorder %s34, 0
      %p199 = por %p197, %p198
      %s201 = sadd.s32 %s200, 1
      %p204 = scmp.eq.s32.totalorder %s28, 1
      %p205 = scmp.ne.s32.totalorder %s200, %s202
      %p206 = scmp.eq.s32.totalorder %s28, 0
      %p207 = por %p205, %p206
      %p208 = scmp.ne.s32.totalorder %s200, %s202
      %p209 = scmp.eq.s32.totalorder %s33, 1
      %p210 = por %p208, %p209
      %p211 = scmp.ne.s32.totalorder %s202, %s203
      %p212 = scmp.eq.s32.totalorder %s33, 0
      %p213 = por %p211, %p212
      %p214 = scmp.ne.s32.totalorder %s202, %s203
      %p215 = scmp.eq.s32.totalorder %s34, 1
      %p216 = por %p214, %p215
      %p218 = scmp.ne.s32.totalorder %s203, %s217
      %p219 = scmp.eq.s32.totalorder %s34, 0
      %p220 = por %p218, %p219
      %s222 = sadd.s32 %s221, 1
      %p225 = scmp.eq.s32.totalorder %s28, 1
      %p226 = scmp.ne.s32.totalorder %s221, %s223
      %p227 = scmp.eq.s32.totalorder %s28, 0
      %p228 = por %p226, %p227
      %p229 = scmp.ne.s32.totalorder %s221, %s223
      %p230 = scmp.eq.s32.totalorder %s33, 1
      %p231 = por %p229, %p230
      %p232 = scmp.ne.s32.totalorder %s223, %s224
      %p233 = scmp.eq.s32.totalorder %s33, 0
      %p234 = por %p232, %p233
      %p235 = scmp.ne.s32.totalorder %s223, %s224
      %p236 = scmp.eq.s32.totalorder %s34, 1
      %p237 = por %p235, %p236
      %p239 = scmp.ne.s32.totalorder %s224, %s238
      %p240 = scmp.eq.s32.totalorder %s34, 0
      %p241 = por %p239, %p240
      %s243 = sadd.s32 %s242, 1
      %p246 = scmp.eq.s32.totalorder %s28, 1
      %p247 = scmp.ne.s32.totalorder %s242, %s244
      %p248 = scmp.eq.s32.totalorder %s28, 0
      %p249 = por %p247, %p248
      %p250 = scmp.ne.s32.totalorder %s242, %s244
      %p251 = scmp.eq.s32.totalorder %s33, 1
      %p252 = por %p250, %p251
      %p253 = scmp.ne.s32.totalorder %s244, %s245
      %p254 = scmp.eq.s32.totalorder %s33, 0
      %p255 = por %p253, %p254
      %p256 = scmp.ne.s32.totalorder %s244, %s245
      %p257 = scmp.eq.s32.totalorder %s34, 1
      %p258 = por %p256, %p257
      %p260 = scmp.ne.s32.totalorder %s245, %s259
      %p261 = scmp.eq.s32.totalorder %s34, 0
      %p262 = por %p260, %p261
      %s264 = sadd.s32 %s263, 1
      %p267 = scmp.eq.s32.totalorder %s28, 1
      %p268 = scmp.ne.s32.totalorder %s263, %s265
      %p269 = scmp.eq.s32.totalorder %s28, 0
      %p270 = por %p268, %p269
      %p271 = scmp.ne.s32.totalorder %s263, %s265
      %p272 = scmp.eq.s32.totalorder %s33, 1
      %p273 = por %p271, %p272
      %p274 = scmp.ne.s32.totalorder %s265, %s266
      %p275 = scmp.eq.s32.totalorder %s33, 0
      %p276 = por %p274, %p275
      %p277 = scmp.ne.s32.totalorder %s265, %s266
      %p278 = scmp.eq.s32.totalorder %s34, 1
      %p279 = por %p277, %p278
      %p281 = scmp.ne.s32.totalorder %s266, %s280
      %p282 = scmp.eq.s32.totalorder %s34, 0
      %p283 = por %p281, %p282
      %s285 = sadd.s32 %s284, 1
      %p288 = scmp.eq.s32.totalorder %s28, 1
      %p289 = scmp.ne.s32.totalorder %s284, %s286
      %p290 = scmp.eq.s32.totalorder %s28, 0
      %p291 = por %p289, %p290
      %p292 = scmp.ne.s32.totalorder %s284, %s286
      %p293 = scmp.eq.s32.totalorder %s33, 1
      %p294 = por %p292, %p293
      %p295 = scmp.ne.s32.totalorder %s286, %s287
      %p296 = scmp.eq.s32.totalorder %s33, 0
      %p297 = por %p295, %p296
      %p298 = scmp.ne.s32.totalorder %s286, %s287
      %p299 = scmp.eq.s32.totalorder %s34, 1
      %p300 = por %p298, %p299
      %p302 = scmp.ne.s32.totalorder %s287, %s301
      %p303 = scmp.eq.s32.totalorder %s34, 0
      %p304 = por %p302, %p303
      %s305 = ssub.s32 %s35, %s54
      %p306 = scmp.eq.s32.totalorder %s305, 0
      %s308 = sadd.s32 %s307, 1
      %s309 = scalar_select %p306, %s307, %s308
      %p312 = pneg %p306
      %p313 = scmp.eq.s32.totalorder %s28, 1
      %p314 = por %p312, %p313
      %p315 = scmp.ne.s32.totalorder %s307, %s310
      %p316 = scmp.eq.s32.totalorder %s28, 0
      %p317 = por %p315, %p316
      %p318 = scmp.ne.s32.totalorder %s307, %s310
      %p319 = scmp.eq.s32.totalorder %s33, 1
      %p320 = por %p318, %p319
      %p321 = scmp.ne.s32.totalorder %s310, %s311
      %p322 = scmp.eq.s32.totalorder %s33, 0
      %p323 = por %p321, %p322
      %p324 = scmp.ne.s32.totalorder %s310, %s311
      %p325 = scmp.eq.s32.totalorder %s34, 1
      %p326 = por %p324, %p325
      %p328 = scmp.ne.s32.totalorder %s311, %s327
      %p329 = scmp.eq.s32.totalorder %s34, 0
      %p330 = por %p328, %p329
      %p331 = scmp.le.s32.totalorder 1, %s28
      %p332 = scmp.lt.s32.totalorder %s28, 3
      %p333 = pnand %p331, %p332
      %p334 = pneg %p333
      // Predicated region
      $region9: #{tpu_custom_call.1} parent=5 // pred_check
        _
      $region10: #{tpu_custom_call.1} parent=5 // pred_check_branch
        %336 = sbr.rel (%p333) target = $region12
      $region11: #{tpu_custom_call.1} parent=5 // pred_region
        %s337 = ssub.s32 %s28, 1
        // Predicated region
        $region13: #{tpu_custom_call.1} parent=11 // pred_check
          %p338 = pneg %p150
        $region14: #{tpu_custom_call.1} parent=11 // pred_check_branch
          %340 = sbr.rel (%p338) target = $region16
        $region15: #{tpu_custom_call.1} parent=11 // pred_region
          %s342 = ssub.s32 512, 512
          %343 = vsyncadd [#allocation12], %s342
          %s344 = sshll.u32 [#allocation11], 4
          %s345 = int_to_ptr.vmem [resolvable:$true] %s344
          %350 = dma.hbm_to_vmem [thread:$0]  %s3, 512, %s345, [#allocation12], 128, 128, 8
        $region16: #{tpu_custom_call.1} parent=11 // pred_fallthru
          _
        // Predicated region
        $region17: #{tpu_custom_call.1} parent=11 // pred_check
          %p351 = pneg %p171
        $region18: #{tpu_custom_call.1} parent=11 // pred_check_branch
          %353 = sbr.rel (%p351) target = $region20
        $region19: #{tpu_custom_call.1} parent=11 // pred_region
          _
        $region20: #{tpu_custom_call.1} parent=11 // pred_fallthru
          _
        // Predicated region
        $region21: #{tpu_custom_call.1} parent=11 // pred_check
          %p354 = pneg %p192
        $region22: #{tpu_custom_call.1} parent=11 // pred_check_branch
          %356 = sbr.rel (%p354) target = $region24
        $region23: #{tpu_custom_call.1} parent=11 // pred_region
          %s358 = ssub.s32 512, 512
          %359 = vsyncadd [#allocation12], %s358
          %s360 = sshll.u32 [#allocation13], 4
          %s361 = int_to_ptr.vmem [resolvable:$true] %s360
          %366 = dma.hbm_to_vmem [thread:$0]  %s5, 512, %s361, [#allocation12], 128, 128, 8
        $region24: #{tpu_custom_call.1} parent=11 // pred_fallthru
          _
        // Predicated region
        $region25: #{tpu_custom_call.1} parent=11 // pred_check
          %p367 = pneg %p213
        $region26: #{tpu_custom_call.1} parent=11 // pred_check_branch
          %369 = sbr.rel (%p367) target = $region28
        $region27: #{tpu_custom_call.1} parent=11 // pred_region
          _
        $region28: #{tpu_custom_call.1} parent=11 // pred_fallthru
          _
        // Predicated region
        $region29: #{tpu_custom_call.1} parent=11 // pred_check
          %p370 = pneg %p234
        $region30: #{tpu_custom_call.1} parent=11 // pred_check_branch
          %372 = sbr.rel (%p370) target = $region32
        $region31: #{tpu_custom_call.1} parent=11 // pred_region
          %s374 = ssub.s32 512, 512
          %375 = vsyncadd [#allocation15], %s374
          %s376 = sshll.u32 [#allocation14], 4
          %s377 = int_to_ptr.vmem [resolvable:$true] %s376
          %382 = dma.hbm_to_vmem [thread:$0]  %s7, 512, %s377, [#allocation15], 128, 128, 8
        $region32: #{tpu_custom_call.1} parent=11 // pred_fallthru
          _
        // Predicated region
        $region33: #{tpu_custom_call.1} parent=11 // pred_check
          %p383 = pneg %p255
        $region34: #{tpu_custom_call.1} parent=11 // pred_check_branch
          %385 = sbr.rel (%p383) target = $region36
        $region35: #{tpu_custom_call.1} parent=11 // pred_region
          %s387 = ssub.s32 16, 16
          %388 = vsyncadd [#allocation15], %s387
          %s390 = sshll.u32 [#allocation16], 4
          %s391 = int_to_ptr.vmem [resolvable:$true] %s390
          %393 = dma.hbm_to_vmem [thread:$0]  %s8, 16, %s391, [#allocation15]
        $region36: #{tpu_custom_call.1} parent=11 // pred_fallthru
          _
        // Predicated region
        $region37: #{tpu_custom_call.1} parent=11 // pred_check
          %p394 = pneg %p276
        $region38: #{tpu_custom_call.1} parent=11 // pred_check_branch
          %396 = sbr.rel (%p394) target = $region40
        $region39: #{tpu_custom_call.1} parent=11 // pred_region
          _
        $region40: #{tpu_custom_call.1} parent=11 // pred_fallthru
          _
        // Predicated region
        $region41: #{tpu_custom_call.1} parent=11 // pred_check
          %p397 = pneg %p297
        $region42: #{tpu_custom_call.1} parent=11 // pred_check_branch
          %399 = sbr.rel (%p397) target = $region44
        $region43: #{tpu_custom_call.1} parent=11 // pred_region
          _
        $region44: #{tpu_custom_call.1} parent=11 // pred_fallthru
          _
      $region12: #{tpu_custom_call.1} parent=5 // pred_fallthru
        _
      %p400 = scmp.lt.s32.totalorder %s28, 2
      // Predicated region
      $region45: #{tpu_custom_call.1} parent=5 // pred_check
        %p401 = pneg %p400
      $region46: #{tpu_custom_call.1} parent=5 // pred_check_branch
        %403 = sbr.rel (%p401) target = $region48
      $region47: #{tpu_custom_call.1} parent=5 // pred_region
        // Predicated region
        $region49: #{tpu_custom_call.1} parent=47 // pred_check
          %p404 = pneg %p67
        $region50: #{tpu_custom_call.1} parent=47 // pred_check_branch
          %406 = sbr.rel (%p404) target = $region52
        $region51: #{tpu_custom_call.1} parent=47 // pred_region
          %s407 = sand.u32 %s57, 1
          %s408 = scalar_lea.sflag [#allocation6], %s407
          %s409 = sand.u32 %s57, 1
          %s410 = smul.addr %s409, 8
          %s411 = scalar_lea.vmem [#allocation5], %s410
          %s413 = ssub.s32 128, 128
          %414 = vsyncadd %s408, %s413
          %s415 = smul.addr %s35, 128
          %s416 = scalar_lea.hbm %s0, %s415
          %s418 = sshll.u32 %s411, 4
          %s419 = int_to_ptr.vmem [resolvable:$true] %s418
          %421 = dma.hbm_to_vmem [thread:$0]  %s416, 128, %s419, %s408
        $region52: #{tpu_custom_call.1} parent=47 // pred_fallthru
          _
        // Predicated region
        $region53: #{tpu_custom_call.1} parent=47 // pred_check
          %p422 = pneg %p95
        $region54: #{tpu_custom_call.1} parent=47 // pred_check_branch
          %424 = sbr.rel (%p422) target = $region56
        $region55: #{tpu_custom_call.1} parent=47 // pred_region
          %s425 = sand.u32 %s28, 1
          %s426 = scalar_lea.sflag [#allocation9], %s425
          %s427 = sand.u32 %s85, 1
          %s428 = smul.addr %s427, 8
          %s429 = scalar_lea.vmem [#allocation8], %s428
          %s431 = ssub.s32 128, 128
          %432 = vsyncadd %s426, %s431
          %s433 = sadd.s32 %s36, %s35
          %s434 = smul.addr %s433, 128
          %s435 = scalar_lea.hbm %s1, %s434
          %s437 = sshll.u32 %s429, 4
          %s438 = int_to_ptr.vmem [resolvable:$true] %s437
          %440 = dma.hbm_to_vmem [thread:$0]  %s435, 128, %s438, %s426
        $region56: #{tpu_custom_call.1} parent=47 // pred_fallthru
          _
        // Predicated region
        $region57: #{tpu_custom_call.1} parent=47 // pred_check
          %p441 = pneg %p123
        $region58: #{tpu_custom_call.1} parent=47 // pred_check_branch
          %443 = sbr.rel (%p441) target = $region60
        $region59: #{tpu_custom_call.1} parent=47 // pred_region
          %s444 = sand.u32 %s28, 1
          %s445 = scalar_lea.sflag [#allocation9], %s444
          %s446 = sand.u32 %s113, 1
          %s447 = smul.addr %s446, 8
          %s448 = scalar_lea.vmem [#allocation10], %s447
          %s450 = ssub.s32 128, 128
          %451 = vsyncadd %s445, %s450
          %s452 = sadd.s32 %s36, %s35
          %s453 = smul.addr %s452, 128
          %s454 = scalar_lea.hbm %s2, %s453
          %s456 = sshll.u32 %s448, 4
          %s457 = int_to_ptr.vmem [resolvable:$true] %s456
          %459 = dma.hbm_to_vmem [thread:$0]  %s454, 128, %s457, %s445
        $region60: #{tpu_custom_call.1} parent=47 // pred_fallthru
          _
      $region48: #{tpu_custom_call.1} parent=5 // pred_fallthru
        _
      %p460 = scmp.le.s32.totalorder 1, %s28
      %p461 = scmp.lt.s32.totalorder %s28, 3
      %p462 = pnand %p460, %p461
      %p463 = pneg %p462
      // Predicated region
      $region61: #{tpu_custom_call.1} parent=5 // pred_check
        _
      $region62: #{tpu_custom_call.1} parent=5 // pred_check_branch
        %465 = sbr.rel (%p462) target = $region64
      $region63: #{tpu_custom_call.1} parent=5 // pred_region
        %s466 = ssub.s32 %s28, 1
        %s467 = sand.u32 %s60, 1
        %s468 = scalar_lea.sflag [#allocation6], %s467
        %s469 = sand.u32 %s60, 1
        %s470 = smul.addr %s469, 8
        %s471 = scalar_lea.vmem [#allocation5], %s470
        // Predicated region
        $region65: #{tpu_custom_call.1} parent=63 // pred_check
          %p472 = pneg %p73
        $region66: #{tpu_custom_call.1} parent=63 // pred_check_branch
          %474 = sbr.rel (%p472) target = $region68
        $region67: #{tpu_custom_call.1} parent=63 // pred_region
          %475 = dma.done %s468, 128
        $region68: #{tpu_custom_call.1} parent=63 // pred_fallthru
          _
        %s476 = sand.u32 %s33, 1
        %s477 = scalar_lea.sflag [#allocation9], %s476
        %s478 = sand.u32 %s88, 1
        %s479 = smul.addr %s478, 8
        %s480 = scalar_lea.vmem [#allocation8], %s479
        // Predicated region
        $region69: #{tpu_custom_call.1} parent=63 // pred_check
          %p481 = pneg %p101
        $region70: #{tpu_custom_call.1} parent=63 // pred_check_branch
          %483 = sbr.rel (%p481) target = $region72
        $region71: #{tpu_custom_call.1} parent=63 // pred_region
          %484 = dma.done %s477, 128
        $region72: #{tpu_custom_call.1} parent=63 // pred_fallthru
          _
        %s485 = sand.u32 %s33, 1
        %s486 = scalar_lea.sflag [#allocation9], %s485
        %s487 = sand.u32 %s116, 1
        %s488 = smul.addr %s487, 8
        %s489 = scalar_lea.vmem [#allocation10], %s488
        // Predicated region
        $region73: #{tpu_custom_call.1} parent=63 // pred_check
          %p490 = pneg %p129
        $region74: #{tpu_custom_call.1} parent=63 // pred_check_branch
          %492 = sbr.rel (%p490) target = $region76
        $region75: #{tpu_custom_call.1} parent=63 // pred_region
          %493 = dma.done %s486, 128
        $region76: #{tpu_custom_call.1} parent=63 // pred_fallthru
          _
        // Predicated region
        $region77: #{tpu_custom_call.1} parent=63 // pred_check
          %p494 = pneg %p150
        $region78: #{tpu_custom_call.1} parent=63 // pred_check_branch
          %496 = sbr.rel (%p494) target = $region80
        $region79: #{tpu_custom_call.1} parent=63 // pred_region
          %497 = dma.done [#allocation12], 512
        $region80: #{tpu_custom_call.1} parent=63 // pred_fallthru
          _
        // Predicated region
        $region81: #{tpu_custom_call.1} parent=63 // pred_check
          %p498 = pneg %p192
        $region82: #{tpu_custom_call.1} parent=63 // pred_check_branch
          %500 = sbr.rel (%p498) target = $region84
        $region83: #{tpu_custom_call.1} parent=63 // pred_region
          %501 = dma.done [#allocation12], 512
        $region84: #{tpu_custom_call.1} parent=63 // pred_fallthru
          _
        // Predicated region
        $region85: #{tpu_custom_call.1} parent=63 // pred_check
          %p502 = pneg %p234
        $region86: #{tpu_custom_call.1} parent=63 // pred_check_branch
          %504 = sbr.rel (%p502) target = $region88
        $region87: #{tpu_custom_call.1} parent=63 // pred_region
          %505 = dma.done [#allocation15], 512
        $region88: #{tpu_custom_call.1} parent=63 // pred_fallthru
          _
        // Predicated region
        $region89: #{tpu_custom_call.1} parent=63 // pred_check
          %p506 = pneg %p255
        $region90: #{tpu_custom_call.1} parent=63 // pred_check_branch
          %508 = sbr.rel (%p506) target = $region92
        $region91: #{tpu_custom_call.1} parent=63 // pred_region
          %509 = dma.done [#allocation15], 16
        $region92: #{tpu_custom_call.1} parent=63 // pred_fallthru
          _
        %s510 = sand.u32 %s60, 1
        %s511 = scalar_lea.sflag [#allocation6], %s510
        %s512 = sand.u32 %s60, 1
        %s513 = smul.addr %s512, 8
        %s514 = scalar_lea.vmem [#allocation5], %s513
        %p515 = pneg %p73
        %p516 = pneg %p70
        %s517 = sand.u32 %s33, 1
        %s518 = scalar_lea.sflag [#allocation9], %s517
        %s519 = sand.u32 %s88, 1
        %s520 = smul.addr %s519, 8
        %s521 = scalar_lea.vmem [#allocation8], %s520
        %p522 = pneg %p101
        %p523 = pneg %p98
        %s524 = sand.u32 %s33, 1
        %s525 = scalar_lea.sflag [#allocation9], %s524
        %s526 = sand.u32 %s116, 1
        %s527 = smul.addr %s526, 8
        %s528 = scalar_lea.vmem [#allocation10], %s527
        %p529 = pneg %p129
        %p530 = pneg %p126
        %p531 = pneg %p150
        %p532 = pneg %p147
        %p533 = pneg %p171
        %p534 = pneg %p168
        %p535 = pneg %p192
        %p536 = pneg %p189
        %p537 = pneg %p213
        %p538 = pneg %p210
        %p539 = pneg %p234
        %p540 = pneg %p231
        %p541 = pneg %p255
        %p542 = pneg %p252
        %p543 = pneg %p276
        %p544 = pneg %p273
        %p545 = pneg %p297
        %p546 = pneg %p294
        %p547 = pneg %p323
        %p548 = pneg %p320
        %s549 = sand.u32 %s310, 1
        %s550 = scalar_lea.sflag [#allocation7], %s549
        %s551 = sand.u32 %s310, 1
        %s552 = smul.addr %s551, 8
        %s553 = scalar_lea.vmem [#allocation17], %s552
        %p554 = scmp.eq.s32.totalorder %s39, 0
        // Predicated region
        $region93: #{tpu_custom_call.1} parent=63 // pred_check
          %p555 = pneg %p554
        $region94: #{tpu_custom_call.1} parent=63 // pred_check_branch
          %557 = sbr.rel (%p555) target = $region96
        $region95: #{tpu_custom_call.1} parent=63 // pred_region
          %v558 = vld [vmem:[%s471] sm:$0xff]
          %s559 = smul.u32 %s40, 32
          %s560 = scalar_lea.vmem [#allocation11], %s559
          %v561 = vld [vmem:[%s560] sm:$0xff]
          %v562 = vld [vmem:[%s560 + $0x8] sm:$0xff]
          %v563 = vld [vmem:[%s560 + $0x10] sm:$0xff]
          %v564 = vld [vmem:[%s560 + $0x18] sm:$0xff]
          %s565 = scalar_lea.vmem %s4, %s40
          %v566 = vld [vmem:[%s565] sm:$0x1]
          %v568 = vlaneseq
          %v569 = vshrl.u32 %v568, 7
          %v570 = vsub.s32 0, %v569
          %v571 = vrot.slane %v566, %v570
          %vm573 = vcmask 261120
          %v575 = vsel %vm573, %v558, 0
          %577 = vmatprep.subr.mxu0 0.0
          %578 = vmatpush1.msra.mxu0 %v561
          %579 = vmatprep.subr.mxu0 0.0
          %580 = vmatpush1.msra.mxu0 %v562
          %581 = vmatprep.subr.mxu0 0.0
          %582 = vmatpush1.msra.mxu0 %v563
          %583 = vmatprep.subr.mxu0 0.0
          %584 = vmatpush1.msra.mxu0 %v564
          %585 = vmatprep.subr.mxu0 0.0
          %586 = vmatpush1.msra.mxu0 0.0
          %587 = vmatprep.subr.mxu0 0.0
          %588 = vmatpush1.msra.mxu0 0.0
          %589 = vmatprep.subr.mxu0 0.0
          %590 = vmatpush1.msra.mxu0 0.0
          %591 = vmatprep.subr.mxu0 0.0
          %592 = vmatpush1.msra.mxu0 0.0
          %593 = vmatprep.subr.mxu0 0.0
          %594 = vmatpush1.msra.mxu0 0.0
          %595 = vmatprep.subr.mxu0 0.0
          %596 = vmatpush1.msra.mxu0 0.0
          %597 = vmatprep.subr.mxu0 0.0
          %598 = vmatpush1.msra.mxu0 0.0
          %599 = vmatprep.subr.mxu0 0.0
          %600 = vmatpush1.msra.mxu0 0.0
          %601 = vmatprep.subr.mxu0 0.0
          %602 = vmatpush1.msra.mxu0 0.0
          %603 = vmatprep.subr.mxu0 0.0
          %604 = vmatpush1.msra.mxu0 0.0
          %605 = vmatprep.subr.mxu0 0.0
          %606 = vmatpush1.msra.mxu0 0.0
          %607 = vmatprep.subr.mxu0 0.0
          %608 = vmatpush1.msra.mxu0 0.0
          %609 = vmatprep.subr.mxu0 0.0
          %610 = vmatpush1.msra.mxu0 0.0
          %611 = vmatprep.subr.mxu0 0.0
          %612 = vmatpush1.msra.mxu0 0.0
          %613 = vmatprep.subr.mxu0 0.0
          %614 = vmatpush1.msra.mxu0 0.0
          %615 = vmatprep.subr.mxu0 0.0
          %616 = vmatpush1.msra.mxu0 0.0
          %617 = vmatprep.subr.mxu0 0.0
          %618 = vmatpush1.msra.mxu0 0.0
          %619 = vmatprep.subr.mxu0 0.0
          %620 = vmatpush1.msra.mxu0 0.0
          %621 = vmatprep.subr.mxu0 0.0
          %622 = vmatpush1.msra.mxu0 0.0
          %623 = vmatprep.subr.mxu0 0.0
          %624 = vmatpush1.msra.mxu0 0.0
          %625 = vmatprep.subr.mxu0 0.0
          %626 = vmatpush1.msra.mxu0 0.0
          %627 = vmatprep.subr.mxu0 0.0
          %628 = vmatpush1.msra.mxu0 0.0
          %629 = vmatprep.subr.mxu0 0.0
          %630 = vmatpush1.msra.mxu0 0.0
          %631 = vmatprep.subr.mxu0 0.0
          %632 = vmatpush1.msra.mxu0 0.0
          %633 = vmatprep.subr.mxu0 0.0
          %634 = vmatpush1.msra.mxu0 0.0
          %635 = vmatprep.subr.mxu0 0.0
          %636 = vmatpush1.msra.mxu0 0.0
          %637 = vmatprep.subr.mxu0 0.0
          %638 = vmatpush1.msra.mxu0 0.0
          %639 = vmatprep.subr.mxu0 0.0
          %640 = vmatpush1.msra.mxu0 0.0
          %641 = vmatprep.mubr.f32.mxu0 0.0
          %642 = vmatmul.mubr.f32.gmra.mrb[0].mxu0 %v575
          %v643 = vpop.f32.mrb[0].mxu0
          %v644 = vadd.f32 %v571, %v643
          %v645 = vpop.f32.mrb[0].mxu0
          %646 = vdwg.mxu0
          %s647 = smul.u32 %s40, 8
          %s648 = scalar_lea.vmem [#allocation2], %s647
          %649 = vst.msk [vmem:[%s648] sm:$0xff] %vm573, %v644
          %s650 = scalar_lea.vmem [#allocation3], %s647
          %651 = vst.msk [vmem:[%s650] sm:$0xff] %vm573, 0.0
        $region96: #{tpu_custom_call.1} parent=63 // pred_fallthru
          _
        %v652 = vld [vmem:[%s480] sm:$0xff]
        %s653 = smul.u32 %s40, 32
        %s654 = scalar_lea.vmem [#allocation13], %s653
        %v655 = vld [vmem:[%s654] sm:$0xff]
        %v656 = vld [vmem:[%s654 + $0x8] sm:$0xff]
        %v657 = vld [vmem:[%s654 + $0x10] sm:$0xff]
        %v658 = vld [vmem:[%s654 + $0x18] sm:$0xff]
        %s659 = scalar_lea.vmem %s6, %s40
        %v660 = vld [vmem:[%s659] sm:$0x1]
        %v662 = vlaneseq
        %v663 = vshrl.u32 %v662, 7
        %v664 = vsub.s32 0, %v663
        %v665 = vrot.slane %v660, %v664
        %vm667 = vcmask 261120
        %v669 = vsel %vm667, %v652, 0
        %671 = vmatprep.subr.mxu0 0.0
        %672 = vmatpush1.msra.mxu0 %v655
        %673 = vmatprep.subr.mxu0 0.0
        %674 = vmatpush1.msra.mxu0 %v656
        %675 = vmatprep.subr.mxu0 0.0
        %676 = vmatpush1.msra.mxu0 %v657
        %677 = vmatprep.subr.mxu0 0.0
        %678 = vmatpush1.msra.mxu0 %v658
        %679 = vmatprep.subr.mxu0 0.0
        %680 = vmatpush1.msra.mxu0 0.0
        %681 = vmatprep.subr.mxu0 0.0
        %682 = vmatpush1.msra.mxu0 0.0
        %683 = vmatprep.subr.mxu0 0.0
        %684 = vmatpush1.msra.mxu0 0.0
        %685 = vmatprep.subr.mxu0 0.0
        %686 = vmatpush1.msra.mxu0 0.0
        %687 = vmatprep.subr.mxu0 0.0
        %688 = vmatpush1.msra.mxu0 0.0
        %689 = vmatprep.subr.mxu0 0.0
        %690 = vmatpush1.msra.mxu0 0.0
        %691 = vmatprep.subr.mxu0 0.0
        %692 = vmatpush1.msra.mxu0 0.0
        %693 = vmatprep.subr.mxu0 0.0
        %694 = vmatpush1.msra.mxu0 0.0
        %695 = vmatprep.subr.mxu0 0.0
        %696 = vmatpush1.msra.mxu0 0.0
        %697 = vmatprep.subr.mxu0 0.0
        %698 = vmatpush1.msra.mxu0 0.0
        %699 = vmatprep.subr.mxu0 0.0
        %700 = vmatpush1.msra.mxu0 0.0
        %701 = vmatprep.subr.mxu0 0.0
        %702 = vmatpush1.msra.mxu0 0.0
        %703 = vmatprep.subr.mxu0 0.0
        %704 = vmatpush1.msra.mxu0 0.0
        %705 = vmatprep.subr.mxu0 0.0
        %706 = vmatpush1.msra.mxu0 0.0
        %707 = vmatprep.subr.mxu0 0.0
        %708 = vmatpush1.msra.mxu0 0.0
        %709 = vmatprep.subr.mxu0 0.0
        %710 = vmatpush1.msra.mxu0 0.0
        %711 = vmatprep.subr.mxu0 0.0
        %712 = vmatpush1.msra.mxu0 0.0
        %713 = vmatprep.subr.mxu0 0.0
        %714 = vmatpush1.msra.mxu0 0.0
        %715 = vmatprep.subr.mxu0 0.0
        %716 = vmatpush1.msra.mxu0 0.0
        %717 = vmatprep.subr.mxu0 0.0
        %718 = vmatpush1.msra.mxu0 0.0
        %719 = vmatprep.subr.mxu0 0.0
        %720 = vmatpush1.msra.mxu0 0.0
        %721 = vmatprep.subr.mxu0 0.0
        %722 = vmatpush1.msra.mxu0 0.0
        %723 = vmatprep.subr.mxu0 0.0
        %724 = vmatpush1.msra.mxu0 0.0
        %725 = vmatprep.subr.mxu0 0.0
        %726 = vmatpush1.msra.mxu0 0.0
        %727 = vmatprep.subr.mxu0 0.0
        %728 = vmatpush1.msra.mxu0 0.0
        %729 = vmatprep.subr.mxu0 0.0
        %730 = vmatpush1.msra.mxu0 0.0
        %731 = vmatprep.subr.mxu0 0.0
        %732 = vmatpush1.msra.mxu0 0.0
        %733 = vmatprep.subr.mxu0 0.0
        %734 = vmatpush1.msra.mxu0 0.0
        %735 = vmatprep.mubr.f32.mxu0 0.0
        %736 = vmatmul.mubr.f32.gmra.mrb[0].mxu0 %v669
        %v737 = vpop.f32.mrb[0].mxu0
        %v738 = vadd.f32 %v665, %v737
        %v739 = vpop.f32.mrb[0].mxu0
        %740 = vdwg.mxu0
        %v741 = vld [vmem:[%s489] sm:$0xff]
        %s742 = scalar_lea.vmem [#allocation14], %s653
        %v743 = vld [vmem:[%s742] sm:$0xff]
        %v744 = vld [vmem:[%s742 + $0x8] sm:$0xff]
        %v745 = vld [vmem:[%s742 + $0x10] sm:$0xff]
        %v746 = vld [vmem:[%s742 + $0x18] sm:$0xff]
        %s747 = scalar_lea.vmem [#allocation16], %s40
        %v748 = vld [vmem:[%s747] sm:$0x1]
        %v750 = vlaneseq
        %v751 = vshrl.u32 %v750, 7
        %v752 = vsub.s32 0, %v751
        %v753 = vrot.slane %v748, %v752
        %v756 = vsel %vm667, %v741, 0
        %758 = vmatprep.subr.mxu0 0.0
        %759 = vmatpush1.msra.mxu0 %v743
        %760 = vmatprep.subr.mxu0 0.0
        %761 = vmatpush1.msra.mxu0 %v744
        %762 = vmatprep.subr.mxu0 0.0
        %763 = vmatpush1.msra.mxu0 %v745
        %764 = vmatprep.subr.mxu0 0.0
        %765 = vmatpush1.msra.mxu0 %v746
        %766 = vmatprep.subr.mxu0 0.0
        %767 = vmatpush1.msra.mxu0 0.0
        %768 = vmatprep.subr.mxu0 0.0
        %769 = vmatpush1.msra.mxu0 0.0
        %770 = vmatprep.subr.mxu0 0.0
        %771 = vmatpush1.msra.mxu0 0.0
        %772 = vmatprep.subr.mxu0 0.0
        %773 = vmatpush1.msra.mxu0 0.0
        %774 = vmatprep.subr.mxu0 0.0
        %775 = vmatpush1.msra.mxu0 0.0
        %776 = vmatprep.subr.mxu0 0.0
        %777 = vmatpush1.msra.mxu0 0.0
        %778 = vmatprep.subr.mxu0 0.0
        %779 = vmatpush1.msra.mxu0 0.0
        %780 = vmatprep.subr.mxu0 0.0
        %781 = vmatpush1.msra.mxu0 0.0
        %782 = vmatprep.subr.mxu0 0.0
        %783 = vmatpush1.msra.mxu0 0.0
        %784 = vmatprep.subr.mxu0 0.0
        %785 = vmatpush1.msra.mxu0 0.0
        %786 = vmatprep.subr.mxu0 0.0
        %787 = vmatpush1.msra.mxu0 0.0
        %788 = vmatprep.subr.mxu0 0.0
        %789 = vmatpush1.msra.mxu0 0.0
        %790 = vmatprep.subr.mxu0 0.0
        %791 = vmatpush1.msra.mxu0 0.0
        %792 = vmatprep.subr.mxu0 0.0
        %793 = vmatpush1.msra.mxu0 0.0
        %794 = vmatprep.subr.mxu0 0.0
        %795 = vmatpush1.msra.mxu0 0.0
        %796 = vmatprep.subr.mxu0 0.0
        %797 = vmatpush1.msra.mxu0 0.0
        %798 = vmatprep.subr.mxu0 0.0
        %799 = vmatpush1.msra.mxu0 0.0
        %800 = vmatprep.subr.mxu0 0.0
        %801 = vmatpush1.msra.mxu0 0.0
        %802 = vmatprep.subr.mxu0 0.0
        %803 = vmatpush1.msra.mxu0 0.0
        %804 = vmatprep.subr.mxu0 0.0
        %805 = vmatpush1.msra.mxu0 0.0
        %806 = vmatprep.subr.mxu0 0.0
        %807 = vmatpush1.msra.mxu0 0.0
        %808 = vmatprep.subr.mxu0 0.0
        %809 = vmatpush1.msra.mxu0 0.0
        %810 = vmatprep.subr.mxu0 0.0
        %811 = vmatpush1.msra.mxu0 0.0
        %812 = vmatprep.subr.mxu0 0.0
        %813 = vmatpush1.msra.mxu0 0.0
        %814 = vmatprep.subr.mxu0 0.0
        %815 = vmatpush1.msra.mxu0 0.0
        %816 = vmatprep.subr.mxu0 0.0
        %817 = vmatpush1.msra.mxu0 0.0
        %818 = vmatprep.subr.mxu0 0.0
        %819 = vmatpush1.msra.mxu0 0.0
        %820 = vmatprep.subr.mxu0 0.0
        %821 = vmatpush1.msra.mxu0 0.0
        %822 = vmatprep.mubr.f32.mxu0 0.0
        %823 = vmatmul.mubr.f32.gmra.mrb[0].mxu0 %v756
        %v824 = vpop.f32.mrb[0].mxu0
        %v825 = vadd.f32 %v753, %v824
        %v826 = vpop.f32.mrb[0].mxu0
        %827 = vdwg.mxu0
        %s828 = smul.u32 %s40, 8
        %s829 = scalar_lea.vmem [#allocation2], %s828
        %v830 = vld [vmem:[%s829] sm:$0xff]
        %vm831 = vcmask 64512
        %v833 = vsel %vm831, %v830, 0
        %v836 = vsel %vm831, %v738, 0
        %838 = vmatprep.subr.mxu0 0.0
        %839 = vmatpush1.xpose.msra.mxu0 %v836
        %840 = vmatprep.subr.mxu0 0.0
        %841 = vmatpush1.xpose.msra.mxu0 0.0
        %842 = vmatprep.subr.mxu0 0.0
        %843 = vmatpush1.xpose.msra.mxu0 0.0
        %844 = vmatprep.subr.mxu0 0.0
        %845 = vmatpush1.xpose.msra.mxu0 0.0
        %846 = vmatprep.subr.mxu0 0.0
        %847 = vmatpush1.xpose.msra.mxu0 0.0
        %848 = vmatprep.subr.mxu0 0.0
        %849 = vmatpush1.xpose.msra.mxu0 0.0
        %850 = vmatprep.subr.mxu0 0.0
        %851 = vmatpush1.xpose.msra.mxu0 0.0
        %852 = vmatprep.subr.mxu0 0.0
        %853 = vmatpush1.xpose.msra.mxu0 0.0
        %854 = vmatprep.subr.mxu0 0.0
        %855 = vmatpush1.xpose.msra.mxu0 0.0
        %856 = vmatprep.subr.mxu0 0.0
        %857 = vmatpush1.xpose.msra.mxu0 0.0
        %858 = vmatprep.subr.mxu0 0.0
        %859 = vmatpush1.xpose.msra.mxu0 0.0
        %860 = vmatprep.subr.mxu0 0.0
        %861 = vmatpush1.xpose.msra.mxu0 0.0
        %862 = vmatprep.subr.mxu0 0.0
        %863 = vmatpush1.xpose.msra.mxu0 0.0
        %864 = vmatprep.subr.mxu0 0.0
        %865 = vmatpush1.xpose.msra.mxu0 0.0
        %866 = vmatprep.subr.mxu0 0.0
        %867 = vmatpush1.xpose.msra.mxu0 0.0
        %868 = vmatprep.subr.mxu0 0.0
        %869 = vmatpush1.xpose.msra.mxu0 0.0
        %870 = vmatprep.subr.mxu0 0.0
        %871 = vmatpush1.xpose.msra.mxu0 0.0
        %872 = vmatprep.subr.mxu0 0.0
        %873 = vmatpush1.xpose.msra.mxu0 0.0
        %874 = vmatprep.subr.mxu0 0.0
        %875 = vmatpush1.xpose.msra.mxu0 0.0
        %876 = vmatprep.subr.mxu0 0.0
        %877 = vmatpush1.xpose.msra.mxu0 0.0
        %878 = vmatprep.subr.mxu0 0.0
        %879 = vmatpush1.xpose.msra.mxu0 0.0
        %880 = vmatprep.subr.mxu0 0.0
        %881 = vmatpush1.xpose.msra.mxu0 0.0
        %882 = vmatprep.subr.mxu0 0.0
        %883 = vmatpush1.xpose.msra.mxu0 0.0
        %884 = vmatprep.subr.mxu0 0.0
        %885 = vmatpush1.xpose.msra.mxu0 0.0
        %886 = vmatprep.subr.mxu0 0.0
        %887 = vmatpush1.xpose.msra.mxu0 0.0
        %888 = vmatprep.subr.mxu0 0.0
        %889 = vmatpush1.xpose.msra.mxu0 0.0
        %890 = vmatprep.subr.mxu0 0.0
        %891 = vmatpush1.xpose.msra.mxu0 0.0
        %892 = vmatprep.subr.mxu0 0.0
        %893 = vmatpush1.xpose.msra.mxu0 0.0
        %894 = vmatprep.subr.mxu0 0.0
        %895 = vmatpush1.xpose.msra.mxu0 0.0
        %896 = vmatprep.subr.mxu0 0.0
        %897 = vmatpush1.xpose.msra.mxu0 0.0
        %898 = vmatprep.subr.mxu0 0.0
        %899 = vmatpush1.xpose.msra.mxu0 0.0
        %900 = vmatprep.subr.mxu0 0.0
        %901 = vmatpush1.xpose.msra.mxu0 0.0
        %902 = vmatprep.mubr.f32.mxu0 0.0
        %903 = vmatmul.mubr.f32.gmra.mrb[0].mxu0 %v833
        %v904 = vpop.f32.mrb[0].mxu0
        %v905 = vadd.f32 0.0, %v904
        %v906 = vpop.f32.mrb[0].mxu0
        %907 = vdwg.mxu0
        %v908 = vmul.f32 %v905, 0.35355338
        %v909 = vsel %vm831, %v908, -inf
        %v910 = vrot.slane %v909, 4
        %v911 = vmax.f32 %v909, %v910
        %v912 = vrot.slane %v911, 2
        %v913 = vmax.f32 %v911, %v912
        %v914 = vrot.slane %v913, 1
        %v915 = vmax.f32 %v913, %v914
        %v916 = vsub.f32 %v908, %v915
        %v917 = vmul.f32 %v916, 1.442695
        %v918 = vpow.pop %v917
        %v919 = vsel %vm831, %v918, 0.0
        %v920 = vrot.slane %v919, 4
        %v921 = vadd.f32 %v919, %v920
        %v922 = vrot.slane %v921, 2
        %v923 = vadd.f32 %v921, %v922
        %v924 = vrot.slane %v923, 1
        %v925 = vadd.f32 %v923, %v924
        %v926 = vrcp.pop %v925
        %v927 = vmul.f32 %v918, %v926
        %v929 = vsel %vm831, %v927, 0
        %931 = vmatprep.subr.mxu0 0.0
        %932 = vmatpush1.msra.mxu0 %v825
        %933 = vmatprep.subr.mxu0 0.0
        %934 = vmatpush1.msra.mxu0 0.0
        %935 = vmatprep.subr.mxu0 0.0
        %936 = vmatpush1.msra.mxu0 0.0
        %937 = vmatprep.subr.mxu0 0.0
        %938 = vmatpush1.msra.mxu0 0.0
        %939 = vmatprep.subr.mxu0 0.0
        %940 = vmatpush1.msra.mxu0 0.0
        %941 = vmatprep.subr.mxu0 0.0
        %942 = vmatpush1.msra.mxu0 0.0
        %943 = vmatprep.subr.mxu0 0.0
        %944 = vmatpush1.msra.mxu0 0.0
        %945 = vmatprep.subr.mxu0 0.0
        %946 = vmatpush1.msra.mxu0 0.0
        %947 = vmatprep.subr.mxu0 0.0
        %948 = vmatpush1.msra.mxu0 0.0
        %949 = vmatprep.subr.mxu0 0.0
        %950 = vmatpush1.msra.mxu0 0.0
        %951 = vmatprep.subr.mxu0 0.0
        %952 = vmatpush1.msra.mxu0 0.0
        %953 = vmatprep.subr.mxu0 0.0
        %954 = vmatpush1.msra.mxu0 0.0
        %955 = vmatprep.subr.mxu0 0.0
        %956 = vmatpush1.msra.mxu0 0.0
        %957 = vmatprep.subr.mxu0 0.0
        %958 = vmatpush1.msra.mxu0 0.0
        %959 = vmatprep.subr.mxu0 0.0
        %960 = vmatpush1.msra.mxu0 0.0
        %961 = vmatprep.subr.mxu0 0.0
        %962 = vmatpush1.msra.mxu0 0.0
        %963 = vmatprep.subr.mxu0 0.0
        %964 = vmatpush1.msra.mxu0 0.0
        %965 = vmatprep.subr.mxu0 0.0
        %966 = vmatpush1.msra.mxu0 0.0
        %967 = vmatprep.subr.mxu0 0.0
        %968 = vmatpush1.msra.mxu0 0.0
        %969 = vmatprep.subr.mxu0 0.0
        %970 = vmatpush1.msra.mxu0 0.0
        %971 = vmatprep.subr.mxu0 0.0
        %972 = vmatpush1.msra.mxu0 0.0
        %973 = vmatprep.subr.mxu0 0.0
        %974 = vmatpush1.msra.mxu0 0.0
        %975 = vmatprep.subr.mxu0 0.0
        %976 = vmatpush1.msra.mxu0 0.0
        %977 = vmatprep.subr.mxu0 0.0
        %978 = vmatpush1.msra.mxu0 0.0
        %979 = vmatprep.subr.mxu0 0.0
        %980 = vmatpush1.msra.mxu0 0.0
        %981 = vmatprep.subr.mxu0 0.0
        %982 = vmatpush1.msra.mxu0 0.0
        %983 = vmatprep.subr.mxu0 0.0
        %984 = vmatpush1.msra.mxu0 0.0
        %985 = vmatprep.subr.mxu0 0.0
        %986 = vmatpush1.msra.mxu0 0.0
        %987 = vmatprep.subr.mxu0 0.0
        %988 = vmatpush1.msra.mxu0 0.0
        %989 = vmatprep.subr.mxu0 0.0
        %990 = vmatpush1.msra.mxu0 0.0
        %991 = vmatprep.subr.mxu0 0.0
        %992 = vmatpush1.msra.mxu0 0.0
        %993 = vmatprep.subr.mxu0 0.0
        %994 = vmatpush1.msra.mxu0 0.0
        %995 = vmatprep.mubr.f32.mxu0 0.0
        %996 = vmatmul.mubr.f32.gmra.mrb[0].mxu0 %v929
        %v997 = vpop.f32.mrb[0].mxu0
        %v998 = vadd.f32 0.0, %v997
        %v999 = vpop.f32.mrb[0].mxu0
        %1000 = vdwg.mxu0
        %1001 = vrot.lane.b32.xlu0 %v830, 120
        %v1002 = vpop.permute.xlu0 %1001
        %1003 = vrot.lane.b32.xlu0 %v738, 120
        %v1004 = vpop.permute.xlu0 %1003
        %v1005 = vsel %vm831, %v1002, 0
        %v1007 = vsel %vm831, %v1004, 0
        %1009 = vmatprep.subr.mxu0 0.0
        %1010 = vmatpush1.xpose.msra.mxu0 %v1007
        %1011 = vmatprep.subr.mxu0 0.0
        %1012 = vmatpush1.xpose.msra.mxu0 0.0
        %1013 = vmatprep.subr.mxu0 0.0
        %1014 = vmatpush1.xpose.msra.mxu0 0.0
        %1015 = vmatprep.subr.mxu0 0.0
        %1016 = vmatpush1.xpose.msra.mxu0 0.0
        %1017 = vmatprep.subr.mxu0 0.0
        %1018 = vmatpush1.xpose.msra.mxu0 0.0
        %1019 = vmatprep.subr.mxu0 0.0
        %1020 = vmatpush1.xpose.msra.mxu0 0.0
        %1021 = vmatprep.subr.mxu0 0.0
        %1022 = vmatpush1.xpose.msra.mxu0 0.0
        %1023 = vmatprep.subr.mxu0 0.0
        %1024 = vmatpush1.xpose.msra.mxu0 0.0
        %1025 = vmatprep.subr.mxu0 0.0
        %1026 = vmatpush1.xpose.msra.mxu0 0.0
        %1027 = vmatprep.subr.mxu0 0.0
        %1028 = vmatpush1.xpose.msra.mxu0 0.0
        %1029 = vmatprep.subr.mxu0 0.0
        %1030 = vmatpush1.xpose.msra.mxu0 0.0
        %1031 = vmatprep.subr.mxu0 0.0
        %1032 = vmatpush1.xpose.msra.mxu0 0.0
        %1033 = vmatprep.subr.mxu0 0.0
        %1034 = vmatpush1.xpose.msra.mxu0 0.0
        %1035 = vmatprep.subr.mxu0 0.0
        %1036 = vmatpush1.xpose.msra.mxu0 0.0
        %1037 = vmatprep.subr.mxu0 0.0
        %1038 = vmatpush1.xpose.msra.mxu0 0.0
        %1039 = vmatprep.subr.mxu0 0.0
        %1040 = vmatpush1.xpose.msra.mxu0 0.0
        %1041 = vmatprep.subr.mxu0 0.0
        %1042 = vmatpush1.xpose.msra.mxu0 0.0
        %1043 = vmatprep.subr.mxu0 0.0
        %1044 = vmatpush1.xpose.msra.mxu0 0.0
        %1045 = vmatprep.subr.mxu0 0.0
        %1046 = vmatpush1.xpose.msra.mxu0 0.0
        %1047 = vmatprep.subr.mxu0 0.0
        %1048 = vmatpush1.xpose.msra.mxu0 0.0
        %1049 = vmatprep.subr.mxu0 0.0
        %1050 = vmatpush1.xpose.msra.mxu0 0.0
        %1051 = vmatprep.subr.mxu0 0.0
        %1052 = vmatpush1.xpose.msra.mxu0 0.0
        %1053 = vmatprep.subr.mxu0 0.0
        %1054 = vmatpush1.xpose.msra.mxu0 0.0
        %1055 = vmatprep.subr.mxu0 0.0
        %1056 = vmatpush1.xpose.msra.mxu0 0.0
        %1057 = vmatprep.subr.mxu0 0.0
        %1058 = vmatpush1.xpose.msra.mxu0 0.0
        %1059 = vmatprep.subr.mxu0 0.0
        %1060 = vmatpush1.xpose.msra.mxu0 0.0
        %1061 = vmatprep.subr.mxu0 0.0
        %1062 = vmatpush1.xpose.msra.mxu0 0.0
        %1063 = vmatprep.subr.mxu0 0.0
        %1064 = vmatpush1.xpose.msra.mxu0 0.0
        %1065 = vmatprep.subr.mxu0 0.0
        %1066 = vmatpush1.xpose.msra.mxu0 0.0
        %1067 = vmatprep.subr.mxu0 0.0
        %1068 = vmatpush1.xpose.msra.mxu0 0.0
        %1069 = vmatprep.subr.mxu0 0.0
        %1070 = vmatpush1.xpose.msra.mxu0 0.0
        %1071 = vmatprep.subr.mxu0 0.0
        %1072 = vmatpush1.xpose.msra.mxu0 0.0
        %1073 = vmatprep.mubr.f32.mxu0 0.0
        %1074 = vmatmul.mubr.f32.gmra.mrb[0].mxu0 %v1005
        %v1075 = vpop.f32.mrb[0].mxu0
        %v1076 = vadd.f32 0.0, %v1075
        %v1077 = vpop.f32.mrb[0].mxu0
        %1078 = vdwg.mxu0
        %v1079 = vmul.f32 %v1076, 0.35355338
        %v1080 = vsel %vm831, %v1079, -inf
        %v1081 = vrot.slane %v1080, 4
        %v1082 = vmax.f32 %v1080, %v1081
        %v1083 = vrot.slane %v1082, 2
        %v1084 = vmax.f32 %v1082, %v1083
        %v1085 = vrot.slane %v1084, 1
        %v1086 = vmax.f32 %v1084, %v1085
        %v1087 = vsub.f32 %v1079, %v1086
        %v1088 = vmul.f32 %v1087, 1.442695
        %v1089 = vpow.pop %v1088
        %v1090 = vsel %vm831, %v1089, 0.0
        %v1091 = vrot.slane %v1090, 4
        %v1092 = vadd.f32 %v1090, %v1091
        %v1093 = vrot.slane %v1092, 2
        %v1094 = vadd.f32 %v1092, %v1093
        %v1095 = vrot.slane %v1094, 1
        %v1096 = vadd.f32 %v1094, %v1095
        %v1097 = vrcp.pop %v1096
        %v1098 = vmul.f32 %v1089, %v1097
        %1100 = vrot.lane.b32.xlu0 %v825, 120
        %v1101 = vpop.permute.xlu0 %1100
        %v1104 = vsel %vm831, %v1098, 0
        %1106 = vmatprep.subr.mxu0 0.0
        %1107 = vmatpush1.msra.mxu0 %v1101
        %1108 = vmatprep.subr.mxu0 0.0
        %1109 = vmatpush1.msra.mxu0 0.0
        %1110 = vmatprep.subr.mxu0 0.0
        %1111 = vmatpush1.msra.mxu0 0.0
        %1112 = vmatprep.subr.mxu0 0.0
        %1113 = vmatpush1.msra.mxu0 0.0
        %1114 = vmatprep.subr.mxu0 0.0
        %1115 = vmatpush1.msra.mxu0 0.0
        %1116 = vmatprep.subr.mxu0 0.0
        %1117 = vmatpush1.msra.mxu0 0.0
        %1118 = vmatprep.subr.mxu0 0.0
        %1119 = vmatpush1.msra.mxu0 0.0
        %1120 = vmatprep.subr.mxu0 0.0
        %1121 = vmatpush1.msra.mxu0 0.0
        %1122 = vmatprep.subr.mxu0 0.0
        %1123 = vmatpush1.msra.mxu0 0.0
        %1124 = vmatprep.subr.mxu0 0.0
        %1125 = vmatpush1.msra.mxu0 0.0
        %1126 = vmatprep.subr.mxu0 0.0
        %1127 = vmatpush1.msra.mxu0 0.0
        %1128 = vmatprep.subr.mxu0 0.0
        %1129 = vmatpush1.msra.mxu0 0.0
        %1130 = vmatprep.subr.mxu0 0.0
        %1131 = vmatpush1.msra.mxu0 0.0
        %1132 = vmatprep.subr.mxu0 0.0
        %1133 = vmatpush1.msra.mxu0 0.0
        %1134 = vmatprep.subr.mxu0 0.0
        %1135 = vmatpush1.msra.mxu0 0.0
        %1136 = vmatprep.subr.mxu0 0.0
        %1137 = vmatpush1.msra.mxu0 0.0
        %1138 = vmatprep.subr.mxu0 0.0
        %1139 = vmatpush1.msra.mxu0 0.0
        %1140 = vmatprep.subr.mxu0 0.0
        %1141 = vmatpush1.msra.mxu0 0.0
        %1142 = vmatprep.subr.mxu0 0.0
        %1143 = vmatpush1.msra.mxu0 0.0
        %1144 = vmatprep.subr.mxu0 0.0
        %1145 = vmatpush1.msra.mxu0 0.0
        %1146 = vmatprep.subr.mxu0 0.0
        %1147 = vmatpush1.msra.mxu0 0.0
        %1148 = vmatprep.subr.mxu0 0.0
        %1149 = vmatpush1.msra.mxu0 0.0
        %1150 = vmatprep.subr.mxu0 0.0
        %1151 = vmatpush1.msra.mxu0 0.0
        %1152 = vmatprep.subr.mxu0 0.0
        %1153 = vmatpush1.msra.mxu0 0.0
        %1154 = vmatprep.subr.mxu0 0.0
        %1155 = vmatpush1.msra.mxu0 0.0
        %1156 = vmatprep.subr.mxu0 0.0
        %1157 = vmatpush1.msra.mxu0 0.0
        %1158 = vmatprep.subr.mxu0 0.0
        %1159 = vmatpush1.msra.mxu0 0.0
        %1160 = vmatprep.subr.mxu0 0.0
        %1161 = vmatpush1.msra.mxu0 0.0
        %1162 = vmatprep.subr.mxu0 0.0
        %1163 = vmatpush1.msra.mxu0 0.0
        %1164 = vmatprep.subr.mxu0 0.0
        %1165 = vmatpush1.msra.mxu0 0.0
        %1166 = vmatprep.subr.mxu0 0.0
        %1167 = vmatpush1.msra.mxu0 0.0
        %1168 = vmatprep.subr.mxu0 0.0
        %1169 = vmatpush1.msra.mxu0 0.0
        %1170 = vmatprep.mubr.f32.mxu0 0.0
        %1171 = vmatmul.mubr.f32.gmra.mrb[0].mxu0 %v1104
        %v1172 = vpop.f32.mrb[0].mxu0
        %v1173 = vadd.f32 0.0, %v1172
        %v1174 = vpop.f32.mrb[0].mxu0
        %1175 = vdwg.mxu0
        %1176 = vrot.lane.b32.xlu0 %v830, 112
        %v1177 = vpop.permute.xlu0 %1176
        %1178 = vrot.lane.b32.xlu0 %v738, 112
        %v1179 = vpop.permute.xlu0 %1178
        %v1180 = vsel %vm831, %v1177, 0
        %v1182 = vsel %vm831, %v1179, 0
        %1184 = vmatprep.subr.mxu0 0.0
        %1185 = vmatpush1.xpose.msra.mxu0 %v1182
        %1186 = vmatprep.subr.mxu0 0.0
        %1187 = vmatpush1.xpose.msra.mxu0 0.0
        %1188 = vmatprep.subr.mxu0 0.0
        %1189 = vmatpush1.xpose.msra.mxu0 0.0
        %1190 = vmatprep.subr.mxu0 0.0
        %1191 = vmatpush1.xpose.msra.mxu0 0.0
        %1192 = vmatprep.subr.mxu0 0.0
        %1193 = vmatpush1.xpose.msra.mxu0 0.0
        %1194 = vmatprep.subr.mxu0 0.0
        %1195 = vmatpush1.xpose.msra.mxu0 0.0
        %1196 = vmatprep.subr.mxu0 0.0
        %1197 = vmatpush1.xpose.msra.mxu0 0.0
        %1198 = vmatprep.subr.mxu0 0.0
        %1199 = vmatpush1.xpose.msra.mxu0 0.0
        %1200 = vmatprep.subr.mxu0 0.0
        %1201 = vmatpush1.xpose.msra.mxu0 0.0
        %1202 = vmatprep.subr.mxu0 0.0
        %1203 = vmatpush1.xpose.msra.mxu0 0.0
        %1204 = vmatprep.subr.mxu0 0.0
        %1205 = vmatpush1.xpose.msra.mxu0 0.0
        %1206 = vmatprep.subr.mxu0 0.0
        %1207 = vmatpush1.xpose.msra.mxu0 0.0
        %1208 = vmatprep.subr.mxu0 0.0
        %1209 = vmatpush1.xpose.msra.mxu0 0.0
        %1210 = vmatprep.subr.mxu0 0.0
        %1211 = vmatpush1.xpose.msra.mxu0 0.0
        %1212 = vmatprep.subr.mxu0 0.0
        %1213 = vmatpush1.xpose.msra.mxu0 0.0
        %1214 = vmatprep.subr.mxu0 0.0
        %1215 = vmatpush1.xpose.msra.mxu0 0.0
        %1216 = vmatprep.subr.mxu0 0.0
        %1217 = vmatpush1.xpose.msra.mxu0 0.0
        %1218 = vmatprep.subr.mxu0 0.0
        %1219 = vmatpush1.xpose.msra.mxu0 0.0
        %1220 = vmatprep.subr.mxu0 0.0
        %1221 = vmatpush1.xpose.msra.mxu0 0.0
        %1222 = vmatprep.subr.mxu0 0.0
        %1223 = vmatpush1.xpose.msra.mxu0 0.0
        %1224 = vmatprep.subr.mxu0 0.0
        %1225 = vmatpush1.xpose.msra.mxu0 0.0
        %1226 = vmatprep.subr.mxu0 0.0
        %1227 = vmatpush1.xpose.msra.mxu0 0.0
        %1228 = vmatprep.subr.mxu0 0.0
        %1229 = vmatpush1.xpose.msra.mxu0 0.0
        %1230 = vmatprep.subr.mxu0 0.0
        %1231 = vmatpush1.xpose.msra.mxu0 0.0
        %1232 = vmatprep.subr.mxu0 0.0
        %1233 = vmatpush1.xpose.msra.mxu0 0.0
        %1234 = vmatprep.subr.mxu0 0.0
        %1235 = vmatpush1.xpose.msra.mxu0 0.0
        %1236 = vmatprep.subr.mxu0 0.0
        %1237 = vmatpush1.xpose.msra.mxu0 0.0
        %1238 = vmatprep.subr.mxu0 0.0
        %1239 = vmatpush1.xpose.msra.mxu0 0.0
        %1240 = vmatprep.subr.mxu0 0.0
        %1241 = vmatpush1.xpose.msra.mxu0 0.0
        %1242 = vmatprep.subr.mxu0 0.0
        %1243 = vmatpush1.xpose.msra.mxu0 0.0
        %1244 = vmatprep.subr.mxu0 0.0
        %1245 = vmatpush1.xpose.msra.mxu0 0.0
        %1246 = vmatprep.subr.mxu0 0.0
        %1247 = vmatpush1.xpose.msra.mxu0 0.0
        %1248 = vmatprep.mubr.f32.mxu0 0.0
        %1249 = vmatmul.mubr.f32.gmra.mrb[0].mxu0 %v1180
        %v1250 = vpop.f32.mrb[0].mxu0
        %v1251 = vadd.f32 0.0, %v1250
        %v1252 = vpop.f32.mrb[0].mxu0
        %1253 = vdwg.mxu0
        %v1254 = vmul.f32 %v1251, 0.35355338
        %v1255 = vsel %vm831, %v1254, -inf
        %v1256 = vrot.slane %v1255, 4
        %v1257 = vmax.f32 %v1255, %v1256
        %v1258 = vrot.slane %v1257, 2
        %v1259 = vmax.f32 %v1257, %v1258
        %v1260 = vrot.slane %v1259, 1
        %v1261 = vmax.f32 %v1259, %v1260
        %v1262 = vsub.f32 %v1254, %v1261
        %v1263 = vmul.f32 %v1262, 1.442695
        %v1264 = vpow.pop %v1263
        %v1265 = vsel %vm831, %v1264, 0.0
        %v1266 = vrot.slane %v1265, 4
        %v1267 = vadd.f32 %v1265, %v1266
        %v1268 = vrot.slane %v1267, 2
        %v1269 = vadd.f32 %v1267, %v1268
        %v1270 = vrot.slane %v1269, 1
        %v1271 = vadd.f32 %v1269, %v1270
        %v1272 = vrcp.pop %v1271
        %v1273 = vmul.f32 %v1264, %v1272
        %1274 = vrot.lane.b32.xlu0 %v825, 112
        %v1275 = vpop.permute.xlu0 %1274
        %v1278 = vsel %vm831, %v1273, 0
        %1280 = vmatprep.subr.mxu0 0.0
        %1281 = vmatpush1.msra.mxu0 %v1275
        %1282 = vmatprep.subr.mxu0 0.0
        %1283 = vmatpush1.msra.mxu0 0.0
        %1284 = vmatprep.subr.mxu0 0.0
        %1285 = vmatpush1.msra.mxu0 0.0
        %1286 = vmatprep.subr.mxu0 0.0
        %1287 = vmatpush1.msra.mxu0 0.0
        %1288 = vmatprep.subr.mxu0 0.0
        %1289 = vmatpush1.msra.mxu0 0.0
        %1290 = vmatprep.subr.mxu0 0.0
        %1291 = vmatpush1.msra.mxu0 0.0
        %1292 = vmatprep.subr.mxu0 0.0
        %1293 = vmatpush1.msra.mxu0 0.0
        %1294 = vmatprep.subr.mxu0 0.0
        %1295 = vmatpush1.msra.mxu0 0.0
        %1296 = vmatprep.subr.mxu0 0.0
        %1297 = vmatpush1.msra.mxu0 0.0
        %1298 = vmatprep.subr.mxu0 0.0
        %1299 = vmatpush1.msra.mxu0 0.0
        %1300 = vmatprep.subr.mxu0 0.0
        %1301 = vmatpush1.msra.mxu0 0.0
        %1302 = vmatprep.subr.mxu0 0.0
        %1303 = vmatpush1.msra.mxu0 0.0
        %1304 = vmatprep.subr.mxu0 0.0
        %1305 = vmatpush1.msra.mxu0 0.0
        %1306 = vmatprep.subr.mxu0 0.0
        %1307 = vmatpush1.msra.mxu0 0.0
        %1308 = vmatprep.subr.mxu0 0.0
        %1309 = vmatpush1.msra.mxu0 0.0
        %1310 = vmatprep.subr.mxu0 0.0
        %1311 = vmatpush1.msra.mxu0 0.0
        %1312 = vmatprep.subr.mxu0 0.0
        %1313 = vmatpush1.msra.mxu0 0.0
        %1314 = vmatprep.subr.mxu0 0.0
        %1315 = vmatpush1.msra.mxu0 0.0
        %1316 = vmatprep.subr.mxu0 0.0
        %1317 = vmatpush1.msra.mxu0 0.0
        %1318 = vmatprep.subr.mxu0 0.0
        %1319 = vmatpush1.msra.mxu0 0.0
        %1320 = vmatprep.subr.mxu0 0.0
        %1321 = vmatpush1.msra.mxu0 0.0
        %1322 = vmatprep.subr.mxu0 0.0
        %1323 = vmatpush1.msra.mxu0 0.0
        %1324 = vmatprep.subr.mxu0 0.0
        %1325 = vmatpush1.msra.mxu0 0.0
        %1326 = vmatprep.subr.mxu0 0.0
        %1327 = vmatpush1.msra.mxu0 0.0
        %1328 = vmatprep.subr.mxu0 0.0
        %1329 = vmatpush1.msra.mxu0 0.0
        %1330 = vmatprep.subr.mxu0 0.0
        %1331 = vmatpush1.msra.mxu0 0.0
        %1332 = vmatprep.subr.mxu0 0.0
        %1333 = vmatpush1.msra.mxu0 0.0
        %1334 = vmatprep.subr.mxu0 0.0
        %1335 = vmatpush1.msra.mxu0 0.0
        %1336 = vmatprep.subr.mxu0 0.0
        %1337 = vmatpush1.msra.mxu0 0.0
        %1338 = vmatprep.subr.mxu0 0.0
        %1339 = vmatpush1.msra.mxu0 0.0
        %1340 = vmatprep.subr.mxu0 0.0
        %1341 = vmatpush1.msra.mxu0 0.0
        %1342 = vmatprep.subr.mxu0 0.0
        %1343 = vmatpush1.msra.mxu0 0.0
        %1344 = vmatprep.mubr.f32.mxu0 0.0
        %1345 = vmatmul.mubr.f32.gmra.mrb[0].mxu0 %v1278
        %v1346 = vpop.f32.mrb[0].mxu0
        %v1347 = vadd.f32 0.0, %v1346
        %v1348 = vpop.f32.mrb[0].mxu0
        %1349 = vdwg.mxu0
        %1350 = vrot.lane.b32.xlu0 %v830, 104
        %v1351 = vpop.permute.xlu0 %1350
        %1352 = vrot.lane.b32.xlu0 %v738, 104
        %v1353 = vpop.permute.xlu0 %1352
        %v1354 = vsel %vm831, %v1351, 0
        %v1356 = vsel %vm831, %v1353, 0
        %1358 = vmatprep.subr.mxu0 0.0
        %1359 = vmatpush1.xpose.msra.mxu0 %v1356
        %1360 = vmatprep.subr.mxu0 0.0
        %1361 = vmatpush1.xpose.msra.mxu0 0.0
        %1362 = vmatprep.subr.mxu0 0.0
        %1363 = vmatpush1.xpose.msra.mxu0 0.0
        %1364 = vmatprep.subr.mxu0 0.0
        %1365 = vmatpush1.xpose.msra.mxu0 0.0
        %1366 = vmatprep.subr.mxu0 0.0
        %1367 = vmatpush1.xpose.msra.mxu0 0.0
        %1368 = vmatprep.subr.mxu0 0.0
        %1369 = vmatpush1.xpose.msra.mxu0 0.0
        %1370 = vmatprep.subr.mxu0 0.0
        %1371 = vmatpush1.xpose.msra.mxu0 0.0
        %1372 = vmatprep.subr.mxu0 0.0
        %1373 = vmatpush1.xpose.msra.mxu0 0.0
        %1374 = vmatprep.subr.mxu0 0.0
        %1375 = vmatpush1.xpose.msra.mxu0 0.0
        %1376 = vmatprep.subr.mxu0 0.0
        %1377 = vmatpush1.xpose.msra.mxu0 0.0
        %1378 = vmatprep.subr.mxu0 0.0
        %1379 = vmatpush1.xpose.msra.mxu0 0.0
        %1380 = vmatprep.subr.mxu0 0.0
        %1381 = vmatpush1.xpose.msra.mxu0 0.0
        %1382 = vmatprep.subr.mxu0 0.0
        %1383 = vmatpush1.xpose.msra.mxu0 0.0
        %1384 = vmatprep.subr.mxu0 0.0
        %1385 = vmatpush1.xpose.msra.mxu0 0.0
        %1386 = vmatprep.subr.mxu0 0.0
        %1387 = vmatpush1.xpose.msra.mxu0 0.0
        %1388 = vmatprep.subr.mxu0 0.0
        %1389 = vmatpush1.xpose.msra.mxu0 0.0
        %1390 = vmatprep.subr.mxu0 0.0
        %1391 = vmatpush1.xpose.msra.mxu0 0.0
        %1392 = vmatprep.subr.mxu0 0.0
        %1393 = vmatpush1.xpose.msra.mxu0 0.0
        %1394 = vmatprep.subr.mxu0 0.0
        %1395 = vmatpush1.xpose.msra.mxu0 0.0
        %1396 = vmatprep.subr.mxu0 0.0
        %1397 = vmatpush1.xpose.msra.mxu0 0.0
        %1398 = vmatprep.subr.mxu0 0.0
        %1399 = vmatpush1.xpose.msra.mxu0 0.0
        %1400 = vmatprep.subr.mxu0 0.0
        %1401 = vmatpush1.xpose.msra.mxu0 0.0
        %1402 = vmatprep.subr.mxu0 0.0
        %1403 = vmatpush1.xpose.msra.mxu0 0.0
        %1404 = vmatprep.subr.mxu0 0.0
        %1405 = vmatpush1.xpose.msra.mxu0 0.0
        %1406 = vmatprep.subr.mxu0 0.0
        %1407 = vmatpush1.xpose.msra.mxu0 0.0
        %1408 = vmatprep.subr.mxu0 0.0
        %1409 = vmatpush1.xpose.msra.mxu0 0.0
        %1410 = vmatprep.subr.mxu0 0.0
        %1411 = vmatpush1.xpose.msra.mxu0 0.0
        %1412 = vmatprep.subr.mxu0 0.0
        %1413 = vmatpush1.xpose.msra.mxu0 0.0
        %1414 = vmatprep.subr.mxu0 0.0
        %1415 = vmatpush1.xpose.msra.mxu0 0.0
        %1416 = vmatprep.subr.mxu0 0.0
        %1417 = vmatpush1.xpose.msra.mxu0 0.0
        %1418 = vmatprep.subr.mxu0 0.0
        %1419 = vmatpush1.xpose.msra.mxu0 0.0
        %1420 = vmatprep.subr.mxu0 0.0
        %1421 = vmatpush1.xpose.msra.mxu0 0.0
        %1422 = vmatprep.mubr.f32.mxu0 0.0
        %1423 = vmatmul.mubr.f32.gmra.mrb[0].mxu0 %v1354
        %v1424 = vpop.f32.mrb[0].mxu0
        %v1425 = vadd.f32 0.0, %v1424
        %v1426 = vpop.f32.mrb[0].mxu0
        %1427 = vdwg.mxu0
        %v1428 = vmul.f32 %v1425, 0.35355338
        %v1429 = vsel %vm831, %v1428, -inf
        %v1430 = vrot.slane %v1429, 4
        %v1431 = vmax.f32 %v1429, %v1430
        %v1432 = vrot.slane %v1431, 2
        %v1433 = vmax.f32 %v1431, %v1432
        %v1434 = vrot.slane %v1433, 1
        %v1435 = vmax.f32 %v1433, %v1434
        %v1436 = vsub.f32 %v1428, %v1435
        %v1437 = vmul.f32 %v1436, 1.442695
        %v1438 = vpow.pop %v1437
        %v1439 = vsel %vm831, %v1438, 0.0
        %v1440 = vrot.slane %v1439, 4
        %v1441 = vadd.f32 %v1439, %v1440
        %v1442 = vrot.slane %v1441, 2
        %v1443 = vadd.f32 %v1441, %v1442
        %v1444 = vrot.slane %v1443, 1
        %v1445 = vadd.f32 %v1443, %v1444
        %v1446 = vrcp.pop %v1445
        %v1447 = vmul.f32 %v1438, %v1446
        %1448 = vrot.lane.b32.xlu0 %v825, 104
        %v1449 = vpop.permute.xlu0 %1448
        %v1452 = vsel %vm831, %v1447, 0
        %1454 = vmatprep.subr.mxu0 0.0
        %1455 = vmatpush1.msra.mxu0 %v1449
        %1456 = vmatprep.subr.mxu0 0.0
        %1457 = vmatpush1.msra.mxu0 0.0
        %1458 = vmatprep.subr.mxu0 0.0
        %1459 = vmatpush1.msra.mxu0 0.0
        %1460 = vmatprep.subr.mxu0 0.0
        %1461 = vmatpush1.msra.mxu0 0.0
        %1462 = vmatprep.subr.mxu0 0.0
        %1463 = vmatpush1.msra.mxu0 0.0
        %1464 = vmatprep.subr.mxu0 0.0
        %1465 = vmatpush1.msra.mxu0 0.0
        %1466 = vmatprep.subr.mxu0 0.0
        %1467 = vmatpush1.msra.mxu0 0.0
        %1468 = vmatprep.subr.mxu0 0.0
        %1469 = vmatpush1.msra.mxu0 0.0
        %1470 = vmatprep.subr.mxu0 0.0
        %1471 = vmatpush1.msra.mxu0 0.0
        %1472 = vmatprep.subr.mxu0 0.0
        %1473 = vmatpush1.msra.mxu0 0.0
        %1474 = vmatprep.subr.mxu0 0.0
        %1475 = vmatpush1.msra.mxu0 0.0
        %1476 = vmatprep.subr.mxu0 0.0
        %1477 = vmatpush1.msra.mxu0 0.0
        %1478 = vmatprep.subr.mxu0 0.0
        %1479 = vmatpush1.msra.mxu0 0.0
        %1480 = vmatprep.subr.mxu0 0.0
        %1481 = vmatpush1.msra.mxu0 0.0
        %1482 = vmatprep.subr.mxu0 0.0
        %1483 = vmatpush1.msra.mxu0 0.0
        %1484 = vmatprep.subr.mxu0 0.0
        %1485 = vmatpush1.msra.mxu0 0.0
        %1486 = vmatprep.subr.mxu0 0.0
        %1487 = vmatpush1.msra.mxu0 0.0
        %1488 = vmatprep.subr.mxu0 0.0
        %1489 = vmatpush1.msra.mxu0 0.0
        %1490 = vmatprep.subr.mxu0 0.0
        %1491 = vmatpush1.msra.mxu0 0.0
        %1492 = vmatprep.subr.mxu0 0.0
        %1493 = vmatpush1.msra.mxu0 0.0
        %1494 = vmatprep.subr.mxu0 0.0
        %1495 = vmatpush1.msra.mxu0 0.0
        %1496 = vmatprep.subr.mxu0 0.0
        %1497 = vmatpush1.msra.mxu0 0.0
        %1498 = vmatprep.subr.mxu0 0.0
        %1499 = vmatpush1.msra.mxu0 0.0
        %1500 = vmatprep.subr.mxu0 0.0
        %1501 = vmatpush1.msra.mxu0 0.0
        %1502 = vmatprep.subr.mxu0 0.0
        %1503 = vmatpush1.msra.mxu0 0.0
        %1504 = vmatprep.subr.mxu0 0.0
        %1505 = vmatpush1.msra.mxu0 0.0
        %1506 = vmatprep.subr.mxu0 0.0
        %1507 = vmatpush1.msra.mxu0 0.0
        %1508 = vmatprep.subr.mxu0 0.0
        %1509 = vmatpush1.msra.mxu0 0.0
        %1510 = vmatprep.subr.mxu0 0.0
        %1511 = vmatpush1.msra.mxu0 0.0
        %1512 = vmatprep.subr.mxu0 0.0
        %1513 = vmatpush1.msra.mxu0 0.0
        %1514 = vmatprep.subr.mxu0 0.0
        %1515 = vmatpush1.msra.mxu0 0.0
        %1516 = vmatprep.subr.mxu0 0.0
        %1517 = vmatpush1.msra.mxu0 0.0
        %1518 = vmatprep.mubr.f32.mxu0 0.0
        %1519 = vmatmul.mubr.f32.gmra.mrb[0].mxu0 %v1452
        %v1520 = vpop.f32.mrb[0].mxu0
        %v1521 = vadd.f32 0.0, %v1520
        %v1522 = vpop.f32.mrb[0].mxu0
        %1523 = vdwg.mxu0
        %1525 = vrot.lane.b32.xlu0 %v1173, 8
        %v1526 = vpop.permute.xlu0 %1525
        %1529 = vrot.lane.b32.xlu0 %v1347, 16
        %v1530 = vpop.permute.xlu0 %1529
        %1533 = vrot.lane.b32.xlu0 %v1521, 24
        %v1534 = vpop.permute.xlu0 %1533
        %v1536 = vsel %vm831, %v998, %v1526
        %vm1537 = vcmask 130048
        %v1538 = vsel %vm1537, %v1536, %v1530
        %vm1539 = vcmask 195584
        %v1540 = vsel %vm1539, %v1538, %v1534
        %s1541 = scalar_lea.vmem [#allocation3], %s828
        %v1542 = vld [vmem:[%s1541] sm:$0xff]
        %v1543 = vadd.f32 %v1542, %v1540
        %1544 = vst.msk [vmem:[%s1541] sm:$0xff] %vm667, %v1543
        %p1545 = scmp.eq.s32.totalorder %s40, 0
        %p1546 = pnand %p554, %p1545
        %p1547 = pneg %p1546
        // Predicated region
        $region97: #{tpu_custom_call.1} parent=63 // pred_check
          _
        $region98: #{tpu_custom_call.1} parent=63 // pred_check_branch
          %1549 = sbr.rel (%p1546) target = $region100
        $region99: #{tpu_custom_call.1} parent=63 // pred_region
          %1550 = vst.msk [vmem:[#allocation4] sm:$0xff] %vm667, 0.0
        $region100: #{tpu_custom_call.1} parent=63 // pred_fallthru
          _
        // Predicated region
        $region101: #{tpu_custom_call.1} parent=63 // pred_check
          %p1551 = pneg %p554
        $region102: #{tpu_custom_call.1} parent=63 // pred_check_branch
          %1553 = sbr.rel (%p1551) target = $region104
        $region103: #{tpu_custom_call.1} parent=63 // pred_region
          %v1554 = vld [vmem:[#allocation4] sm:$0xff]
          %v1555 = vld [vmem:[%s1541] sm:$0xff]
          %s1556 = scalar_lea.vmem %s9, %s653
          %v1557 = vld [vmem:[%s1556] sm:$0xff]
          %v1558 = vld [vmem:[%s1556 + $0x8] sm:$0xff]
          %v1559 = vld [vmem:[%s1556 + $0x10] sm:$0xff]
          %v1560 = vld [vmem:[%s1556 + $0x18] sm:$0xff]
          %v1562 = vsel %vm667, %v1555, 0
          %1564 = vmatprep.subr.mxu0 0.0
          %1565 = vmatpush1.msra.mxu0 %v1557
          %1566 = vmatprep.subr.mxu0 0.0
          %1567 = vmatpush1.msra.mxu0 %v1558
          %1568 = vmatprep.subr.mxu0 0.0
          %1569 = vmatpush1.msra.mxu0 %v1559
          %1570 = vmatprep.subr.mxu0 0.0
          %1571 = vmatpush1.msra.mxu0 %v1560
          %1572 = vmatprep.subr.mxu0 0.0
          %1573 = vmatpush1.msra.mxu0 0.0
          %1574 = vmatprep.subr.mxu0 0.0
          %1575 = vmatpush1.msra.mxu0 0.0
          %1576 = vmatprep.subr.mxu0 0.0
          %1577 = vmatpush1.msra.mxu0 0.0
          %1578 = vmatprep.subr.mxu0 0.0
          %1579 = vmatpush1.msra.mxu0 0.0
          %1580 = vmatprep.subr.mxu0 0.0
          %1581 = vmatpush1.msra.mxu0 0.0
          %1582 = vmatprep.subr.mxu0 0.0
          %1583 = vmatpush1.msra.mxu0 0.0
          %1584 = vmatprep.subr.mxu0 0.0
          %1585 = vmatpush1.msra.mxu0 0.0
          %1586 = vmatprep.subr.mxu0 0.0
          %1587 = vmatpush1.msra.mxu0 0.0
          %1588 = vmatprep.subr.mxu0 0.0
          %1589 = vmatpush1.msra.mxu0 0.0
          %1590 = vmatprep.subr.mxu0 0.0
          %1591 = vmatpush1.msra.mxu0 0.0
          %1592 = vmatprep.subr.mxu0 0.0
          %1593 = vmatpush1.msra.mxu0 0.0
          %1594 = vmatprep.subr.mxu0 0.0
          %1595 = vmatpush1.msra.mxu0 0.0
          %1596 = vmatprep.subr.mxu0 0.0
          %1597 = vmatpush1.msra.mxu0 0.0
          %1598 = vmatprep.subr.mxu0 0.0
          %1599 = vmatpush1.msra.mxu0 0.0
          %1600 = vmatprep.subr.mxu0 0.0
          %1601 = vmatpush1.msra.mxu0 0.0
          %1602 = vmatprep.subr.mxu0 0.0
          %1603 = vmatpush1.msra.mxu0 0.0
          %1604 = vmatprep.subr.mxu0 0.0
          %1605 = vmatpush1.msra.mxu0 0.0
          %1606 = vmatprep.subr.mxu0 0.0
          %1607 = vmatpush1.msra.mxu0 0.0
          %1608 = vmatprep.subr.mxu0 0.0
          %1609 = vmatpush1.msra.mxu0 0.0
          %1610 = vmatprep.subr.mxu0 0.0
          %1611 = vmatpush1.msra.mxu0 0.0
          %1612 = vmatprep.subr.mxu0 0.0
          %1613 = vmatpush1.msra.mxu0 0.0
          %1614 = vmatprep.subr.mxu0 0.0
          %1615 = vmatpush1.msra.mxu0 0.0
          %1616 = vmatprep.subr.mxu0 0.0
          %1617 = vmatpush1.msra.mxu0 0.0
          %1618 = vmatprep.subr.mxu0 0.0
          %1619 = vmatpush1.msra.mxu0 0.0
          %1620 = vmatprep.subr.mxu0 0.0
          %1621 = vmatpush1.msra.mxu0 0.0
          %1622 = vmatprep.subr.mxu0 0.0
          %1623 = vmatpush1.msra.mxu0 0.0
          %1624 = vmatprep.subr.mxu0 0.0
          %1625 = vmatpush1.msra.mxu0 0.0
          %1626 = vmatprep.subr.mxu0 0.0
          %1627 = vmatpush1.msra.mxu0 0.0
          %1628 = vmatprep.mubr.f32.mxu0 0.0
          %1629 = vmatmul.mubr.f32.gmra.mrb[0].mxu0 %v1562
          %v1630 = vpop.f32.mrb[0].mxu0
          %v1631 = vadd.f32 0.0, %v1630
          %v1632 = vpop.f32.mrb[0].mxu0
          %1633 = vdwg.mxu0
          %v1634 = vadd.f32 %v1554, %v1631
          %1635 = vst.msk [vmem:[#allocation4] sm:$0xff] %vm667, %v1634
        $region104: #{tpu_custom_call.1} parent=63 // pred_fallthru
          _
        // Predicated region
        $region105: #{tpu_custom_call.1} parent=63 // pred_check
          _
        $region106: #{tpu_custom_call.1} parent=63 // pred_check_branch
          %1637 = sbr.rel (%p1546) target = $region108
        $region107: #{tpu_custom_call.1} parent=63 // pred_region
          %v1638 = vld [vmem:[#allocation4] sm:$0xff]
          %v1639 = vld [vmem:[%s10] sm:$0x1]
          %v1641 = vlaneseq
          %v1642 = vshrl.u32 %v1641, 7
          %v1643 = vsub.s32 0, %v1642
          %v1644 = vrot.slane %v1639, %v1643
          %v1646 = vadd.f32 %v1638, %v1644
          %1647 = vst.msk [vmem:[%s553] sm:$0xff] %vm667, %v1646
        $region108: #{tpu_custom_call.1} parent=63 // pred_fallthru
          _
        %s1648 = sand.u32 %s310, 1
        %s1649 = scalar_lea.sflag [#allocation7], %s1648
        %s1650 = sand.u32 %s310, 1
        %s1651 = smul.addr %s1650, 8
        %s1652 = scalar_lea.vmem [#allocation17], %s1651
        // Predicated region
        $region109: #{tpu_custom_call.1} parent=63 // pred_check
          %p1653 = pneg %p320
        $region110: #{tpu_custom_call.1} parent=63 // pred_check_branch
          %1655 = sbr.rel (%p1653) target = $region112
        $region111: #{tpu_custom_call.1} parent=63 // pred_region
          %s1657 = ssub.s32 128, 128
          %1658 = vsyncadd %s1649, %s1657
          %s1659 = smul.addr %s38, 128
          %s1660 = scalar_lea.hbm %s11, %s1659
          %s1662 = sshll.u32 %s1652, 4
          %s1663 = int_to_ptr.vmem [resolvable:$true] %s1662
          %1665 = dma.vmem_to_hbm [thread:$0]  %s1663, 128, %s1660, %s1649
        $region112: #{tpu_custom_call.1} parent=63 // pred_fallthru
          _
      $region64: #{tpu_custom_call.1} parent=5 // pred_fallthru
        _
      %p1666 = scmp.le.s32.totalorder 2, %s28
      // Predicated region
      $region113: #{tpu_custom_call.1} parent=5 // pred_check
        %p1667 = pneg %p1666
      $region114: #{tpu_custom_call.1} parent=5 // pred_check_branch
        %1669 = sbr.rel (%p1667) target = $region116
      $region115: #{tpu_custom_call.1} parent=5 // pred_region
        %s1670 = ssub.s32 %s28, 2
        // Predicated region
        $region117: #{tpu_custom_call.1} parent=115 // pred_check
          %p1671 = pneg %p326
        $region118: #{tpu_custom_call.1} parent=115 // pred_check_branch
          %1673 = sbr.rel (%p1671) target = $region120
        $region119: #{tpu_custom_call.1} parent=115 // pred_region
          %s1674 = sand.u32 %s311, 1
          %s1675 = scalar_lea.sflag [#allocation7], %s1674
          %s1676 = sand.u32 %s311, 1
          %s1677 = smul.addr %s1676, 8
          %s1678 = scalar_lea.vmem [#allocation17], %s1677
          %1679 = dma.done %s1675, 128
        $region120: #{tpu_custom_call.1} parent=115 // pred_fallthru
          _
      $region116: #{tpu_custom_call.1} parent=5 // pred_fallthru
        _
    $region6: #{tpu_custom_call.1} parent=1 // loop_footer
      %s32 = sadd.s32 1, %s28
    $region7: #{tpu_custom_call.1} parent=1 // loop_footer_branch
      %27 = sbr.rel target = $region3
    $region8: #{tpu_custom_call.1} parent=1 // loop_exit
      _
    %1680 = vsyncpa [#allocation6], 1
    %s1681 = scalar_lea.sflag [#allocation6], 1
    %1682 = vsyncpa %s1681, 1
    %1683 = vsyncpa [#allocation9], 1
    %s1684 = scalar_lea.sflag [#allocation9], 1
    %1685 = vsyncpa %s1684, 1
    %1686 = vsyncpa [#allocation12], 1
    %1687 = vsyncpa [#allocation15], 1
    %1688 = vsyncpa [#allocation7], 1
    %s1689 = scalar_lea.sflag [#allocation7], 1
    %1690 = vsyncpa %s1689, 1

</llo_original>
